<compile_context>
chip_gen: v7x
topology: tpu7x:2x2x1
jax: 0.10.0
libtpu: 0.0.40
codegen_flags: <defaults>
</compile_context>

<pallas_src>
import functools

import jax
import jax.numpy as jnp
from jax.experimental import pallas as pl
from jax.experimental.pallas import tpu as pltpu


# Sized so the kernels also fit v7x (64 MiB physical / 32 MiB default scoped
# VMEM); actual per-step usage here is only a few MiB.
_VMEM_LIMIT_BYTES = 32 * 1024 * 1024


def _compiler_params():
    return pltpu.CompilerParams(
        dimension_semantics=("parallel",),
        vmem_limit_bytes=_VMEM_LIMIT_BYTES,
    )


# ---------------------------------------------------------------------------
# Pallas kernels
# ---------------------------------------------------------------------------
def _mm_bn_kernel(relu, x_ref, w_ref, s_ref, b_ref, o_ref):
    """(TILE_M, K)bf16 @ (K, N)bf16 with folded-BN scale/shift (+ReLU) in f32."""
    y = jnp.dot(x_ref[...], w_ref[...], preferred_element_type=jnp.float32)
    y = y * s_ref[...] + b_ref[...]
    if relu:
        y = jnp.maximum(y, 0.0)
    o_ref[...] = y


def _max9_kernel(*refs):
    """Elementwise max over 9 shifted pooling views (one (TILE_M, C) tile each)."""
    view_refs, o_ref = refs[:-1], refs[-1]
    m = view_refs[0][...]
    for r in view_refs[1:]:
        m = jnp.maximum(m, r[...])
    o_ref[...] = m


def _conv3x3_bn_relu_kernel(offsets, lout, x_ref, w_ref, s_ref, b_ref, o_ref):
    """3x3 conv (stride 1, pad 1) on one image as 9 shifted dot-accumulates.

    x_ref: (1, Lin, C) f32 flat pad-2 activation; w_ref: (9, C, Cout) bf16;
    o_ref: (1, Lout, Cout) f32 result in the 'padded-width' frame (garbage
    columns are sliced away by the wrapper).
    """
    o_ref[0] = jnp.dot(
        x_ref[0, offsets[0]:offsets[0] + lout, :].astype(jnp.bfloat16),
        w_ref[0], preferred_element_type=jnp.float32)
    for t in range(1, 9):
        off = offsets[t]
        o_ref[0] = o_ref[0] + jnp.dot(
            x_ref[0, off:off + lout, :].astype(jnp.bfloat16),
            w_ref[t], preferred_element_type=jnp.float32)
    o_ref[0] = jnp.maximum(o_ref[0] * s_ref[...] + b_ref[...], 0.0)


def _conv3x3_res_gap_kernel(offsets, lout, wpp, w_valid, inv_hw,
                            x_ref, w_ref, s_ref, b_ref, r_ref, o_ref, acc_ref):
    """Second basic-block conv: BN + residual add + ReLU + fused global-avg-pool."""
    acc_ref[...] = jnp.dot(
        x_ref[0, offsets[0]:offsets[0] + lout, :].astype(jnp.bfloat16),
        w_ref[0], preferred_element_type=jnp.float32)
    for t in range(1, 9):
        off = offsets[t]
        acc_ref[...] = acc_ref[...] + jnp.dot(
            x_ref[0, off:off + lout, :].astype(jnp.bfloat16),
            w_ref[t], preferred_element_type=jnp.float32)
    y = jnp.maximum(acc_ref[...] * s_ref[...] + b_ref[...] + r_ref[0], 0.0)
    # mask out the padded-width "garbage" columns, then average-pool in-kernel
    col = jax.lax.broadcasted_iota(jnp.int32, y.shape, 0) % wpp
    valid = jnp.logical_and(col >= 1, col <= w_valid)
    o_ref[0] = jnp.sum(jnp.where(valid, y, 0.0), axis=0, keepdims=True) * inv_hw


def _fc_head_kernel(x_ref, w1_ref, b1_ref, w2_ref, b2_ref, w3_ref, b3_ref, o_ref):
    """Fused Linear->ReLU->Linear->ReLU->(Dropout)->Linear head (bias-only epilogue)."""
    h = jnp.dot(x_ref[...], w1_ref[...], preferred_element_type=jnp.float32)
    h = jnp.maximum(h + b1_ref[...], 0.0)
    h = jnp.dot(h.astype(jnp.bfloat16), w2_ref[...],
                preferred_element_type=jnp.float32)
    h = jnp.maximum(h + b2_ref[...], 0.0)
    # TODO(synk): nn.Dropout(p=0.2) is identity in inference mode (no RNG mask applied).
    o_ref[...] = jnp.dot(h.astype(jnp.bfloat16), w3_ref[...],
                         preferred_element_type=jnp.float32) + b3_ref[...]


# ---------------------------------------------------------------------------
# Pallas wrappers
# ---------------------------------------------------------------------------
def matmul_bn_act(x_bf16, w_bf16, scale, shift, *, relu, tile_m=512):
    """out = act((x @ w) * scale + shift), tiled along M and pipelined."""
    M, K = x_bf16.shape
    N = w_bf16.shape[1]
    s = scale.reshape(1, N).astype(jnp.float32)
    b = shift.reshape(1, N).astype(jnp.float32)
    tm = M if M <= tile_m else tile_m
    return pl.pallas_call(
        functools.partial(_mm_bn_kernel, relu),
        grid=(pl.cdiv(M, tm),),
        in_specs=[pl.BlockSpec((tm, K), lambda i: (i, 0)),
                  pl.BlockSpec((K, N), lambda i: (0, 0)),
                  pl.BlockSpec((1, N), lambda i: (0, 0)),
                  pl.BlockSpec((1, N), lambda i: (0, 0))],
        out_specs=pl.BlockSpec((tm, N), lambda i: (i, 0)),
        out_shape=jax.ShapeDtypeStruct((M, N), jnp.float32),
        compiler_params=_compiler_params(),
    )(x_bf16, w_bf16, s, b)


def maxpool_3x3_s2_p1(x_nhwc, *, tile_m=1024):
    """MaxPool2d(kernel_size=3, stride=2, padding=1) in NHWC, tiled along M."""
    N, H, W, C = x_nhwc.shape
    Ho = (H + 2 - 3) // 2 + 1
    Wo = (W + 2 - 3) // 2 + 1
    xp = jnp.pad(x_nhwc, ((0, 0), (1, 1), (1, 1), (0, 0)),
                 constant_values=-jnp.inf)
    views = [xp[:, di:di + 2 * Ho:2, dj:dj + 2 * Wo:2, :].reshape(N * Ho * Wo, C)
             for di in range(3) for dj in range(3)]
    M = N * Ho * Wo
    tm = M if M <= tile_m else tile_m
    out = pl.pallas_call(
        _max9_kernel,
        grid=(pl.cdiv(M, tm),),
        in_specs=[pl.BlockSpec((tm, C), lambda i: (i, 0))] * 9,
        out_specs=pl.BlockSpec((tm, C), lambda i: (i, 0)),
        out_shape=jax.ShapeDtypeStruct((M, C), jnp.float32),
        compiler_params=_compiler_params(),
    )(*views)
    return out.reshape(N, Ho, Wo, C)


def _tap_offsets(wpp):
    # tap (di, dj) reads flat position q + (di+1)*Wpp + dj of the pad-2 frame
    return tuple((di + 1) * wpp + dj for di in range(3) for dj in range(3))


def conv3x3_bn_relu(x_nhwc, w9_bf16, scale, shift):
    """3x3/s1/p1 conv + frozen BN + ReLU; one grid step per image, no im2col."""
    N, H, W, C = x_nhwc.shape
    Cout = w9_bf16.shape[-1]
    Wpp = W + 4
    Lin, Lout = (H + 4) * Wpp, H * Wpp
    xp = jnp.pad(x_nhwc, ((0, 0), (2, 2), (2, 2), (0, 0))).reshape(N, Lin, C)
    s = scale.reshape(1, Cout).astype(jnp.float32)
    b = shift.reshape(1, Cout).astype(jnp.float32)
    out = pl.pallas_call(
        functools.partial(_conv3x3_bn_relu_kernel, _tap_offsets(Wpp), Lout),
        grid=(N,),
        in_specs=[pl.BlockSpec((1, Lin, C), lambda n: (n, 0, 0)),
                  pl.BlockSpec((9, C, Cout), lambda n: (0, 0, 0)),
                  pl.BlockSpec((1, Cout), lambda n: (0, 0)),
                  pl.BlockSpec((1, Cout), lambda n: (0, 0))],
        out_specs=pl.BlockSpec((1, Lout, Cout), lambda n: (n, 0, 0)),
        out_shape=jax.ShapeDtypeStruct((N, Lout, Cout), jnp.float32),
        compiler_params=_compiler_params(),
    )(xp, w9_bf16, s, b)
    # drop the garbage columns of the padded-width frame
    return out.reshape(N, H, Wpp, Cout)[:, :, 1:W + 1, :]


def conv3x3_bn_res_relu_gap(x_nhwc, identity_nhwc, w9_bf16, scale, shift):
    """3x3 conv + BN + residual add + ReLU with the global-avg-pool fused in."""
    N, H, W, C = x_nhwc.shape
    Cout = w9_bf16.shape[-1]
    Wpp = W + 4
    Lin, Lout = (H + 4) * Wpp, H * Wpp
    xp = jnp.pad(x_nhwc, ((0, 0), (2, 2), (2, 2), (0, 0))).reshape(N, Lin, C)
    # residual in the same padded-width frame as the conv output
    rp = jnp.pad(identity_nhwc, ((0, 0), (0, 0), (1, 3), (0, 0))).reshape(N, Lout, Cout)
    s = scale.reshape(1, Cout).astype(jnp.float32)
    b = shift.reshape(1, Cout).astype(jnp.float32)
    feat = pl.pallas_call(
        functools.partial(_conv3x3_res_gap_kernel, _tap_offsets(Wpp), Lout,
                          Wpp, W, 1.0 / (H * W)),
        grid=(N,),
        in_specs=[pl.BlockSpec((1, Lin, C), lambda n: (n, 0, 0)),
                  pl.BlockSpec((9, C, Cout), lambda n: (0, 0, 0)),
                  pl.BlockSpec((1, Cout), lambda n: (0, 0)),
                  pl.BlockSpec((1, Cout), lambda n: (0, 0)),
                  pl.BlockSpec((1, Lout, Cout), lambda n: (n, 0, 0))],
        out_specs=pl.BlockSpec((1, 1, Cout), lambda n: (n, 0, 0)),
        out_shape=jax.ShapeDtypeStruct((N, 1, Cout), jnp.float32),
        scratch_shapes=[pltpu.VMEM((Lout, Cout), jnp.float32)],
        compiler_params=_compiler_params(),
    )(xp, w9_bf16, s, b, rp)
    return feat.reshape(N, Cout)


def fc_head(feat, params):
    """Fused fc head; fc3 output padded to 128 lanes and sliced in the wrapper."""
    B, F = feat.shape
    D1 = params["fc1_w"].shape[1]
    D2 = params["fc2_w"].shape[1]
    DO = 128  # lane-dense output slab; real output is column 0
    w1 = params["fc1_w"].astype(jnp.bfloat16)
    b1 = params["fc1_b"].reshape(1, D1).astype(jnp.float32)
    w2 = params["fc2_w"].astype(jnp.bfloat16)
    b2 = params["fc2_b"].reshape(1, D2).astype(jnp.float32)
    w3 = jnp.pad(params["fc3_w"], ((0, 0), (0, DO - 1))).astype(jnp.bfloat16)
    b3 = jnp.pad(params["fc3_b"], (0, DO - 1)).reshape(1, DO).astype(jnp.float32)
    tb = B if B <= 128 else 128
    out = pl.pallas_call(
        _fc_head_kernel,
        grid=(pl.cdiv(B, tb),),
        in_specs=[pl.BlockSpec((tb, F), lambda i: (i, 0)),
                  pl.BlockSpec((F, D1), lambda i: (0, 0)),
                  pl.BlockSpec((1, D1), lambda i: (0, 0)),
                  pl.BlockSpec((D1, D2), lambda i: (0, 0)),
                  pl.BlockSpec((1, D2), lambda i: (0, 0)),
                  pl.BlockSpec((D2, DO), lambda i: (0, 0)),
                  pl.BlockSpec((1, DO), lambda i: (0, 0))],
        out_specs=pl.BlockSpec((tb, DO), lambda i: (i, 0)),
        out_shape=jax.ShapeDtypeStruct((B, DO), jnp.float32),
        compiler_params=_compiler_params(),
    )(feat.astype(jnp.bfloat16), w1, b1, w2, b2, w3, b3)
    return out[:, :1]


# ---------------------------------------------------------------------------
# Glue: im2col for the 7x7 stem conv only (pure slicing, no FLOPs)
# ---------------------------------------------------------------------------
def im2col(x_nhwc, kh, kw, stride, pad):
    # NOTE: feature order is (kh, kw, C_in); real PyTorch conv weights
    # (C_out, C_in, kh, kw) must be permuted to (kh, kw, C_in, C_out) before
    # flattening to match this ordering (weights here are synthetic).
    N, H, W, C = x_nhwc.shape
    Ho = (H + 2 * pad - kh) // stride + 1
    Wo = (W + 2 * pad - kw) // stride + 1
    xp = jnp.pad(x_nhwc, ((0, 0), (pad, pad), (pad, pad), (0, 0)))
    cols = []
    for i in range(kh):
        for j in range(kw):
            cols.append(xp[:, i:i + stride * Ho:stride, j:j + stride * Wo:stride, :])
    patches = jnp.concatenate(cols, axis=-1)
    return patches.reshape(N * Ho * Wo, kh * kw * C), (N, Ho, Wo)


# ---------------------------------------------------------------------------
# Deterministic parameter initialization (synthetic; no checkpoint loading)
# ---------------------------------------------------------------------------
def init_params(key, in_features=64, encoding_d=512, fc_features=1024):
    ks = jax.random.split(key, 24)

    def nrm(k, shape, scale=0.05):
        return scale * jax.random.normal(k, shape, dtype=jnp.float32)

    def bn_fold(kg, kb, km, kv, c):
        # frozen (eval-mode) BatchNorm folded into per-channel scale/shift
        gamma = 1.0 + nrm(kg, (c,))
        beta = nrm(kb, (c,))
        mean = nrm(km, (c,))
        var = jnp.abs(nrm(kv, (c,))) + 1.0
        scale = gamma / jnp.sqrt(var + 1e-5)
        shift = beta - mean * scale
        return scale, shift

    p = {}
    # resnet.conv1 replaced by CovidxModel: Conv2d(1, 64, 7, stride=2, pad=3, bias=False)
    # K padded 49 -> 64 with zero rows for aligned MXU tiles (zeros contribute 0).
    p["conv1_w"] = jnp.pad(nrm(ks[0], (7 * 7 * 1, 64)), ((0, 15), (0, 0)))
    p["bn1_scale"], p["bn1_shift"] = bn_fold(ks[1], ks[2], ks[3], ks[4], 64)
    # one frozen ResNet basic block (64 -> 64), stand-in for the injected backbone;
    # 3x3 weights stored tap-major: (kh*kw, C_in, C_out).
    p["b1c1_w"] = nrm(ks[5], (9, 64, 64))
    p["b1bn1_scale"], p["b1bn1_shift"] = bn_fold(ks[6], ks[7], ks[8], ks[9], 64)
    p["b1c2_w"] = nrm(ks[10], (9, 64, 64))
    p["b1bn2_scale"], p["b1bn2_shift"] = bn_fold(ks[11], ks[12], ks[13], ks[14], 64)
    # CovidxModel fc head (fc_features > 1 branch)
    p["fc1_w"] = nrm(ks[15], (in_features, encoding_d))
    p["fc1_b"] = nrm(ks[16], (encoding_d,))
    p["fc2_w"] = nrm(ks[17], (encoding_d, fc_features))
    p["fc2_b"] = nrm(ks[18], (fc_features,))
    p["fc3_w"] = nrm(ks[19], (fc_features, 1))
    p["fc3_b"] = nrm(ks[20], (1,))
    return p


# ---------------------------------------------------------------------------
# Forward pass
# ---------------------------------------------------------------------------
@jax.jit
def covidx_forward(img_nchw, params):
    x = jnp.transpose(img_nchw, (0, 2, 3, 1)).astype(jnp.float32)  # NCHW -> NHWC

    # --- stem: conv1 (1->64, 7x7, s2, p3) + BN + ReLU as tiled bf16 im2col matmul ---
    cols, (n, ho, wo) = im2col(x, 7, 7, 2, 3)
    cols = jnp.pad(cols, ((0, 0), (0, 64 - cols.shape[1]))).astype(jnp.bfloat16)
    y = matmul_bn_act(cols, params["conv1_w"].astype(jnp.bfloat16),
                      params["bn1_scale"], params["bn1_shift"], relu=True)
    y = y.reshape(n, ho, wo, 64)

    # --- maxpool 3x3 stride 2 pad 1 (9 shifted views, in-kernel max tree) ---
    y = maxpool_3x3_s2_p1(y)

    # --- one ResNet basic block (frozen backbone stand-in), no im2col blow-up ---
    # TODO(synk): the injected frozen torchvision ResNet backbone is an external
    # constructor argument / checkpoint; a single basic block stands in for it.
    identity = y
    h = conv3x3_bn_relu(y, params["b1c1_w"].astype(jnp.bfloat16),
                        params["b1bn1_scale"], params["b1bn1_shift"])
    # second conv + BN + residual + ReLU with global-average-pool fused in
    feat = conv3x3_bn_res_relu_gap(h, identity,
                                   params["b1c2_w"].astype(jnp.bfloat16),
                                   params["b1bn2_scale"], params["b1bn2_shift"])

    # --- CovidxModel fc head, fused into one Pallas call ---
    return fc_head(feat, params)                                   # (N, 1)


if __name__ == "__main__":
    key = jax.random.PRNGKey(0)
    pkey, xkey = jax.random.split(key)
    params = init_params(pkey)
    img = jax.random.normal(xkey, (2, 1, 16, 16), dtype=jnp.float32)  # NCHW, 1 channel
    out = covidx_forward(img, params)
    out = jax.block_until_ready(out)
    assert out.shape == (2, 1) and out.dtype == jnp.float32
    print("KERNEL_OK")
</pallas_src>

<mosaic_0001>
module attributes {stable_mosaic.version = 11 : i64} {
  func.func @_mm_bn_kernel(%arg0: i32, %arg1: memref<128x64xbf16, #tpu.memory_space<vmem>>, %arg2: memref<64x64xbf16, #tpu.memory_space<vmem>>, %arg3: memref<1x64xf32, #tpu.memory_space<vmem>>, %arg4: memref<1x64xf32, #tpu.memory_space<vmem>>, %arg5: memref<128x64xf32, #tpu.memory_space<vmem>>) attributes {dimension_semantics = [#tpu.dimension_semantics<parallel>], iteration_bounds = array<i64: 1>, scalar_prefetch = 0 : i64, scratch_operands = 0 : i64, tpu.core_type = #tpu.core_type<tc>, window_params = [{transform_indices = @transform_0, window_bounds = array<i64: 128, 64>}, {pipeline_mode = #tpu.pipeline_mode<synchronous>, transform_indices = @transform_1, window_bounds = array<i64: 64, 64>}, {pipeline_mode = #tpu.pipeline_mode<synchronous>, transform_indices = @transform_2, window_bounds = array<i64: 1, 64>}, {pipeline_mode = #tpu.pipeline_mode<synchronous>, transform_indices = @transform_3, window_bounds = array<i64: 1, 64>}, {transform_indices = @transform_4, window_bounds = array<i64: 128, 64>}]} {
    %c0 = arith.constant 0 : index
    %c0_0 = arith.constant 0 : index
    %0 = vector.load %arg1[%c0, %c0_0] : memref<128x64xbf16, #tpu.memory_space<vmem>>, vector<128x64xbf16>
    %c0_1 = arith.constant 0 : index
    %c0_2 = arith.constant 0 : index
    %1 = vector.load %arg2[%c0_1, %c0_2] : memref<64x64xbf16, #tpu.memory_space<vmem>>, vector<64x64xbf16>
    %cst = arith.constant dense<0.000000e+00> : vector<128x64xf32>
    %2 = tpu.matmul %0, %1, %cst {dimension_numbers = #tpu.dot_dimension_numbers<[1], [0], [0], [1], [0, 0, 1, 1], [], []>} : vector<128x64xbf16>, vector<64x64xbf16>, vector<128x64xf32> -> vector<128x64xf32>
    %c0_3 = arith.constant 0 : index
    %c0_4 = arith.constant 0 : index
    %3 = vector.load %arg3[%c0_3, %c0_4] : memref<1x64xf32, #tpu.memory_space<vmem>>, vector<1x64xf32>
    %4 = vector.broadcast %3 : vector<1x64xf32> to vector<128x64xf32>
    %5 = arith.mulf %2, %4 : vector<128x64xf32>
    %c0_5 = arith.constant 0 : index
    %c0_6 = arith.constant 0 : index
    %6 = vector.load %arg4[%c0_5, %c0_6] : memref<1x64xf32, #tpu.memory_space<vmem>>, vector<1x64xf32>
    %7 = vector.broadcast %6 : vector<1x64xf32> to vector<128x64xf32>
    %8 = arith.addf %5, %7 : vector<128x64xf32>
    %cst_7 = arith.constant 0.000000e+00 : f32
    %9 = vector.broadcast %cst_7 : f32 to vector<128x64xf32>
    %10 = arith.maximumf %8, %9 : vector<128x64xf32>
    %c0_8 = arith.constant 0 : index
    %c0_9 = arith.constant 0 : index
    %11 = vector.load %arg5[%c0_8, %c0_9] : memref<128x64xf32, #tpu.memory_space<vmem>>, vector<128x64xf32>
    tpu.vector_store %arg5[%c0_8, %c0_9], %10 {strides = array<i32>} : memref<128x64xf32, #tpu.memory_space<vmem>>, vector<128x64xf32>,
    return
  }
  func.func @transform_0(%arg0: i32) -> (i32, i32) {
    %c0_i32 = arith.constant 0 : i32
    %c0_i32_0 = arith.constant 0 : i32
    return %arg0, %c0_i32 : i32, i32
  }
  func.func @transform_1(%arg0: i32) -> (i32, i32) {
    %c0_i32 = arith.constant 0 : i32
    %c0_i32_0 = arith.constant 0 : i32
    %c0_i32_1 = arith.constant 0 : i32
    return %c0_i32, %c0_i32_0 : i32, i32
  }
  func.func @transform_2(%arg0: i32) -> (i32, i32) {
    %c0_i32 = arith.constant 0 : i32
    %c0_i32_0 = arith.constant 0 : i32
    %c0_i32_1 = arith.constant 0 : i32
    return %c0_i32, %c0_i32_0 : i32, i32
  }
  func.func @transform_3(%arg0: i32) -> (i32, i32) {
    %c0_i32 = arith.constant 0 : i32
    %c0_i32_0 = arith.constant 0 : i32
    %c0_i32_1 = arith.constant 0 : i32
    return %c0_i32, %c0_i32_0 : i32, i32
  }
  func.func @transform_4(%arg0: i32) -> (i32, i32) {
    %c0_i32 = arith.constant 0 : i32
    %c0_i32_0 = arith.constant 0 : i32
    return %arg0, %c0_i32 : i32, i32
  }
}

module attributes {stable_mosaic.version = 11 : i64} {
  func.func @_max9_kernel(%arg0: i32, %arg1: memref<32x64xf32, #tpu.memory_space<vmem>>, %arg2: memref<32x64xf32, #tpu.memory_space<vmem>>, %arg3: memref<32x64xf32, #tpu.memory_space<vmem>>, %arg4: memref<32x64xf32, #tpu.memory_space<vmem>>, %arg5: memref<32x64xf32, #tpu.memory_space<vmem>>, %arg6: memref<32x64xf32, #tpu.memory_space<vmem>>, %arg7: memref<32x64xf32, #tpu.memory_space<vmem>>, %arg8: memref<32x64xf32, #tpu.memory_space<vmem>>, %arg9: memref<32x64xf32, #tpu.memory_space<vmem>>, %arg10: memref<32x64xf32, #tpu.memory_space<vmem>>) attributes {dimension_semantics = [#tpu.dimension_semantics<parallel>], iteration_bounds = array<i64: 1>, scalar_prefetch = 0 : i64, scratch_operands = 0 : i64, tpu.core_type = #tpu.core_type<tc>, window_params = [{transform_indices = @transform_0, window_bounds = array<i64: 32, 64>}, {transform_indices = @transform_1, window_bounds = array<i64: 32, 64>}, {transform_indices = @transform_2, window_bounds = array<i64: 32, 64>}, {transform_indices = @transform_3, window_bounds = array<i64: 32, 64>}, {transform_indices = @transform_4, window_bounds = array<i64: 32, 64>}, {transform_indices = @transform_5, window_bounds = array<i64: 32, 64>}, {transform_indices = @transform_6, window_bounds = array<i64: 32, 64>}, {transform_indices = @transform_7, window_bounds = array<i64: 32, 64>}, {transform_indices = @transform_8, window_bounds = array<i64: 32, 64>}, {transform_indices = @transform_9, window_bounds = array<i64: 32, 64>}]} {
    %c0 = arith.constant 0 : index
    %c0_0 = arith.constant 0 : index
    %0 = vector.load %arg1[%c0, %c0_0] : memref<32x64xf32, #tpu.memory_space<vmem>>, vector<32x64xf32>
    %c0_1 = arith.constant 0 : index
    %c0_2 = arith.constant 0 : index
    %1 = vector.load %arg2[%c0_1, %c0_2] : memref<32x64xf32, #tpu.memory_space<vmem>>, vector<32x64xf32>
    %2 = arith.maximumf %0, %1 : vector<32x64xf32>
    %c0_3 = arith.constant 0 : index
    %c0_4 = arith.constant 0 : index
    %3 = vector.load %arg3[%c0_3, %c0_4] : memref<32x64xf32, #tpu.memory_space<vmem>>, vector<32x64xf32>
    %4 = arith.maximumf %2, %3 : vector<32x64xf32>
    %c0_5 = arith.constant 0 : index
    %c0_6 = arith.constant 0 : index
    %5 = vector.load %arg4[%c0_5, %c0_6] : memref<32x64xf32, #tpu.memory_space<vmem>>, vector<32x64xf32>
    %6 = arith.maximumf %4, %5 : vector<32x64xf32>
    %c0_7 = arith.constant 0 : index
    %c0_8 = arith.constant 0 : index
    %7 = vector.load %arg5[%c0_7, %c0_8] : memref<32x64xf32, #tpu.memory_space<vmem>>, vector<32x64xf32>
    %8 = arith.maximumf %6, %7 : vector<32x64xf32>
    %c0_9 = arith.constant 0 : index
    %c0_10 = arith.constant 0 : index
    %9 = vector.load %arg6[%c0_9, %c0_10] : memref<32x64xf32, #tpu.memory_space<vmem>>, vector<32x64xf32>
    %10 = arith.maximumf %8, %9 : vector<32x64xf32>
    %c0_11 = arith.constant 0 : index
    %c0_12 = arith.constant 0 : index
    %11 = vector.load %arg7[%c0_11, %c0_12] : memref<32x64xf32, #tpu.memory_space<vmem>>, vector<32x64xf32>
    %12 = arith.maximumf %10, %11 : vector<32x64xf32>
    %c0_13 = arith.constant 0 : index
    %c0_14 = arith.constant 0 : index
    %13 = vector.load %arg8[%c0_13, %c0_14] : memref<32x64xf32, #tpu.memory_space<vmem>>, vector<32x64xf32>
    %14 = arith.maximumf %12, %13 : vector<32x64xf32>
    %c0_15 = arith.constant 0 : index
    %c0_16 = arith.constant 0 : index
    %15 = vector.load %arg9[%c0_15, %c0_16] : memref<32x64xf32, #tpu.memory_space<vmem>>, vector<32x64xf32>
    %16 = arith.maximumf %14, %15 : vector<32x64xf32>
    %c0_17 = arith.constant 0 : index
    %c0_18 = arith.constant 0 : index
    %17 = vector.load %arg10[%c0_17, %c0_18] : memref<32x64xf32, #tpu.memory_space<vmem>>, vector<32x64xf32>
    tpu.vector_store %arg10[%c0_17, %c0_18], %16 {strides = array<i32>} : memref<32x64xf32, #tpu.memory_space<vmem>>, vector<32x64xf32>,
    return
  }
  func.func @transform_0(%arg0: i32) -> (i32, i32) {
    %c0_i32 = arith.constant 0 : i32
    %c0_i32_0 = arith.constant 0 : i32
    return %arg0, %c0_i32 : i32, i32
  }
  func.func @transform_1(%arg0: i32) -> (i32, i32) {
    %c0_i32 = arith.constant 0 : i32
    %c0_i32_0 = arith.constant 0 : i32
    return %arg0, %c0_i32 : i32, i32
  }
  func.func @transform_2(%arg0: i32) -> (i32, i32) {
    %c0_i32 = arith.constant 0 : i32
    %c0_i32_0 = arith.constant 0 : i32
    return %arg0, %c0_i32 : i32, i32
  }
  func.func @transform_3(%arg0: i32) -> (i32, i32) {
    %c0_i32 = arith.constant 0 : i32
    %c0_i32_0 = arith.constant 0 : i32
    return %arg0, %c0_i32 : i32, i32
  }
  func.func @transform_4(%arg0: i32) -> (i32, i32) {
    %c0_i32 = arith.constant 0 : i32
    %c0_i32_0 = arith.constant 0 : i32
    return %arg0, %c0_i32 : i32, i32
  }
  func.func @transform_5(%arg0: i32) -> (i32, i32) {
    %c0_i32 = arith.constant 0 : i32
    %c0_i32_0 = arith.constant 0 : i32
    return %arg0, %c0_i32 : i32, i32
  }
  func.func @transform_6(%arg0: i32) -> (i32, i32) {
    %c0_i32 = arith.constant 0 : i32
    %c0_i32_0 = arith.constant 0 : i32
    return %arg0, %c0_i32 : i32, i32
  }
  func.func @transform_7(%arg0: i32) -> (i32, i32) {
    %c0_i32 = arith.constant 0 : i32
    %c0_i32_0 = arith.constant 0 : i32
    return %arg0, %c0_i32 : i32, i32
  }
  func.func @transform_8(%arg0: i32) -> (i32, i32) {
    %c0_i32 = arith.constant 0 : i32
    %c0_i32_0 = arith.constant 0 : i32
    return %arg0, %c0_i32 : i32, i32
  }
  func.func @transform_9(%arg0: i32) -> (i32, i32) {
    %c0_i32 = arith.constant 0 : i32
    %c0_i32_0 = arith.constant 0 : i32
    return %arg0, %c0_i32 : i32, i32
  }
}

module attributes {stable_mosaic.version = 11 : i64} {
  func.func @_conv3x3_bn_relu_kernel(%arg0: i32, %arg1: memref<1x64x64xf32, #tpu.memory_space<vmem>>, %arg2: memref<9x64x64xbf16, #tpu.memory_space<vmem>>, %arg3: memref<1x64xf32, #tpu.memory_space<vmem>>, %arg4: memref<1x64xf32, #tpu.memory_space<vmem>>, %arg5: memref<1x32x64xf32, #tpu.memory_space<vmem>>) attributes {dimension_semantics = [#tpu.dimension_semantics<parallel>], iteration_bounds = array<i64: 2>, scalar_prefetch = 0 : i64, scratch_operands = 0 : i64, tpu.core_type = #tpu.core_type<tc>, window_params = [{transform_indices = @transform_0, window_bounds = array<i64: 1, 64, 64>}, {pipeline_mode = #tpu.pipeline_mode<synchronous>, transform_indices = @transform_1, window_bounds = array<i64: 9, 64, 64>}, {pipeline_mode = #tpu.pipeline_mode<synchronous>, transform_indices = @transform_2, window_bounds = array<i64: 1, 64>}, {pipeline_mode = #tpu.pipeline_mode<synchronous>, transform_indices = @transform_3, window_bounds = array<i64: 1, 64>}, {transform_indices = @transform_4, window_bounds = array<i64: 1, 32, 64>}]} {
    %c0 = arith.constant 0 : index
    %c8 = arith.constant 8 : index
    %c0_0 = arith.constant 0 : index
    %0 = vector.load %arg1[%c0, %c8, %c0_0] : memref<1x64x64xf32, #tpu.memory_space<vmem>>, vector<1x32x64xf32>
    %1 = vector.shape_cast %0 : vector<1x32x64xf32> to vector<32x64xf32>
    %2 = arith.truncf %1 : vector<32x64xf32> to vector<32x64xbf16>
    %c0_1 = arith.constant 0 : index
    %c0_2 = arith.constant 0 : index
    %c0_3 = arith.constant 0 : index
    %3 = vector.load %arg2[%c0_1, %c0_2, %c0_3] : memref<9x64x64xbf16, #tpu.memory_space<vmem>>, vector<1x64x64xbf16>
    %4 = vector.shape_cast %3 : vector<1x64x64xbf16> to vector<64x64xbf16>
    %cst = arith.constant dense<0.000000e+00> : vector<32x64xf32>
    %5 = tpu.matmul %2, %4, %cst {dimension_numbers = #tpu.dot_dimension_numbers<[1], [0], [0], [1], [0, 0, 1, 1], [], []>} : vector<32x64xbf16>, vector<64x64xbf16>, vector<32x64xf32> -> vector<32x64xf32>
    %c0_4 = arith.constant 0 : index
    %c0_5 = arith.constant 0 : index
    %c0_6 = arith.constant 0 : index
    %6 = vector.load %arg5[%c0_4, %c0_5, %c0_6] : memref<1x32x64xf32, #tpu.memory_space<vmem>>, vector<1x32x64xf32>
    %7 = vector.shape_cast %6 : vector<1x32x64xf32> to vector<32x64xf32>
    %8 = vector.shape_cast %5 : vector<32x64xf32> to vector<1x32x64xf32>
    tpu.vector_store %arg5[%c0_4, %c0_5, %c0_6], %8 {strides = array<i32>} : memref<1x32x64xf32, #tpu.memory_space<vmem>>, vector<1x32x64xf32>,
    %c0_7 = arith.constant 0 : index
    %c0_8 = arith.constant 0 : index
    %c0_9 = arith.constant 0 : index
    %9 = vector.load %arg5[%c0_7, %c0_8, %c0_9] : memref<1x32x64xf32, #tpu.memory_space<vmem>>, vector<1x32x64xf32>
    %10 = vector.shape_cast %9 : vector<1x32x64xf32> to vector<32x64xf32>
    %c0_10 = arith.constant 0 : index
    %c9 = arith.constant 9 : index
    %c0_11 = arith.constant 0 : index
    %11 = vector.load %arg1[%c0_10, %c9, %c0_11] : memref<1x64x64xf32, #tpu.memory_space<vmem>>, vector<1x32x64xf32>
    %12 = vector.shape_cast %11 : vector<1x32x64xf32> to vector<32x64xf32>
    %13 = arith.truncf %12 : vector<32x64xf32> to vector<32x64xbf16>
    %c1 = arith.constant 1 : index
    %c0_12 = arith.constant 0 : index
    %c0_13 = arith.constant 0 : index
    %14 = vector.load %arg2[%c1, %c0_12, %c0_13] : memref<9x64x64xbf16, #tpu.memory_space<vmem>>, vector<1x64x64xbf16>
    %15 = vector.shape_cast %14 : vector<1x64x64xbf16> to vector<64x64xbf16>
    %cst_14 = arith.constant dense<0.000000e+00> : vector<32x64xf32>
    %16 = tpu.matmul %13, %15, %cst_14 {dimension_numbers = #tpu.dot_dimension_numbers<[1], [0], [0], [1], [0, 0, 1, 1], [], []>} : vector<32x64xbf16>, vector<64x64xbf16>, vector<32x64xf32> -> vector<32x64xf32>
    %17 = arith.addf %10, %16 : vector<32x64xf32>
    %c0_15 = arith.constant 0 : index
    %c0_16 = arith.constant 0 : index
    %c0_17 = arith.constant 0 : index
    %18 = vector.load %arg5[%c0_15, %c0_16, %c0_17] : memref<1x32x64xf32, #tpu.memory_space<vmem>>, vector<1x32x64xf32>
    %19 = vector.shape_cast %18 : vector<1x32x64xf32> to vector<32x64xf32>
    %20 = vector.shape_cast %17 : vector<32x64xf32> to vector<1x32x64xf32>
    tpu.vector_store %arg5[%c0_15, %c0_16, %c0_17], %20 {strides = array<i32>} : memref<1x32x64xf32, #tpu.memory_space<vmem>>, vector<1x32x64xf32>,
    %c0_18 = arith.constant 0 : index
    %c0_19 = arith.constant 0 : index
    %c0_20 = arith.constant 0 : index
    %21 = vector.load %arg5[%c0_18, %c0_19, %c0_20] : memref<1x32x64xf32, #tpu.memory_space<vmem>>, vector<1x32x64xf32>
    %22 = vector.shape_cast %21 : vector<1x32x64xf32> to vector<32x64xf32>
    %c0_21 = arith.constant 0 : index
    %c10 = arith.constant 10 : index
    %c0_22 = arith.constant 0 : index
    %23 = vector.load %arg1[%c0_21, %c10, %c0_22] : memref<1x64x64xf32, #tpu.memory_space<vmem>>, vector<1x32x64xf32>
    %24 = vector.shape_cast %23 : vector<1x32x64xf32> to vector<32x64xf32>
    %25 = arith.truncf %24 : vector<32x64xf32> to vector<32x64xbf16>
    %c2 = arith.constant 2 : index
    %c0_23 = arith.constant 0 : index
    %c0_24 = arith.constant 0 : index
    %26 = vector.load %arg2[%c2, %c0_23, %c0_24] : memref<9x64x64xbf16, #tpu.memory_space<vmem>>, vector<1x64x64xbf16>
    %27 = vector.shape_cast %26 : vector<1x64x64xbf16> to vector<64x64xbf16>
    %cst_25 = arith.constant dense<0.000000e+00> : vector<32x64xf32>
    %28 = tpu.matmul %25, %27, %cst_25 {dimension_numbers = #tpu.dot_dimension_numbers<[1], [0], [0], [1], [0, 0, 1, 1], [], []>} : vector<32x64xbf16>, vector<64x64xbf16>, vector<32x64xf32> -> vector<32x64xf32>
    %29 = arith.addf %22, %28 : vector<32x64xf32>
    %c0_26 = arith.constant 0 : index
    %c0_27 = arith.constant 0 : index
    %c0_28 = arith.constant 0 : index
    %30 = vector.load %arg5[%c0_26, %c0_27, %c0_28] : memref<1x32x64xf32, #tpu.memory_space<vmem>>, vector<1x32x64xf32>
    %31 = vector.shape_cast %30 : vector<1x32x64xf32> to vector<32x64xf32>
    %32 = vector.shape_cast %29 : vector<32x64xf32> to vector<1x32x64xf32>
    tpu.vector_store %arg5[%c0_26, %c0_27, %c0_28], %32 {strides = array<i32>} : memref<1x32x64xf32, #tpu.memory_space<vmem>>, vector<1x32x64xf32>,
    %c0_29 = arith.constant 0 : index
    %c0_30 = arith.constant 0 : index
    %c0_31 = arith.constant 0 : index
    %33 = vector.load %arg5[%c0_29, %c0_30, %c0_31] : memref<1x32x64xf32, #tpu.memory_space<vmem>>, vector<1x32x64xf32>
    %34 = vector.shape_cast %33 : vector<1x32x64xf32> to vector<32x64xf32>
    %c0_32 = arith.constant 0 : index
    %c16 = arith.constant 16 : index
    %c0_33 = arith.constant 0 : index
    %35 = vector.load %arg1[%c0_32, %c16, %c0_33] : memref<1x64x64xf32, #tpu.memory_space<vmem>>, vector<1x32x64xf32>
    %36 = vector.shape_cast %35 : vector<1x32x64xf32> to vector<32x64xf32>
    %37 = arith.truncf %36 : vector<32x64xf32> to vector<32x64xbf16>
    %c3 = arith.constant 3 : index
    %c0_34 = arith.constant 0 : index
    %c0_35 = arith.constant 0 : index
    %38 = vector.load %arg2[%c3, %c0_34, %c0_35] : memref<9x64x64xbf16, #tpu.memory_space<vmem>>, vector<1x64x64xbf16>
    %39 = vector.shape_cast %38 : vector<1x64x64xbf16> to vector<64x64xbf16>
    %cst_36 = arith.constant dense<0.000000e+00> : vector<32x64xf32>
    %40 = tpu.matmul %37, %39, %cst_36 {dimension_numbers = #tpu.dot_dimension_numbers<[1], [0], [0], [1], [0, 0, 1, 1], [], []>} : vector<32x64xbf16>, vector<64x64xbf16>, vector<32x64xf32> -> vector<32x64xf32>
    %41 = arith.addf %34, %40 : vector<32x64xf32>
    %c0_37 = arith.constant 0 : index
    %c0_38 = arith.constant 0 : index
    %c0_39 = arith.constant 0 : index
    %42 = vector.load %arg5[%c0_37, %c0_38, %c0_39] : memref<1x32x64xf32, #tpu.memory_space<vmem>>, vector<1x32x64xf32>
    %43 = vector.shape_cast %42 : vector<1x32x64xf32> to vector<32x64xf32>
    %44 = vector.shape_cast %41 : vector<32x64xf32> to vector<1x32x64xf32>
    tpu.vector_store %arg5[%c0_37, %c0_38, %c0_39], %44 {strides = array<i32>} : memref<1x32x64xf32, #tpu.memory_space<vmem>>, vector<1x32x64xf32>,
    %c0_40 = arith.constant 0 : index
    %c0_41 = arith.constant 0 : index
    %c0_42 = arith.constant 0 : index
    %45 = vector.load %arg5[%c0_40, %c0_41, %c0_42] : memref<1x32x64xf32, #tpu.memory_space<vmem>>, vector<1x32x64xf32>
    %46 = vector.shape_cast %45 : vector<1x32x64xf32> to vector<32x64xf32>
    %c0_43 = arith.constant 0 : index
    %c17 = arith.constant 17 : index
    %c0_44 = arith.constant 0 : index
    %47 = vector.load %arg1[%c0_43, %c17, %c0_44] : memref<1x64x64xf32, #tpu.memory_space<vmem>>, vector<1x32x64xf32>
    %48 = vector.shape_cast %47 : vector<1x32x64xf32> to vector<32x64xf32>
    %49 = arith.truncf %48 : vector<32x64xf32> to vector<32x64xbf16>
    %c4 = arith.constant 4 : index
    %c0_45 = arith.constant 0 : index
    %c0_46 = arith.constant 0 : index
    %50 = vector.load %arg2[%c4, %c0_45, %c0_46] : memref<9x64x64xbf16, #tpu.memory_space<vmem>>, vector<1x64x64xbf16>
    %51 = vector.shape_cast %50 : vector<1x64x64xbf16> to vector<64x64xbf16>
    %cst_47 = arith.constant dense<0.000000e+00> : vector<32x64xf32>
    %52 = tpu.matmul %49, %51, %cst_47 {dimension_numbers = #tpu.dot_dimension_numbers<[1], [0], [0], [1], [0, 0, 1, 1], [], []>} : vector<32x64xbf16>, vector<64x64xbf16>, vector<32x64xf32> -> vector<32x64xf32>
    %53 = arith.addf %46, %52 : vector<32x64xf32>
    %c0_48 = arith.constant 0 : index
    %c0_49 = arith.constant 0 : index
    %c0_50 = arith.constant 0 : index
    %54 = vector.load %arg5[%c0_48, %c0_49, %c0_50] : memref<1x32x64xf32, #tpu.memory_space<vmem>>, vector<1x32x64xf32>
    %55 = vector.shape_cast %54 : vector<1x32x64xf32> to vector<32x64xf32>
    %56 = vector.shape_cast %53 : vector<32x64xf32> to vector<1x32x64xf32>
    tpu.vector_store %arg5[%c0_48, %c0_49, %c0_50], %56 {strides = array<i32>} : memref<1x32x64xf32, #tpu.memory_space<vmem>>, vector<1x32x64xf32>,
    %c0_51 = arith.constant 0 : index
    %c0_52 = arith.constant 0 : index
    %c0_53 = arith.constant 0 : index
    %57 = vector.load %arg5[%c0_51, %c0_52, %c0_53] : memref<1x32x64xf32, #tpu.memory_space<vmem>>, vector<1x32x64xf32>
    %58 = vector.shape_cast %57 : vector<1x32x64xf32> to vector<32x64xf32>
    %c0_54 = arith.constant 0 : index
    %c18 = arith.constant 18 : index
    %c0_55 = arith.constant 0 : index
    %59 = vector.load %arg1[%c0_54, %c18, %c0_55] : memref<1x64x64xf32, #tpu.memory_space<vmem>>, vector<1x32x64xf32>
    %60 = vector.shape_cast %59 : vector<1x32x64xf32> to vector<32x64xf32>
    %61 = arith.truncf %60 : vector<32x64xf32> to vector<32x64xbf16>
    %c5 = arith.constant 5 : index
    %c0_56 = arith.constant 0 : index
    %c0_57 = arith.constant 0 : index
    %62 = vector.load %arg2[%c5, %c0_56, %c0_57] : memref<9x64x64xbf16, #tpu.memory_space<vmem>>, vector<1x64x64xbf16>
    %63 = vector.shape_cast %62 : vector<1x64x64xbf16> to vector<64x64xbf16>
    %cst_58 = arith.constant dense<0.000000e+00> : vector<32x64xf32>
    %64 = tpu.matmul %61, %63, %cst_58 {dimension_numbers = #tpu.dot_dimension_numbers<[1], [0], [0], [1], [0, 0, 1, 1], [], []>} : vector<32x64xbf16>, vector<64x64xbf16>, vector<32x64xf32> -> vector<32x64xf32>
    %65 = arith.addf %58, %64 : vector<32x64xf32>
    %c0_59 = arith.constant 0 : index
    %c0_60 = arith.constant 0 : index
    %c0_61 = arith.constant 0 : index
    %66 = vector.load %arg5[%c0_59, %c0_60, %c0_61] : memref<1x32x64xf32, #tpu.memory_space<vmem>>, vector<1x32x64xf32>
    %67 = vector.shape_cast %66 : vector<1x32x64xf32> to vector<32x64xf32>
    %68 = vector.shape_cast %65 : vector<32x64xf32> to vector<1x32x64xf32>
    tpu.vector_store %arg5[%c0_59, %c0_60, %c0_61], %68 {strides = array<i32>} : memref<1x32x64xf32, #tpu.memory_space<vmem>>, vector<1x32x64xf32>,
    %c0_62 = arith.constant 0 : index
    %c0_63 = arith.constant 0 : index
    %c0_64 = arith.constant 0 : index
    %69 = vector.load %arg5[%c0_62, %c0_63, %c0_64] : memref<1x32x64xf32, #tpu.memory_space<vmem>>, vector<1x32x64xf32>
    %70 = vector.shape_cast %69 : vector<1x32x64xf32> to vector<32x64xf32>
    %c0_65 = arith.constant 0 : index
    %c24 = arith.constant 24 : index
    %c0_66 = arith.constant 0 : index
    %71 = vector.load %arg1[%c0_65, %c24, %c0_66] : memref<1x64x64xf32, #tpu.memory_space<vmem>>, vector<1x32x64xf32>
    %72 = vector.shape_cast %71 : vector<1x32x64xf32> to vector<32x64xf32>
    %73 = arith.truncf %72 : vector<32x64xf32> to vector<32x64xbf16>
    %c6 = arith.constant 6 : index
    %c0_67 = arith.constant 0 : index
    %c0_68 = arith.constant 0 : index
    %74 = vector.load %arg2[%c6, %c0_67, %c0_68] : memref<9x64x64xbf16, #tpu.memory_space<vmem>>, vector<1x64x64xbf16>
    %75 = vector.shape_cast %74 : vector<1x64x64xbf16> to vector<64x64xbf16>
    %cst_69 = arith.constant dense<0.000000e+00> : vector<32x64xf32>
    %76 = tpu.matmul %73, %75, %cst_69 {dimension_numbers = #tpu.dot_dimension_numbers<[1], [0], [0], [1], [0, 0, 1, 1], [], []>} : vector<32x64xbf16>, vector<64x64xbf16>, vector<32x64xf32> -> vector<32x64xf32>
    %77 = arith.addf %70, %76 : vector<32x64xf32>
    %c0_70 = arith.constant 0 : index
    %c0_71 = arith.constant 0 : index
    %c0_72 = arith.constant 0 : index
    %78 = vector.load %arg5[%c0_70, %c0_71, %c0_72] : memref<1x32x64xf32, #tpu.memory_space<vmem>>, vector<1x32x64xf32>
    %79 = vector.shape_cast %78 : vector<1x32x64xf32> to vector<32x64xf32>
    %80 = vector.shape_cast %77 : vector<32x64xf32> to vector<1x32x64xf32>
    tpu.vector_store %arg5[%c0_70, %c0_71, %c0_72], %80 {strides = array<i32>} : memref<1x32x64xf32, #tpu.memory_space<vmem>>, vector<1x32x64xf32>,
    %c0_73 = arith.constant 0 : index
    %c0_74 = arith.constant 0 : index
    %c0_75 = arith.constant 0 : index
    %81 = vector.load %arg5[%c0_73, %c0_74, %c0_75] : memref<1x32x64xf32, #tpu.memory_space<vmem>>, vector<1x32x64xf32>
    %82 = vector.shape_cast %81 : vector<1x32x64xf32> to vector<32x64xf32>
    %c0_76 = arith.constant 0 : index
    %c25 = arith.constant 25 : index
    %c0_77 = arith.constant 0 : index
    %83 = vector.load %arg1[%c0_76, %c25, %c0_77] : memref<1x64x64xf32, #tpu.memory_space<vmem>>, vector<1x32x64xf32>
    %84 = vector.shape_cast %83 : vector<1x32x64xf32> to vector<32x64xf32>
    %85 = arith.truncf %84 : vector<32x64xf32> to vector<32x64xbf16>
    %c7 = arith.constant 7 : index
    %c0_78 = arith.constant 0 : index
    %c0_79 = arith.constant 0 : index
    %86 = vector.load %arg2[%c7, %c0_78, %c0_79] : memref<9x64x64xbf16, #tpu.memory_space<vmem>>, vector<1x64x64xbf16>
    %87 = vector.shape_cast %86 : vector<1x64x64xbf16> to vector<64x64xbf16>
    %cst_80 = arith.constant dense<0.000000e+00> : vector<32x64xf32>
    %88 = tpu.matmul %85, %87, %cst_80 {dimension_numbers = #tpu.dot_dimension_numbers<[1], [0], [0], [1], [0, 0, 1, 1], [], []>} : vector<32x64xbf16>, vector<64x64xbf16>, vector<32x64xf32> -> vector<32x64xf32>
    %89 = arith.addf %82, %88 : vector<32x64xf32>
    %c0_81 = arith.constant 0 : index
    %c0_82 = arith.constant 0 : index
    %c0_83 = arith.constant 0 : index
    %90 = vector.load %arg5[%c0_81, %c0_82, %c0_83] : memref<1x32x64xf32, #tpu.memory_space<vmem>>, vector<1x32x64xf32>
    %91 = vector.shape_cast %90 : vector<1x32x64xf32> to vector<32x64xf32>
    %92 = vector.shape_cast %89 : vector<32x64xf32> to vector<1x32x64xf32>
    tpu.vector_store %arg5[%c0_81, %c0_82, %c0_83], %92 {strides = array<i32>} : memref<1x32x64xf32, #tpu.memory_space<vmem>>, vector<1x32x64xf32>,
    %c0_84 = arith.constant 0 : index
    %c0_85 = arith.constant 0 : index
    %c0_86 = arith.constant 0 : index
    %93 = vector.load %arg5[%c0_84, %c0_85, %c0_86] : memref<1x32x64xf32, #tpu.memory_space<vmem>>, vector<1x32x64xf32>
    %94 = vector.shape_cast %93 : vector<1x32x64xf32> to vector<32x64xf32>
    %c0_87 = arith.constant 0 : index
    %c26 = arith.constant 26 : index
    %c0_88 = arith.constant 0 : index
    %95 = vector.load %arg1[%c0_87, %c26, %c0_88] : memref<1x64x64xf32, #tpu.memory_space<vmem>>, vector<1x32x64xf32>
    %96 = vector.shape_cast %95 : vector<1x32x64xf32> to vector<32x64xf32>
    %97 = arith.truncf %96 : vector<32x64xf32> to vector<32x64xbf16>
    %c8_89 = arith.constant 8 : index
    %c0_90 = arith.constant 0 : index
    %c0_91 = arith.constant 0 : index
    %98 = vector.load %arg2[%c8_89, %c0_90, %c0_91] : memref<9x64x64xbf16, #tpu.memory_space<vmem>>, vector<1x64x64xbf16>
    %99 = vector.shape_cast %98 : vector<1x64x64xbf16> to vector<64x64xbf16>
    %cst_92 = arith.constant dense<0.000000e+00> : vector<32x64xf32>
    %100 = tpu.matmul %97, %99, %cst_92 {dimension_numbers = #tpu.dot_dimension_numbers<[1], [0], [0], [1], [0, 0, 1, 1], [], []>} : vector<32x64xbf16>, vector<64x64xbf16>, vector<32x64xf32> -> vector<32x64xf32>
    %101 = arith.addf %94, %100 : vector<32x64xf32>
    %c0_93 = arith.constant 0 : index
    %c0_94 = arith.constant 0 : index
    %c0_95 = arith.constant 0 : index
    %102 = vector.load %arg5[%c0_93, %c0_94, %c0_95] : memref<1x32x64xf32, #tpu.memory_space<vmem>>, vector<1x32x64xf32>
    %103 = vector.shape_cast %102 : vector<1x32x64xf32> to vector<32x64xf32>
    %104 = vector.shape_cast %101 : vector<32x64xf32> to vector<1x32x64xf32>
    tpu.vector_store %arg5[%c0_93, %c0_94, %c0_95], %104 {strides = array<i32>} : memref<1x32x64xf32, #tpu.memory_space<vmem>>, vector<1x32x64xf32>,
    %c0_96 = arith.constant 0 : index
    %c0_97 = arith.constant 0 : index
    %c0_98 = arith.constant 0 : index
    %105 = vector.load %arg5[%c0_96, %c0_97, %c0_98] : memref<1x32x64xf32, #tpu.memory_space<vmem>>, vector<1x32x64xf32>
    %106 = vector.shape_cast %105 : vector<1x32x64xf32> to vector<32x64xf32>
    %c0_99 = arith.constant 0 : index
    %c0_100 = arith.constant 0 : index
    %107 = vector.load %arg3[%c0_99, %c0_100] : memref<1x64xf32, #tpu.memory_space<vmem>>, vector<1x64xf32>
    %108 = vector.broadcast %107 : vector<1x64xf32> to vector<32x64xf32>
    %109 = arith.mulf %106, %108 : vector<32x64xf32>
    %c0_101 = arith.constant 0 : index
    %c0_102 = arith.constant 0 : index
    %110 = vector.load %arg4[%c0_101, %c0_102] : memref<1x64xf32, #tpu.memory_space<vmem>>, vector<1x64xf32>
    %111 = vector.broadcast %110 : vector<1x64xf32> to vector<32x64xf32>
    %112 = arith.addf %109, %111 : vector<32x64xf32>
    %cst_103 = arith.constant 0.000000e+00 : f32
    %113 = vector.broadcast %cst_103 : f32 to vector<32x64xf32>
    %114 = arith.maximumf %112, %113 : vector<32x64xf32>
    %c0_104 = arith.constant 0 : index
    %c0_105 = arith.constant 0 : index
    %c0_106 = arith.constant 0 : index
    %115 = vector.load %arg5[%c0_104, %c0_105, %c0_106] : memref<1x32x64xf32, #tpu.memory_space<vmem>>, vector<1x32x64xf32>
    %116 = vector.shape_cast %115 : vector<1x32x64xf32> to vector<32x64xf32>
    %117 = vector.shape_cast %114 : vector<32x64xf32> to vector<1x32x64xf32>
    tpu.vector_store %arg5[%c0_104, %c0_105, %c0_106], %117 {strides = array<i32>} : memref<1x32x64xf32, #tpu.memory_space<vmem>>, vector<1x32x64xf32>,
    return
  }
  func.func @transform_0(%arg0: i32) -> (i32, i32, i32) {
    %c0_i32 = arith.constant 0 : i32
    %c0_i32_0 = arith.constant 0 : i32
    %c0_i32_1 = arith.constant 0 : i32
    return %arg0, %c0_i32, %c0_i32_0 : i32, i32, i32
  }
  func.func @transform_1(%arg0: i32) -> (i32, i32, i32) {
    %c0_i32 = arith.constant 0 : i32
    %c0_i32_0 = arith.constant 0 : i32
    %c0_i32_1 = arith.constant 0 : i32
    %c0_i32_2 = arith.constant 0 : i32
    return %c0_i32, %c0_i32_0, %c0_i32_1 : i32, i32, i32
  }
  func.func @transform_2(%arg0: i32) -> (i32, i32) {
    %c0_i32 = arith.constant 0 : i32
    %c0_i32_0 = arith.constant 0 : i32
    %c0_i32_1 = arith.constant 0 : i32
    return %c0_i32, %c0_i32_0 : i32, i32
  }
  func.func @transform_3(%arg0: i32) -> (i32, i32) {
    %c0_i32 = arith.constant 0 : i32
    %c0_i32_0 = arith.constant 0 : i32
    %c0_i32_1 = arith.constant 0 : i32
    return %c0_i32, %c0_i32_0 : i32, i32
  }
  func.func @transform_4(%arg0: i32) -> (i32, i32, i32) {
    %c0_i32 = arith.constant 0 : i32
    %c0_i32_0 = arith.constant 0 : i32
    %c0_i32_1 = arith.constant 0 : i32
    return %arg0, %c0_i32, %c0_i32_0 : i32, i32, i32
  }
}

module attributes {stable_mosaic.version = 11 : i64} {
  func.func @_conv3x3_res_gap_kernel(%arg0: i32, %arg1: memref<1x64x64xf32, #tpu.memory_space<vmem>>, %arg2: memref<9x64x64xbf16, #tpu.memory_space<vmem>>, %arg3: memref<1x64xf32, #tpu.memory_space<vmem>>, %arg4: memref<1x64xf32, #tpu.memory_space<vmem>>, %arg5: memref<1x32x64xf32, #tpu.memory_space<vmem>>, %arg6: memref<1x1x64xf32, #tpu.memory_space<vmem>>, %arg7: memref<32x64xf32, #tpu.memory_space<vmem>>) attributes {dimension_semantics = [#tpu.dimension_semantics<parallel>], iteration_bounds = array<i64: 2>, scalar_prefetch = 0 : i64, scratch_operands = 1 : i64, tpu.core_type = #tpu.core_type<tc>, window_params = [{transform_indices = @transform_0, window_bounds = array<i64: 1, 64, 64>}, {pipeline_mode = #tpu.pipeline_mode<synchronous>, transform_indices = @transform_1, window_bounds = array<i64: 9, 64, 64>}, {pipeline_mode = #tpu.pipeline_mode<synchronous>, transform_indices = @transform_2, window_bounds = array<i64: 1, 64>}, {pipeline_mode = #tpu.pipeline_mode<synchronous>, transform_indices = @transform_3, window_bounds = array<i64: 1, 64>}, {transform_indices = @transform_4, window_bounds = array<i64: 1, 32, 64>}, {transform_indices = @transform_5, window_bounds = array<i64: 1, 1, 64>}]} {
    %c0 = arith.constant 0 : index
    %c8 = arith.constant 8 : index
    %c0_0 = arith.constant 0 : index
    %0 = vector.load %arg1[%c0, %c8, %c0_0] : memref<1x64x64xf32, #tpu.memory_space<vmem>>, vector<1x32x64xf32>
    %1 = vector.shape_cast %0 : vector<1x32x64xf32> to vector<32x64xf32>
    %2 = arith.truncf %1 : vector<32x64xf32> to vector<32x64xbf16>
    %c0_1 = arith.constant 0 : index
    %c0_2 = arith.constant 0 : index
    %c0_3 = arith.constant 0 : index
    %3 = vector.load %arg2[%c0_1, %c0_2, %c0_3] : memref<9x64x64xbf16, #tpu.memory_space<vmem>>, vector<1x64x64xbf16>
    %4 = vector.shape_cast %3 : vector<1x64x64xbf16> to vector<64x64xbf16>
    %cst = arith.constant dense<0.000000e+00> : vector<32x64xf32>
    %5 = tpu.matmul %2, %4, %cst {dimension_numbers = #tpu.dot_dimension_numbers<[1], [0], [0], [1], [0, 0, 1, 1], [], []>} : vector<32x64xbf16>, vector<64x64xbf16>, vector<32x64xf32> -> vector<32x64xf32>
    %c0_4 = arith.constant 0 : index
    %c0_5 = arith.constant 0 : index
    %6 = vector.load %arg7[%c0_4, %c0_5] : memref<32x64xf32, #tpu.memory_space<vmem>>, vector<32x64xf32>
    tpu.vector_store %arg7[%c0_4, %c0_5], %5 {strides = array<i32>} : memref<32x64xf32, #tpu.memory_space<vmem>>, vector<32x64xf32>,
    %c0_6 = arith.constant 0 : index
    %c0_7 = arith.constant 0 : index
    %7 = vector.load %arg7[%c0_6, %c0_7] : memref<32x64xf32, #tpu.memory_space<vmem>>, vector<32x64xf32>
    %c0_8 = arith.constant 0 : index
    %c9 = arith.constant 9 : index
    %c0_9 = arith.constant 0 : index
    %8 = vector.load %arg1[%c0_8, %c9, %c0_9] : memref<1x64x64xf32, #tpu.memory_space<vmem>>, vector<1x32x64xf32>
    %9 = vector.shape_cast %8 : vector<1x32x64xf32> to vector<32x64xf32>
    %10 = arith.truncf %9 : vector<32x64xf32> to vector<32x64xbf16>
    %c1 = arith.constant 1 : index
    %c0_10 = arith.constant 0 : index
    %c0_11 = arith.constant 0 : index
    %11 = vector.load %arg2[%c1, %c0_10, %c0_11] : memref<9x64x64xbf16, #tpu.memory_space<vmem>>, vector<1x64x64xbf16>
    %12 = vector.shape_cast %11 : vector<1x64x64xbf16> to vector<64x64xbf16>
    %cst_12 = arith.constant dense<0.000000e+00> : vector<32x64xf32>
    %13 = tpu.matmul %10, %12, %cst_12 {dimension_numbers = #tpu.dot_dimension_numbers<[1], [0], [0], [1], [0, 0, 1, 1], [], []>} : vector<32x64xbf16>, vector<64x64xbf16>, vector<32x64xf32> -> vector<32x64xf32>
    %14 = arith.addf %7, %13 : vector<32x64xf32>
    %c0_13 = arith.constant 0 : index
    %c0_14 = arith.constant 0 : index
    %15 = vector.load %arg7[%c0_13, %c0_14] : memref<32x64xf32, #tpu.memory_space<vmem>>, vector<32x64xf32>
    tpu.vector_store %arg7[%c0_13, %c0_14], %14 {strides = array<i32>} : memref<32x64xf32, #tpu.memory_space<vmem>>, vector<32x64xf32>,
    %c0_15 = arith.constant 0 : index
    %c0_16 = arith.constant 0 : index
    %16 = vector.load %arg7[%c0_15, %c0_16] : memref<32x64xf32, #tpu.memory_space<vmem>>, vector<32x64xf32>
    %c0_17 = arith.constant 0 : index
    %c10 = arith.constant 10 : index
    %c0_18 = arith.constant 0 : index
    %17 = vector.load %arg1[%c0_17, %c10, %c0_18] : memref<1x64x64xf32, #tpu.memory_space<vmem>>, vector<1x32x64xf32>
    %18 = vector.shape_cast %17 : vector<1x32x64xf32> to vector<32x64xf32>
    %19 = arith.truncf %18 : vector<32x64xf32> to vector<32x64xbf16>
    %c2 = arith.constant 2 : index
    %c0_19 = arith.constant 0 : index
    %c0_20 = arith.constant 0 : index
    %20 = vector.load %arg2[%c2, %c0_19, %c0_20] : memref<9x64x64xbf16, #tpu.memory_space<vmem>>, vector<1x64x64xbf16>
    %21 = vector.shape_cast %20 : vector<1x64x64xbf16> to vector<64x64xbf16>
    %cst_21 = arith.constant dense<0.000000e+00> : vector<32x64xf32>
    %22 = tpu.matmul %19, %21, %cst_21 {dimension_numbers = #tpu.dot_dimension_numbers<[1], [0], [0], [1], [0, 0, 1, 1], [], []>} : vector<32x64xbf16>, vector<64x64xbf16>, vector<32x64xf32> -> vector<32x64xf32>
    %23 = arith.addf %16, %22 : vector<32x64xf32>
    %c0_22 = arith.constant 0 : index
    %c0_23 = arith.constant 0 : index
    %24 = vector.load %arg7[%c0_22, %c0_23] : memref<32x64xf32, #tpu.memory_space<vmem>>, vector<32x64xf32>
    tpu.vector_store %arg7[%c0_22, %c0_23], %23 {strides = array<i32>} : memref<32x64xf32, #tpu.memory_space<vmem>>, vector<32x64xf32>,
    %c0_24 = arith.constant 0 : index
    %c0_25 = arith.constant 0 : index
    %25 = vector.load %arg7[%c0_24, %c0_25] : memref<32x64xf32, #tpu.memory_space<vmem>>, vector<32x64xf32>
    %c0_26 = arith.constant 0 : index
    %c16 = arith.constant 16 : index
    %c0_27 = arith.constant 0 : index
    %26 = vector.load %arg1[%c0_26, %c16, %c0_27] : memref<1x64x64xf32, #tpu.memory_space<vmem>>, vector<1x32x64xf32>
    %27 = vector.shape_cast %26 : vector<1x32x64xf32> to vector<32x64xf32>
    %28 = arith.truncf %27 : vector<32x64xf32> to vector<32x64xbf16>
    %c3 = arith.constant 3 : index
    %c0_28 = arith.constant 0 : index
    %c0_29 = arith.constant 0 : index
    %29 = vector.load %arg2[%c3, %c0_28, %c0_29] : memref<9x64x64xbf16, #tpu.memory_space<vmem>>, vector<1x64x64xbf16>
    %30 = vector.shape_cast %29 : vector<1x64x64xbf16> to vector<64x64xbf16>
    %cst_30 = arith.constant dense<0.000000e+00> : vector<32x64xf32>
    %31 = tpu.matmul %28, %30, %cst_30 {dimension_numbers = #tpu.dot_dimension_numbers<[1], [0], [0], [1], [0, 0, 1, 1], [], []>} : vector<32x64xbf16>, vector<64x64xbf16>, vector<32x64xf32> -> vector<32x64xf32>
    %32 = arith.addf %25, %31 : vector<32x64xf32>
    %c0_31 = arith.constant 0 : index
    %c0_32 = arith.constant 0 : index
    %33 = vector.load %arg7[%c0_31, %c0_32] : memref<32x64xf32, #tpu.memory_space<vmem>>, vector<32x64xf32>
    tpu.vector_store %arg7[%c0_31, %c0_32], %32 {strides = array<i32>} : memref<32x64xf32, #tpu.memory_space<vmem>>, vector<32x64xf32>,
    %c0_33 = arith.constant 0 : index
    %c0_34 = arith.constant 0 : index
    %34 = vector.load %arg7[%c0_33, %c0_34] : memref<32x64xf32, #tpu.memory_space<vmem>>, vector<32x64xf32>
    %c0_35 = arith.constant 0 : index
    %c17 = arith.constant 17 : index
    %c0_36 = arith.constant 0 : index
    %35 = vector.load %arg1[%c0_35, %c17, %c0_36] : memref<1x64x64xf32, #tpu.memory_space<vmem>>, vector<1x32x64xf32>
    %36 = vector.shape_cast %35 : vector<1x32x64xf32> to vector<32x64xf32>
    %37 = arith.truncf %36 : vector<32x64xf32> to vector<32x64xbf16>
    %c4 = arith.constant 4 : index
    %c0_37 = arith.constant 0 : index
    %c0_38 = arith.constant 0 : index
    %38 = vector.load %arg2[%c4, %c0_37, %c0_38] : memref<9x64x64xbf16, #tpu.memory_space<vmem>>, vector<1x64x64xbf16>
    %39 = vector.shape_cast %38 : vector<1x64x64xbf16> to vector<64x64xbf16>
    %cst_39 = arith.constant dense<0.000000e+00> : vector<32x64xf32>
    %40 = tpu.matmul %37, %39, %cst_39 {dimension_numbers = #tpu.dot_dimension_numbers<[1], [0], [0], [1], [0, 0, 1, 1], [], []>} : vector<32x64xbf16>, vector<64x64xbf16>, vector<32x64xf32> -> vector<32x64xf32>
    %41 = arith.addf %34, %40 : vector<32x64xf32>
    %c0_40 = arith.constant 0 : index
    %c0_41 = arith.constant 0 : index
    %42 = vector.load %arg7[%c0_40, %c0_41] : memref<32x64xf32, #tpu.memory_space<vmem>>, vector<32x64xf32>
    tpu.vector_store %arg7[%c0_40, %c0_41], %41 {strides = array<i32>} : memref<32x64xf32, #tpu.memory_space<vmem>>, vector<32x64xf32>,
    %c0_42 = arith.constant 0 : index
    %c0_43 = arith.constant 0 : index
    %43 = vector.load %arg7[%c0_42, %c0_43] : memref<32x64xf32, #tpu.memory_space<vmem>>, vector<32x64xf32>
    %c0_44 = arith.constant 0 : index
    %c18 = arith.constant 18 : index
    %c0_45 = arith.constant 0 : index
    %44 = vector.load %arg1[%c0_44, %c18, %c0_45] : memref<1x64x64xf32, #tpu.memory_space<vmem>>, vector<1x32x64xf32>
    %45 = vector.shape_cast %44 : vector<1x32x64xf32> to vector<32x64xf32>
    %46 = arith.truncf %45 : vector<32x64xf32> to vector<32x64xbf16>
    %c5 = arith.constant 5 : index
    %c0_46 = arith.constant 0 : index
    %c0_47 = arith.constant 0 : index
    %47 = vector.load %arg2[%c5, %c0_46, %c0_47] : memref<9x64x64xbf16, #tpu.memory_space<vmem>>, vector<1x64x64xbf16>
    %48 = vector.shape_cast %47 : vector<1x64x64xbf16> to vector<64x64xbf16>
    %cst_48 = arith.constant dense<0.000000e+00> : vector<32x64xf32>
    %49 = tpu.matmul %46, %48, %cst_48 {dimension_numbers = #tpu.dot_dimension_numbers<[1], [0], [0], [1], [0, 0, 1, 1], [], []>} : vector<32x64xbf16>, vector<64x64xbf16>, vector<32x64xf32> -> vector<32x64xf32>
    %50 = arith.addf %43, %49 : vector<32x64xf32>
    %c0_49 = arith.constant 0 : index
    %c0_50 = arith.constant 0 : index
    %51 = vector.load %arg7[%c0_49, %c0_50] : memref<32x64xf32, #tpu.memory_space<vmem>>, vector<32x64xf32>
    tpu.vector_store %arg7[%c0_49, %c0_50], %50 {strides = array<i32>} : memref<32x64xf32, #tpu.memory_space<vmem>>, vector<32x64xf32>,
    %c0_51 = arith.constant 0 : index
    %c0_52 = arith.constant 0 : index
    %52 = vector.load %arg7[%c0_51, %c0_52] : memref<32x64xf32, #tpu.memory_space<vmem>>, vector<32x64xf32>
    %c0_53 = arith.constant 0 : index
    %c24 = arith.constant 24 : index
    %c0_54 = arith.constant 0 : index
    %53 = vector.load %arg1[%c0_53, %c24, %c0_54] : memref<1x64x64xf32, #tpu.memory_space<vmem>>, vector<1x32x64xf32>
    %54 = vector.shape_cast %53 : vector<1x32x64xf32> to vector<32x64xf32>
    %55 = arith.truncf %54 : vector<32x64xf32> to vector<32x64xbf16>
    %c6 = arith.constant 6 : index
    %c0_55 = arith.constant 0 : index
    %c0_56 = arith.constant 0 : index
    %56 = vector.load %arg2[%c6, %c0_55, %c0_56] : memref<9x64x64xbf16, #tpu.memory_space<vmem>>, vector<1x64x64xbf16>
    %57 = vector.shape_cast %56 : vector<1x64x64xbf16> to vector<64x64xbf16>
    %cst_57 = arith.constant dense<0.000000e+00> : vector<32x64xf32>
    %58 = tpu.matmul %55, %57, %cst_57 {dimension_numbers = #tpu.dot_dimension_numbers<[1], [0], [0], [1], [0, 0, 1, 1], [], []>} : vector<32x64xbf16>, vector<64x64xbf16>, vector<32x64xf32> -> vector<32x64xf32>
    %59 = arith.addf %52, %58 : vector<32x64xf32>
    %c0_58 = arith.constant 0 : index
    %c0_59 = arith.constant 0 : index
    %60 = vector.load %arg7[%c0_58, %c0_59] : memref<32x64xf32, #tpu.memory_space<vmem>>, vector<32x64xf32>
    tpu.vector_store %arg7[%c0_58, %c0_59], %59 {strides = array<i32>} : memref<32x64xf32, #tpu.memory_space<vmem>>, vector<32x64xf32>,
    %c0_60 = arith.constant 0 : index
    %c0_61 = arith.constant 0 : index
    %61 = vector.load %arg7[%c0_60, %c0_61] : memref<32x64xf32, #tpu.memory_space<vmem>>, vector<32x64xf32>
    %c0_62 = arith.constant 0 : index
    %c25 = arith.constant 25 : index
    %c0_63 = arith.constant 0 : index
    %62 = vector.load %arg1[%c0_62, %c25, %c0_63] : memref<1x64x64xf32, #tpu.memory_space<vmem>>, vector<1x32x64xf32>
    %63 = vector.shape_cast %62 : vector<1x32x64xf32> to vector<32x64xf32>
    %64 = arith.truncf %63 : vector<32x64xf32> to vector<32x64xbf16>
    %c7 = arith.constant 7 : index
    %c0_64 = arith.constant 0 : index
    %c0_65 = arith.constant 0 : index
    %65 = vector.load %arg2[%c7, %c0_64, %c0_65] : memref<9x64x64xbf16, #tpu.memory_space<vmem>>, vector<1x64x64xbf16>
    %66 = vector.shape_cast %65 : vector<1x64x64xbf16> to vector<64x64xbf16>
    %cst_66 = arith.constant dense<0.000000e+00> : vector<32x64xf32>
    %67 = tpu.matmul %64, %66, %cst_66 {dimension_numbers = #tpu.dot_dimension_numbers<[1], [0], [0], [1], [0, 0, 1, 1], [], []>} : vector<32x64xbf16>, vector<64x64xbf16>, vector<32x64xf32> -> vector<32x64xf32>
    %68 = arith.addf %61, %67 : vector<32x64xf32>
    %c0_67 = arith.constant 0 : index
    %c0_68 = arith.constant 0 : index
    %69 = vector.load %arg7[%c0_67, %c0_68] : memref<32x64xf32, #tpu.memory_space<vmem>>, vector<32x64xf32>
    tpu.vector_store %arg7[%c0_67, %c0_68], %68 {strides = array<i32>} : memref<32x64xf32, #tpu.memory_space<vmem>>, vector<32x64xf32>,
    %c0_69 = arith.constant 0 : index
    %c0_70 = arith.constant 0 : index
    %70 = vector.load %arg7[%c0_69, %c0_70] : memref<32x64xf32, #tpu.memory_space<vmem>>, vector<32x64xf32>
    %c0_71 = arith.constant 0 : index
    %c26 = arith.constant 26 : index
    %c0_72 = arith.constant 0 : index
    %71 = vector.load %arg1[%c0_71, %c26, %c0_72] : memref<1x64x64xf32, #tpu.memory_space<vmem>>, vector<1x32x64xf32>
    %72 = vector.shape_cast %71 : vector<1x32x64xf32> to vector<32x64xf32>
    %73 = arith.truncf %72 : vector<32x64xf32> to vector<32x64xbf16>
    %c8_73 = arith.constant 8 : index
    %c0_74 = arith.constant 0 : index
    %c0_75 = arith.constant 0 : index
    %74 = vector.load %arg2[%c8_73, %c0_74, %c0_75] : memref<9x64x64xbf16, #tpu.memory_space<vmem>>, vector<1x64x64xbf16>
    %75 = vector.shape_cast %74 : vector<1x64x64xbf16> to vector<64x64xbf16>
    %cst_76 = arith.constant dense<0.000000e+00> : vector<32x64xf32>
    %76 = tpu.matmul %73, %75, %cst_76 {dimension_numbers = #tpu.dot_dimension_numbers<[1], [0], [0], [1], [0, 0, 1, 1], [], []>} : vector<32x64xbf16>, vector<64x64xbf16>, vector<32x64xf32> -> vector<32x64xf32>
    %77 = arith.addf %70, %76 : vector<32x64xf32>
    %c0_77 = arith.constant 0 : index
    %c0_78 = arith.constant 0 : index
    %78 = vector.load %arg7[%c0_77, %c0_78] : memref<32x64xf32, #tpu.memory_space<vmem>>, vector<32x64xf32>
    tpu.vector_store %arg7[%c0_77, %c0_78], %77 {strides = array<i32>} : memref<32x64xf32, #tpu.memory_space<vmem>>, vector<32x64xf32>,
    %c0_79 = arith.constant 0 : index
    %c0_80 = arith.constant 0 : index
    %79 = vector.load %arg7[%c0_79, %c0_80] : memref<32x64xf32, #tpu.memory_space<vmem>>, vector<32x64xf32>
    %c0_81 = arith.constant 0 : index
    %c0_82 = arith.constant 0 : index
    %80 = vector.load %arg3[%c0_81, %c0_82] : memref<1x64xf32, #tpu.memory_space<vmem>>, vector<1x64xf32>
    %81 = vector.broadcast %80 : vector<1x64xf32> to vector<32x64xf32>
    %82 = arith.mulf %79, %81 : vector<32x64xf32>
    %c0_83 = arith.constant 0 : index
    %c0_84 = arith.constant 0 : index
    %83 = vector.load %arg4[%c0_83, %c0_84] : memref<1x64xf32, #tpu.memory_space<vmem>>, vector<1x64xf32>
    %84 = vector.broadcast %83 : vector<1x64xf32> to vector<32x64xf32>
    %85 = arith.addf %82, %84 : vector<32x64xf32>
    %c0_85 = arith.constant 0 : index
    %c0_86 = arith.constant 0 : index
    %c0_87 = arith.constant 0 : index
    %86 = vector.load %arg5[%c0_85, %c0_86, %c0_87] : memref<1x32x64xf32, #tpu.memory_space<vmem>>, vector<1x32x64xf32>
    %87 = vector.shape_cast %86 : vector<1x32x64xf32> to vector<32x64xf32>
    %88 = arith.addf %85, %87 : vector<32x64xf32>
    %cst_88 = arith.constant 0.000000e+00 : f32
    %89 = vector.broadcast %cst_88 : f32 to vector<32x64xf32>
    %90 = arith.maximumf %88, %89 : vector<32x64xf32>
    %91 = tpu.iota {dimensions = array<i32: 0>} : vector<32x64xi32>
    %c8_i32 = arith.constant 8 : i32
    %c0_i32 = arith.constant 0 : i32
    %92 = arith.cmpi eq, %c8_i32, %c0_i32 : i32
    %c1_i32 = arith.constant 1 : i32
    %93 = arith.select %92, %c1_i32, %c8_i32 : i32
    %94 = vector.broadcast %93 : i32 to vector<32x64xi32>
    %95 = arith.remsi %91, %94 : vector<32x64xi32>
    %c0_i32_89 = arith.constant 0 : i32
    %96 = vector.broadcast %c0_i32_89 : i32 to vector<32x64xi32>
    %97 = arith.cmpi ne, %95, %96 : vector<32x64xi32>
    %c0_i32_90 = arith.constant 0 : i32
    %98 = vector.broadcast %c0_i32_90 : i32 to vector<32x64xi32>
    %99 = arith.cmpi slt, %95, %98 : vector<32x64xi32>
    %c0_i32_91 = arith.constant 0 : i32
    %100 = arith.cmpi slt, %93, %c0_i32_91 : i32
    %101 = vector.broadcast %100 : i1 to vector<32x64xi1>
    %102 = vector.broadcast %101 : vector<32x64xi1> to vector<32x64xi1>
    %103 = arith.xori %99, %102 : vector<32x64xi1>
    %104 = arith.andi %103, %97 : vector<32x64xi1>
    %105 = vector.broadcast %93 : i32 to vector<32x64xi32>
    %106 = arith.addi %95, %105 : vector<32x64xi32>
    %107 = arith.select %104, %106, %95 : vector<32x64xi1>, vector<32x64xi32>
    %c1_i32_92 = arith.constant 1 : i32
    %108 = vector.broadcast %c1_i32_92 : i32 to vector<32x64xi32>
    %109 = arith.cmpi sge, %107, %108 : vector<32x64xi32>
    %c4_i32 = arith.constant 4 : i32
    %110 = vector.broadcast %c4_i32 : i32 to vector<32x64xi32>
    %111 = arith.cmpi sle, %107, %110 : vector<32x64xi32>
    %112 = arith.andi %109, %111 : vector<32x64xi1>
    %cst_93 = arith.constant 0.000000e+00 : f32
    %113 = vector.broadcast %cst_93 : f32 to vector<32x64xf32>
    %114 = arith.select %112, %90, %113 : vector<32x64xi1>, vector<32x64xf32>
    %cst_94 = arith.constant dense<0.000000e+00> : vector<64xf32>
    %115 = vector.multi_reduction <add>, %114, %cst_94 [0] : vector<32x64xf32> to vector<64xf32>
    %116 = vector.shape_cast %115 : vector<64xf32> to vector<1x64xf32>
    %cst_95 = arith.constant 6.250000e-02 : f32
    %117 = vector.broadcast %cst_95 : f32 to vector<1x64xf32>
    %118 = arith.mulf %116, %117 : vector<1x64xf32>
    %c0_96 = arith.constant 0 : index
    %c0_97 = arith.constant 0 : index
    %c0_98 = arith.constant 0 : index
    %119 = vector.load %arg6[%c0_96, %c0_97, %c0_98] : memref<1x1x64xf32, #tpu.memory_space<vmem>>, vector<1x1x64xf32>
    %120 = vector.shape_cast %119 : vector<1x1x64xf32> to vector<1x64xf32>
    %121 = vector.shape_cast %118 : vector<1x64xf32> to vector<1x1x64xf32>
    tpu.vector_store %arg6[%c0_96, %c0_97, %c0_98], %121 {strides = array<i32>} : memref<1x1x64xf32, #tpu.memory_space<vmem>>, vector<1x1x64xf32>,
    return
  }
  func.func @transform_0(%arg0: i32) -> (i32, i32, i32) {
    %c0_i32 = arith.constant 0 : i32
    %c0_i32_0 = arith.constant 0 : i32
    %c0_i32_1 = arith.constant 0 : i32
    return %arg0, %c0_i32, %c0_i32_0 : i32, i32, i32
  }
  func.func @transform_1(%arg0: i32) -> (i32, i32, i32) {
    %c0_i32 = arith.constant 0 : i32
    %c0_i32_0 = arith.constant 0 : i32
    %c0_i32_1 = arith.constant 0 : i32
    %c0_i32_2 = arith.constant 0 : i32
    return %c0_i32, %c0_i32_0, %c0_i32_1 : i32, i32, i32
  }
  func.func @transform_2(%arg0: i32) -> (i32, i32) {
    %c0_i32 = arith.constant 0 : i32
    %c0_i32_0 = arith.constant 0 : i32
    %c0_i32_1 = arith.constant 0 : i32
    return %c0_i32, %c0_i32_0 : i32, i32
  }
  func.func @transform_3(%arg0: i32) -> (i32, i32) {
    %c0_i32 = arith.constant 0 : i32
    %c0_i32_0 = arith.constant 0 : i32
    %c0_i32_1 = arith.constant 0 : i32
    return %c0_i32, %c0_i32_0 : i32, i32
  }
  func.func @transform_4(%arg0: i32) -> (i32, i32, i32) {
    %c0_i32 = arith.constant 0 : i32
    %c0_i32_0 = arith.constant 0 : i32
    %c0_i32_1 = arith.constant 0 : i32
    return %arg0, %c0_i32, %c0_i32_0 : i32, i32, i32
  }
  func.func @transform_5(%arg0: i32) -> (i32, i32, i32) {
    %c0_i32 = arith.constant 0 : i32
    %c0_i32_0 = arith.constant 0 : i32
    %c0_i32_1 = arith.constant 0 : i32
    return %arg0, %c0_i32, %c0_i32_0 : i32, i32, i32
  }
}

module attributes {stable_mosaic.version = 11 : i64} {
  func.func @_fc_head_kernel(%arg0: i32, %arg1: memref<2x64xbf16, #tpu.memory_space<vmem>>, %arg2: memref<64x512xbf16, #tpu.memory_space<vmem>>, %arg3: memref<1x512xf32, #tpu.memory_space<vmem>>, %arg4: memref<512x1024xbf16, #tpu.memory_space<vmem>>, %arg5: memref<1x1024xf32, #tpu.memory_space<vmem>>, %arg6: memref<1024x128xbf16, #tpu.memory_space<vmem>>, %arg7: memref<1x128xf32, #tpu.memory_space<vmem>>, %arg8: memref<2x128xf32, #tpu.memory_space<vmem>>) attributes {dimension_semantics = [#tpu.dimension_semantics<parallel>], iteration_bounds = array<i64: 1>, scalar_prefetch = 0 : i64, scratch_operands = 0 : i64, tpu.core_type = #tpu.core_type<tc>, window_params = [{transform_indices = @transform_0, window_bounds = array<i64: 2, 64>}, {pipeline_mode = #tpu.pipeline_mode<synchronous>, transform_indices = @transform_1, window_bounds = array<i64: 64, 512>}, {pipeline_mode = #tpu.pipeline_mode<synchronous>, transform_indices = @transform_2, window_bounds = array<i64: 1, 512>}, {pipeline_mode = #tpu.pipeline_mode<synchronous>, transform_indices = @transform_3, window_bounds = array<i64: 512, 1024>}, {pipeline_mode = #tpu.pipeline_mode<synchronous>, transform_indices = @transform_4, window_bounds = array<i64: 1, 1024>}, {pipeline_mode = #tpu.pipeline_mode<synchronous>, transform_indices = @transform_5, window_bounds = array<i64: 1024, 128>}, {pipeline_mode = #tpu.pipeline_mode<synchronous>, transform_indices = @transform_6, window_bounds = array<i64: 1, 128>}, {transform_indices = @transform_7, window_bounds = array<i64: 2, 128>}]} {
    %c0 = arith.constant 0 : index
    %c0_0 = arith.constant 0 : index
    %0 = vector.load %arg1[%c0, %c0_0] : memref<2x64xbf16, #tpu.memory_space<vmem>>, vector<2x64xbf16>
    %c0_1 = arith.constant 0 : index
    %c0_2 = arith.constant 0 : index
    %1 = vector.load %arg2[%c0_1, %c0_2] : memref<64x512xbf16, #tpu.memory_space<vmem>>, vector<64x512xbf16>
    %cst = arith.constant dense<0.000000e+00> : vector<2x512xf32>
    %2 = tpu.matmul %0, %1, %cst {dimension_numbers = #tpu.dot_dimension_numbers<[1], [0], [0], [1], [0, 0, 1, 1], [], []>} : vector<2x64xbf16>, vector<64x512xbf16>, vector<2x512xf32> -> vector<2x512xf32>
    %c0_3 = arith.constant 0 : index
    %c0_4 = arith.constant 0 : index
    %3 = vector.load %arg3[%c0_3, %c0_4] : memref<1x512xf32, #tpu.memory_space<vmem>>, vector<1x512xf32>
    %4 = vector.broadcast %3 : vector<1x512xf32> to vector<2x512xf32>
    %5 = arith.addf %2, %4 : vector<2x512xf32>
    %cst_5 = arith.constant 0.000000e+00 : f32
    %6 = vector.broadcast %cst_5 : f32 to vector<2x512xf32>
    %7 = arith.maximumf %5, %6 : vector<2x512xf32>
    %8 = arith.truncf %7 : vector<2x512xf32> to vector<2x512xbf16>
    %c0_6 = arith.constant 0 : index
    %c0_7 = arith.constant 0 : index
    %9 = vector.load %arg4[%c0_6, %c0_7] : memref<512x1024xbf16, #tpu.memory_space<vmem>>, vector<512x1024xbf16>
    %cst_8 = arith.constant dense<0.000000e+00> : vector<2x1024xf32>
    %10 = tpu.matmul %8, %9, %cst_8 {dimension_numbers = #tpu.dot_dimension_numbers<[1], [0], [0], [1], [0, 0, 1, 1], [], []>} : vector<2x512xbf16>, vector<512x1024xbf16>, vector<2x1024xf32> -> vector<2x1024xf32>
    %c0_9 = arith.constant 0 : index
    %c0_10 = arith.constant 0 : index
    %11 = vector.load %arg5[%c0_9, %c0_10] : memref<1x1024xf32, #tpu.memory_space<vmem>>, vector<1x1024xf32>
    %12 = vector.broadcast %11 : vector<1x1024xf32> to vector<2x1024xf32>
    %13 = arith.addf %10, %12 : vector<2x1024xf32>
    %cst_11 = arith.constant 0.000000e+00 : f32
    %14 = vector.broadcast %cst_11 : f32 to vector<2x1024xf32>
    %15 = arith.maximumf %13, %14 : vector<2x1024xf32>
    %16 = arith.truncf %15 : vector<2x1024xf32> to vector<2x1024xbf16>
    %c0_12 = arith.constant 0 : index
    %c0_13 = arith.constant 0 : index
    %17 = vector.load %arg6[%c0_12, %c0_13] : memref<1024x128xbf16, #tpu.memory_space<vmem>>, vector<1024x128xbf16>
    %cst_14 = arith.constant dense<0.000000e+00> : vector<2x128xf32>
    %18 = tpu.matmul %16, %17, %cst_14 {dimension_numbers = #tpu.dot_dimension_numbers<[1], [0], [0], [1], [0, 0, 1, 1], [], []>} : vector<2x1024xbf16>, vector<1024x128xbf16>, vector<2x128xf32> -> vector<2x128xf32>
    %c0_15 = arith.constant 0 : index
    %c0_16 = arith.constant 0 : index
    %19 = vector.load %arg7[%c0_15, %c0_16] : memref<1x128xf32, #tpu.memory_space<vmem>>, vector<1x128xf32>
    %20 = vector.broadcast %19 : vector<1x128xf32> to vector<2x128xf32>
    %21 = arith.addf %18, %20 : vector<2x128xf32>
    %c0_17 = arith.constant 0 : index
    %c0_18 = arith.constant 0 : index
    %22 = vector.load %arg8[%c0_17, %c0_18] : memref<2x128xf32, #tpu.memory_space<vmem>>, vector<2x128xf32>
    tpu.vector_store %arg8[%c0_17, %c0_18], %21 {strides = array<i32>} : memref<2x128xf32, #tpu.memory_space<vmem>>, vector<2x128xf32>,
    return
  }
  func.func @transform_0(%arg0: i32) -> (i32, i32) {
    %c0_i32 = arith.constant 0 : i32
    %c0_i32_0 = arith.constant 0 : i32
    return %arg0, %c0_i32 : i32, i32
  }
  func.func @transform_1(%arg0: i32) -> (i32, i32) {
    %c0_i32 = arith.constant 0 : i32
    %c0_i32_0 = arith.constant 0 : i32
    %c0_i32_1 = arith.constant 0 : i32
    return %c0_i32, %c0_i32_0 : i32, i32
  }
  func.func @transform_2(%arg0: i32) -> (i32, i32) {
    %c0_i32 = arith.constant 0 : i32
    %c0_i32_0 = arith.constant 0 : i32
    %c0_i32_1 = arith.constant 0 : i32
    return %c0_i32, %c0_i32_0 : i32, i32
  }
  func.func @transform_3(%arg0: i32) -> (i32, i32) {
    %c0_i32 = arith.constant 0 : i32
    %c0_i32_0 = arith.constant 0 : i32
    %c0_i32_1 = arith.constant 0 : i32
    return %c0_i32, %c0_i32_0 : i32, i32
  }
  func.func @transform_4(%arg0: i32) -> (i32, i32) {
    %c0_i32 = arith.constant 0 : i32
    %c0_i32_0 = arith.constant 0 : i32
    %c0_i32_1 = arith.constant 0 : i32
    return %c0_i32, %c0_i32_0 : i32, i32
  }
  func.func @transform_5(%arg0: i32) -> (i32, i32) {
    %c0_i32 = arith.constant 0 : i32
    %c0_i32_0 = arith.constant 0 : i32
    %c0_i32_1 = arith.constant 0 : i32
    return %c0_i32, %c0_i32_0 : i32, i32
  }
  func.func @transform_6(%arg0: i32) -> (i32, i32) {
    %c0_i32 = arith.constant 0 : i32
    %c0_i32_0 = arith.constant 0 : i32
    %c0_i32_1 = arith.constant 0 : i32
    return %c0_i32, %c0_i32_0 : i32, i32
  }
  func.func @transform_7(%arg0: i32) -> (i32, i32) {
    %c0_i32 = arith.constant 0 : i32
    %c0_i32_0 = arith.constant 0 : i32
    return %arg0, %c0_i32 : i32, i32
  }
}

</mosaic_0001>

<llo_original>
// kernel: covidx_forward.5
$region0: #{covidx_forward.5}
  #allocation0 [shape = 'u32[]', space=smem, size = 0x4, offset = 0x4, fixed_abs, tag = 'smem constant byte address 0x4 - core index']
  #allocation1 [shape = 'u32[144,128]{1,0:T(1,128)}', space=vmem, size = 0x12000, scoped, tag = 'internal scratch']
  %s0 = inlined_call_operand.vmem [shape: bf16[128,64], index: 0, kind: input, shape index: {}]
  %s1 = inlined_call_operand.vmem [shape: bf16[64,64], index: 1, kind: input, shape index: {}]
  %s2 = inlined_call_operand.vmem [shape: f32[1,64], index: 2, kind: input, shape index: {}]
  %s3 = inlined_call_operand.vmem [shape: f32[1,64], index: 3, kind: input, shape index: {}]
  %s4 = inlined_call_operand.vmem [shape: f32[128,64], index: 4, kind: output, shape index: {}]
  %s5 = sld [smem:[#allocation0]]
  $region26: #{covidx_forward.5} parent=0
    _
  %s7 = ssub.s32 1, %s5
  %s8 = scalar_select 0, %s7, %s5
  // Predicated region
  $region2: #{covidx_forward.5} parent=0 // pred_check
    _
  $region3: #{covidx_forward.5} parent=0 // pred_check_branch
    %10 = sbr.rel (0) target = $region5
  $region4: #{covidx_forward.5} parent=0 // pred_region
    _
  $region5: #{covidx_forward.5} parent=0 // pred_fallthru
    _
  // Predicated region
  $region6: #{covidx_forward.5} parent=0 // pred_check
    _
  $region7: #{covidx_forward.5} parent=0 // pred_check_branch
    %12 = sbr.rel (0) target = $region9
  $region8: #{covidx_forward.5} parent=0 // pred_region
    _
  $region9: #{covidx_forward.5} parent=0 // pred_fallthru
    _
  // Predicated region
  $region10: #{covidx_forward.5} parent=0 // pred_check
    _
  $region11: #{covidx_forward.5} parent=0 // pred_check_branch
    %14 = sbr.rel (0) target = $region13
  $region12: #{covidx_forward.5} parent=0 // pred_region
    _
  $region13: #{covidx_forward.5} parent=0 // pred_fallthru
    _
  // Predicated region
  $region14: #{covidx_forward.5} parent=0 // pred_check
    _
  $region15: #{covidx_forward.5} parent=0 // pred_check_branch
    %16 = sbr.rel (0) target = $region17
  $region16: #{covidx_forward.5} parent=0 // pred_region
    _
  $region17: #{covidx_forward.5} parent=0 // pred_fallthru
    _
  %v18 = vld [vmem:[%s0] sm:$0xf]
  %v19 = vld [vmem:[%s0 + $0x4] sm:$0xf]
  %v20 = vld [vmem:[%s0 + $0x8] sm:$0xf]
  %v21 = vld [vmem:[%s0 + $0xc] sm:$0xf]
  %v22 = vld [vmem:[%s0 + $0x10] sm:$0xf]
  %v23 = vld [vmem:[%s0 + $0x14] sm:$0xf]
  %v24 = vld [vmem:[%s0 + $0x18] sm:$0xf]
  %v25 = vld [vmem:[%s0 + $0x1c] sm:$0xf]
  %v26 = vld [vmem:[%s0 + $0x20] sm:$0xf]
  %v27 = vld [vmem:[%s0 + $0x24] sm:$0xf]
  %v28 = vld [vmem:[%s0 + $0x28] sm:$0xf]
  %v29 = vld [vmem:[%s0 + $0x2c] sm:$0xf]
  %v30 = vld [vmem:[%s0 + $0x30] sm:$0xf]
  %v31 = vld [vmem:[%s0 + $0x34] sm:$0xf]
  %v32 = vld [vmem:[%s0 + $0x38] sm:$0xf]
  %v33 = vld [vmem:[%s0 + $0x3c] sm:$0xf]
  %v34 = vld [vmem:[%s1] sm:$0xf]
  %v35 = vld [vmem:[%s1 + $0x4] sm:$0xf]
  %v36 = vld [vmem:[%s1 + $0x8] sm:$0xf]
  %v37 = vld [vmem:[%s1 + $0xc] sm:$0xf]
  %v38 = vld [vmem:[%s1 + $0x10] sm:$0xf]
  %v39 = vld [vmem:[%s1 + $0x14] sm:$0xf]
  %v40 = vld [vmem:[%s1 + $0x18] sm:$0xf]
  %v41 = vld [vmem:[%s1 + $0x1c] sm:$0xf]
  %v58 = vunpack.c.l.b16 %v18
  %v59 = vunpack.c.l.b16 %v19
  %v60 = vunpack.c.l.b16 %v20
  %v61 = vunpack.c.l.b16 %v21
  %v62 = vunpack.c.l.b16 %v22
  %v63 = vunpack.c.l.b16 %v23
  %v64 = vunpack.c.l.b16 %v24
  %v65 = vunpack.c.l.b16 %v25
  %v66 = vunpack.c.l.b16 %v26
  %v67 = vunpack.c.l.b16 %v27
  %v68 = vunpack.c.l.b16 %v28
  %v69 = vunpack.c.l.b16 %v29
  %v70 = vunpack.c.l.b16 %v30
  %v71 = vunpack.c.l.b16 %v31
  %v72 = vunpack.c.l.b16 %v32
  %v73 = vunpack.c.l.b16 %v33
  %v74 = vpack.c.b16 %v59, %v58
  %v75 = vpack.c.b16 %v61, %v60
  %v76 = vpack.c.b16 %v63, %v62
  %v77 = vpack.c.b16 %v65, %v64
  %v78 = vpack.c.b16 %v67, %v66
  %v79 = vpack.c.b16 %v69, %v68
  %v80 = vpack.c.b16 %v71, %v70
  %v81 = vpack.c.b16 %v73, %v72
  %v90 = vunpack.c.l.b16 %v34
  %v91 = vunpack.c.l.b16 %v35
  %v92 = vunpack.c.l.b16 %v36
  %v93 = vunpack.c.l.b16 %v37
  %v94 = vunpack.c.l.b16 %v38
  %v95 = vunpack.c.l.b16 %v39
  %v96 = vunpack.c.l.b16 %v40
  %v97 = vunpack.c.l.b16 %v41
  %v98 = vpack.c.b16 %v91, %v90
  %v99 = vpack.c.b16 %v93, %v92
  %v100 = vpack.c.b16 %v95, %v94
  %v101 = vpack.c.b16 %v97, %v96
  %vm106 = vcmask 523264
  %v108 = vsel %vm106, %v74, 0
  %v111 = vsel %vm106, %v75, 0
  %v114 = vsel %vm106, %v76, 0
  %v117 = vsel %vm106, %v77, 0
  %v120 = vsel %vm106, %v78, 0
  %v123 = vsel %vm106, %v79, 0
  %v126 = vsel %vm106, %v80, 0
  %v129 = vsel %vm106, %v81, 0
  %131 = vmatprep.subr.bf16.mxu0 0
  %132 = vmatpush1.bf16.msra.mxu0 %v98
  %133 = vmatprep.subr.bf16.mxu0 0
  %134 = vmatpush1.bf16.msra.mxu0 %v99
  %135 = vmatprep.subr.bf16.mxu0 0
  %136 = vmatpush1.bf16.msra.mxu0 %v100
  %137 = vmatprep.subr.bf16.mxu0 0
  %138 = vmatpush1.bf16.msra.mxu0 %v101
  %139 = vmatprep.subr.bf16.mxu0 0
  %140 = vmatpush1.bf16.msra.mxu0 0
  %141 = vmatprep.subr.bf16.mxu0 0
  %142 = vmatpush1.bf16.msra.mxu0 0
  %143 = vmatprep.subr.bf16.mxu0 0
  %144 = vmatpush1.bf16.msra.mxu0 0
  %145 = vmatprep.subr.bf16.mxu0 0
  %146 = vmatpush1.bf16.msra.mxu0 0
  %147 = vmatprep.subr.bf16.mxu0 0
  %148 = vmatpush1.bf16.msra.mxu0 0
  %149 = vmatprep.subr.bf16.mxu0 0
  %150 = vmatpush1.bf16.msra.mxu0 0
  %151 = vmatprep.subr.bf16.mxu0 0
  %152 = vmatpush1.bf16.msra.mxu0 0
  %153 = vmatprep.subr.bf16.mxu0 0
  %154 = vmatpush1.bf16.msra.mxu0 0
  %155 = vmatprep.subr.bf16.mxu0 0
  %156 = vmatpush1.bf16.msra.mxu0 0
  %157 = vmatprep.subr.bf16.mxu0 0
  %158 = vmatpush1.bf16.msra.mxu0 0
  %159 = vmatprep.subr.bf16.mxu0 0
  %160 = vmatpush1.bf16.msra.mxu0 0
  %161 = vmatprep.subr.bf16.mxu0 0
  %162 = vmatpush1.bf16.msra.mxu0 0
  %163 = vmatprep.mubr.bf16.mxu0 0
  %164 = vmatmul.mubr.bf16.gmra.mrb[0].mxu0 %v108
  %v165 = vpop.f32.mrb[0].mxu0
  %v166 = vadd.f32 0.0, %v165
  %v167 = vpop.f32.mrb[0].mxu0
  %v168 = vpop.f32.mrb[0].mxu0
  %v169 = vadd.f32 0.0, %v168
  %v170 = vpop.f32.mrb[0].mxu0
  %171 = vmatprep.mubr.bf16.mxu0 0
  %172 = vmatmul.mubr.bf16.gmra.mrb[0].mxu0 %v111
  %v173 = vpop.f32.mrb[0].mxu0
  %v174 = vadd.f32 0.0, %v173
  %v175 = vpop.f32.mrb[0].mxu0
  %v176 = vpop.f32.mrb[0].mxu0
  %v177 = vadd.f32 0.0, %v176
  %v178 = vpop.f32.mrb[0].mxu0
  %179 = vmatprep.mubr.bf16.mxu0 0
  %180 = vmatmul.mubr.bf16.gmra.mrb[0].mxu0 %v114
  %v181 = vpop.f32.mrb[0].mxu0
  %v182 = vadd.f32 0.0, %v181
  %v183 = vpop.f32.mrb[0].mxu0
  %v184 = vpop.f32.mrb[0].mxu0
  %v185 = vadd.f32 0.0, %v184
  %v186 = vpop.f32.mrb[0].mxu0
  %187 = vmatprep.mubr.bf16.mxu0 0
  %188 = vmatmul.mubr.bf16.gmra.mrb[0].mxu0 %v117
  %v189 = vpop.f32.mrb[0].mxu0
  %v190 = vadd.f32 0.0, %v189
  %v191 = vpop.f32.mrb[0].mxu0
  %v192 = vpop.f32.mrb[0].mxu0
  %v193 = vadd.f32 0.0, %v192
  %v194 = vpop.f32.mrb[0].mxu0
  %195 = vmatprep.mubr.bf16.mxu0 0
  %196 = vmatmul.mubr.bf16.gmra.mrb[0].mxu0 %v120
  %v197 = vpop.f32.mrb[0].mxu0
  %v198 = vadd.f32 0.0, %v197
  %v199 = vpop.f32.mrb[0].mxu0
  %v200 = vpop.f32.mrb[0].mxu0
  %v201 = vadd.f32 0.0, %v200
  %v202 = vpop.f32.mrb[0].mxu0
  %203 = vmatprep.mubr.bf16.mxu0 0
  %204 = vmatmul.mubr.bf16.gmra.mrb[0].mxu0 %v123
  %v205 = vpop.f32.mrb[0].mxu0
  %v206 = vadd.f32 0.0, %v205
  %v207 = vpop.f32.mrb[0].mxu0
  %v208 = vpop.f32.mrb[0].mxu0
  %v209 = vadd.f32 0.0, %v208
  %v210 = vpop.f32.mrb[0].mxu0
  %211 = vmatprep.mubr.bf16.mxu0 0
  %212 = vmatmul.mubr.bf16.gmra.mrb[0].mxu0 %v126
  %v213 = vpop.f32.mrb[0].mxu0
  %v214 = vadd.f32 0.0, %v213
  %v215 = vpop.f32.mrb[0].mxu0
  %v216 = vpop.f32.mrb[0].mxu0
  %v217 = vadd.f32 0.0, %v216
  %v218 = vpop.f32.mrb[0].mxu0
  %219 = vmatprep.mubr.bf16.mxu0 0
  %220 = vmatmul.mubr.bf16.gmra.mrb[0].mxu0 %v129
  %v221 = vpop.f32.mrb[0].mxu0
  %v222 = vadd.f32 0.0, %v221
  %v223 = vpop.f32.mrb[0].mxu0
  %v224 = vpop.f32.mrb[0].mxu0
  %v225 = vadd.f32 0.0, %v224
  %v226 = vpop.f32.mrb[0].mxu0
  %227 = vdwg.mxu0
  %v228 = vld [vmem:[%s2] sm:$0x1]
  %v230 = vlaneseq
  %v231 = vshrl.u32 %v230, 7
  %v232 = vsub.s32 0, %v231
  %v233 = vrot.slane %v228, %v232
  %v235 = vmul.f32 %v166, %v233
  %v236 = vmul.f32 %v169, %v233
  %v237 = vmul.f32 %v174, %v233
  %v238 = vmul.f32 %v177, %v233
  %v239 = vmul.f32 %v182, %v233
  %v240 = vmul.f32 %v185, %v233
  %v241 = vmul.f32 %v190, %v233
  %v242 = vmul.f32 %v193, %v233
  %v243 = vmul.f32 %v198, %v233
  %v244 = vmul.f32 %v201, %v233
  %v245 = vmul.f32 %v206, %v233
  %v246 = vmul.f32 %v209, %v233
  %v247 = vmul.f32 %v214, %v233
  %v248 = vmul.f32 %v217, %v233
  %v249 = vmul.f32 %v222, %v233
  %v250 = vmul.f32 %v225, %v233
  %v251 = vld [vmem:[%s3] sm:$0x1]
  %v253 = vlaneseq
  %v254 = vshrl.u32 %v253, 7
  %v255 = vsub.s32 0, %v254
  %v256 = vrot.slane %v251, %v255
  %v258 = vadd.f32 %v235, %v256
  %v259 = vadd.f32 %v236, %v256
  %v260 = vadd.f32 %v237, %v256
  %v261 = vadd.f32 %v238, %v256
  %v262 = vadd.f32 %v239, %v256
  %v263 = vadd.f32 %v240, %v256
  %v264 = vadd.f32 %v241, %v256
  %v265 = vadd.f32 %v242, %v256
  %v266 = vadd.f32 %v243, %v256
  %v267 = vadd.f32 %v244, %v256
  %v268 = vadd.f32 %v245, %v256
  %v269 = vadd.f32 %v246, %v256
  %v270 = vadd.f32 %v247, %v256
  %v271 = vadd.f32 %v248, %v256
  %v272 = vadd.f32 %v249, %v256
  %v273 = vadd.f32 %v250, %v256
  %v274 = vmax.f32 %v258, 0.0
  %v275 = vmax.f32 %v259, 0.0
  %v276 = vmax.f32 %v260, 0.0
  %v277 = vmax.f32 %v261, 0.0
  %v278 = vmax.f32 %v262, 0.0
  %v279 = vmax.f32 %v263, 0.0
  %v280 = vmax.f32 %v264, 0.0
  %v281 = vmax.f32 %v265, 0.0
  %v282 = vmax.f32 %v266, 0.0
  %v283 = vmax.f32 %v267, 0.0
  %v284 = vmax.f32 %v268, 0.0
  %v285 = vmax.f32 %v269, 0.0
  %v286 = vmax.f32 %v270, 0.0
  %v287 = vmax.f32 %v271, 0.0
  %v288 = vmax.f32 %v272, 0.0
  %v289 = vmax.f32 %v273, 0.0
  %290 = vst.msk [vmem:[%s4] sm:$0xff] %vm106, %v274
  %291 = vst.msk [vmem:[%s4 + $0x8] sm:$0xff] %vm106, %v275
  %292 = vst.msk [vmem:[%s4 + $0x10] sm:$0xff] %vm106, %v276
  %293 = vst.msk [vmem:[%s4 + $0x18] sm:$0xff] %vm106, %v277
  %294 = vst.msk [vmem:[%s4 + $0x20] sm:$0xff] %vm106, %v278
  %295 = vst.msk [vmem:[%s4 + $0x28] sm:$0xff] %vm106, %v279
  %296 = vst.msk [vmem:[%s4 + $0x30] sm:$0xff] %vm106, %v280
  %297 = vst.msk [vmem:[%s4 + $0x38] sm:$0xff] %vm106, %v281
  %298 = vst.msk [vmem:[%s4 + $0x40] sm:$0xff] %vm106, %v282
  %299 = vst.msk [vmem:[%s4 + $0x48] sm:$0xff] %vm106, %v283
  %300 = vst.msk [vmem:[%s4 + $0x50] sm:$0xff] %vm106, %v284
  %301 = vst.msk [vmem:[%s4 + $0x58] sm:$0xff] %vm106, %v285
  %302 = vst.msk [vmem:[%s4 + $0x60] sm:$0xff] %vm106, %v286
  %303 = vst.msk [vmem:[%s4 + $0x68] sm:$0xff] %vm106, %v287
  %304 = vst.msk [vmem:[%s4 + $0x70] sm:$0xff] %vm106, %v288
  %305 = vst.msk [vmem:[%s4 + $0x78] sm:$0xff] %vm106, %v289
  // Predicated region
  $region18: #{covidx_forward.5} parent=0 // pred_check
    _
  $region19: #{covidx_forward.5} parent=0 // pred_check_branch
    %307 = sbr.rel (0) target = $region21
  $region20: #{covidx_forward.5} parent=0 // pred_region
    _
  $region21: #{covidx_forward.5} parent=0 // pred_fallthru
    _
  // Predicated region
  $region22: #{covidx_forward.5} parent=0 // pred_check
    _
  $region23: #{covidx_forward.5} parent=0 // pred_check_branch
    %309 = sbr.rel (0) target = $region25
  $region24: #{covidx_forward.5} parent=0 // pred_region
    _
  $region25: #{covidx_forward.5} parent=0 // pred_fallthru
    _

// kernel: covidx_forward.6
$region0: #{covidx_forward.6}
  #allocation0 [shape = 'u32[]', space=smem, size = 0x4, offset = 0x4, fixed_abs, tag = 'smem constant byte address 0x4 - core index']
  #allocation1 [shape = 'u32[144,128]{1,0:T(1,128)}', space=vmem, size = 0x12000, scoped, tag = 'internal scratch']
  %s0 = inlined_call_operand.vmem [shape: f32[32,64], index: 0, kind: input, shape index: {}]
  %s1 = inlined_call_operand.vmem [shape: f32[32,64], index: 1, kind: input, shape index: {}]
  %s2 = inlined_call_operand.vmem [shape: f32[32,64], index: 2, kind: input, shape index: {}]
  %s3 = inlined_call_operand.vmem [shape: f32[32,64], index: 3, kind: input, shape index: {}]
  %s4 = inlined_call_operand.vmem [shape: f32[32,64], index: 4, kind: input, shape index: {}]
  %s5 = inlined_call_operand.vmem [shape: f32[32,64], index: 5, kind: input, shape index: {}]
  %s6 = inlined_call_operand.vmem [shape: f32[32,64], index: 6, kind: input, shape index: {}]
  %s7 = inlined_call_operand.vmem [shape: f32[32,64], index: 7, kind: input, shape index: {}]
  %s8 = inlined_call_operand.vmem [shape: f32[32,64], index: 8, kind: input, shape index: {}]
  %s9 = inlined_call_operand.vmem [shape: f32[32,64], index: 9, kind: output, shape index: {}]
  %s10 = sld [smem:[#allocation0]]
  $region46: #{covidx_forward.6} parent=0
    _
  %s12 = ssub.s32 1, %s10
  %s13 = scalar_select 0, %s12, %s10
  // Predicated region
  $region2: #{covidx_forward.6} parent=0 // pred_check
    _
  $region3: #{covidx_forward.6} parent=0 // pred_check_branch
    %15 = sbr.rel (0) target = $region5
  $region4: #{covidx_forward.6} parent=0 // pred_region
    _
  $region5: #{covidx_forward.6} parent=0 // pred_fallthru
    _
  // Predicated region
  $region6: #{covidx_forward.6} parent=0 // pred_check
    _
  $region7: #{covidx_forward.6} parent=0 // pred_check_branch
    %17 = sbr.rel (0) target = $region9
  $region8: #{covidx_forward.6} parent=0 // pred_region
    _
  $region9: #{covidx_forward.6} parent=0 // pred_fallthru
    _
  // Predicated region
  $region10: #{covidx_forward.6} parent=0 // pred_check
    _
  $region11: #{covidx_forward.6} parent=0 // pred_check_branch
    %19 = sbr.rel (0) target = $region13
  $region12: #{covidx_forward.6} parent=0 // pred_region
    _
  $region13: #{covidx_forward.6} parent=0 // pred_fallthru
    _
  // Predicated region
  $region14: #{covidx_forward.6} parent=0 // pred_check
    _
  $region15: #{covidx_forward.6} parent=0 // pred_check_branch
    %21 = sbr.rel (0) target = $region17
  $region16: #{covidx_forward.6} parent=0 // pred_region
    _
  $region17: #{covidx_forward.6} parent=0 // pred_fallthru
    _
  // Predicated region
  $region18: #{covidx_forward.6} parent=0 // pred_check
    _
  $region19: #{covidx_forward.6} parent=0 // pred_check_branch
    %23 = sbr.rel (0) target = $region21
  $region20: #{covidx_forward.6} parent=0 // pred_region
    _
  $region21: #{covidx_forward.6} parent=0 // pred_fallthru
    _
  // Predicated region
  $region22: #{covidx_forward.6} parent=0 // pred_check
    _
  $region23: #{covidx_forward.6} parent=0 // pred_check_branch
    %25 = sbr.rel (0) target = $region25
  $region24: #{covidx_forward.6} parent=0 // pred_region
    _
  $region25: #{covidx_forward.6} parent=0 // pred_fallthru
    _
  // Predicated region
  $region26: #{covidx_forward.6} parent=0 // pred_check
    _
  $region27: #{covidx_forward.6} parent=0 // pred_check_branch
    %27 = sbr.rel (0) target = $region29
  $region28: #{covidx_forward.6} parent=0 // pred_region
    _
  $region29: #{covidx_forward.6} parent=0 // pred_fallthru
    _
  // Predicated region
  $region30: #{covidx_forward.6} parent=0 // pred_check
    _
  $region31: #{covidx_forward.6} parent=0 // pred_check_branch
    %29 = sbr.rel (0) target = $region33
  $region32: #{covidx_forward.6} parent=0 // pred_region
    _
  $region33: #{covidx_forward.6} parent=0 // pred_fallthru
    _
  // Predicated region
  $region34: #{covidx_forward.6} parent=0 // pred_check
    _
  $region35: #{covidx_forward.6} parent=0 // pred_check_branch
    %31 = sbr.rel (0) target = $region37
  $region36: #{covidx_forward.6} parent=0 // pred_region
    _
  $region37: #{covidx_forward.6} parent=0 // pred_fallthru
    _
  %v32 = vld [vmem:[%s0] sm:$0xff]
  %v33 = vld [vmem:[%s0 + $0x8] sm:$0xff]
  %v34 = vld [vmem:[%s0 + $0x10] sm:$0xff]
  %v35 = vld [vmem:[%s0 + $0x18] sm:$0xff]
  %v36 = vld [vmem:[%s1] sm:$0xff]
  %v37 = vld [vmem:[%s1 + $0x8] sm:$0xff]
  %v38 = vld [vmem:[%s1 + $0x10] sm:$0xff]
  %v39 = vld [vmem:[%s1 + $0x18] sm:$0xff]
  %v40 = vmax.f32 %v32, %v36
  %v41 = vmax.f32 %v33, %v37
  %v42 = vmax.f32 %v34, %v38
  %v43 = vmax.f32 %v35, %v39
  %v44 = vld [vmem:[%s2] sm:$0xff]
  %v45 = vld [vmem:[%s2 + $0x8] sm:$0xff]
  %v46 = vld [vmem:[%s2 + $0x10] sm:$0xff]
  %v47 = vld [vmem:[%s2 + $0x18] sm:$0xff]
  %v48 = vmax.f32 %v40, %v44
  %v49 = vmax.f32 %v41, %v45
  %v50 = vmax.f32 %v42, %v46
  %v51 = vmax.f32 %v43, %v47
  %v52 = vld [vmem:[%s3] sm:$0xff]
  %v53 = vld [vmem:[%s3 + $0x8] sm:$0xff]
  %v54 = vld [vmem:[%s3 + $0x10] sm:$0xff]
  %v55 = vld [vmem:[%s3 + $0x18] sm:$0xff]
  %v56 = vmax.f32 %v48, %v52
  %v57 = vmax.f32 %v49, %v53
  %v58 = vmax.f32 %v50, %v54
  %v59 = vmax.f32 %v51, %v55
  %v60 = vld [vmem:[%s4] sm:$0xff]
  %v61 = vld [vmem:[%s4 + $0x8] sm:$0xff]
  %v62 = vld [vmem:[%s4 + $0x10] sm:$0xff]
  %v63 = vld [vmem:[%s4 + $0x18] sm:$0xff]
  %v64 = vmax.f32 %v56, %v60
  %v65 = vmax.f32 %v57, %v61
  %v66 = vmax.f32 %v58, %v62
  %v67 = vmax.f32 %v59, %v63
  %v68 = vld [vmem:[%s5] sm:$0xff]
  %v69 = vld [vmem:[%s5 + $0x8] sm:$0xff]
  %v70 = vld [vmem:[%s5 + $0x10] sm:$0xff]
  %v71 = vld [vmem:[%s5 + $0x18] sm:$0xff]
  %v72 = vmax.f32 %v64, %v68
  %v73 = vmax.f32 %v65, %v69
  %v74 = vmax.f32 %v66, %v70
  %v75 = vmax.f32 %v67, %v71
  %v76 = vld [vmem:[%s6] sm:$0xff]
  %v77 = vld [vmem:[%s6 + $0x8] sm:$0xff]
  %v78 = vld [vmem:[%s6 + $0x10] sm:$0xff]
  %v79 = vld [vmem:[%s6 + $0x18] sm:$0xff]
  %v80 = vmax.f32 %v72, %v76
  %v81 = vmax.f32 %v73, %v77
  %v82 = vmax.f32 %v74, %v78
  %v83 = vmax.f32 %v75, %v79
  %v84 = vld [vmem:[%s7] sm:$0xff]
  %v85 = vld [vmem:[%s7 + $0x8] sm:$0xff]
  %v86 = vld [vmem:[%s7 + $0x10] sm:$0xff]
  %v87 = vld [vmem:[%s7 + $0x18] sm:$0xff]
  %v88 = vmax.f32 %v80, %v84
  %v89 = vmax.f32 %v81, %v85
  %v90 = vmax.f32 %v82, %v86
  %v91 = vmax.f32 %v83, %v87
  %v92 = vld [vmem:[%s8] sm:$0xff]
  %v93 = vld [vmem:[%s8 + $0x8] sm:$0xff]
  %v94 = vld [vmem:[%s8 + $0x10] sm:$0xff]
  %v95 = vld [vmem:[%s8 + $0x18] sm:$0xff]
  %v96 = vmax.f32 %v88, %v92
  %v97 = vmax.f32 %v89, %v93
  %v98 = vmax.f32 %v90, %v94
  %v99 = vmax.f32 %v91, %v95
  %vm100 = vcmask 523264
  %101 = vst.msk [vmem:[%s9] sm:$0xff] %vm100, %v96
  %102 = vst.msk [vmem:[%s9 + $0x8] sm:$0xff] %vm100, %v97
  %103 = vst.msk [vmem:[%s9 + $0x10] sm:$0xff] %vm100, %v98
  %104 = vst.msk [vmem:[%s9 + $0x18] sm:$0xff] %vm100, %v99
  // Predicated region
  $region38: #{covidx_forward.6} parent=0 // pred_check
    _
  $region39: #{covidx_forward.6} parent=0 // pred_check_branch
    %106 = sbr.rel (0) target = $region41
  $region40: #{covidx_forward.6} parent=0 // pred_region
    _
  $region41: #{covidx_forward.6} parent=0 // pred_fallthru
    _
  // Predicated region
  $region42: #{covidx_forward.6} parent=0 // pred_check
    _
  $region43: #{covidx_forward.6} parent=0 // pred_check_branch
    %108 = sbr.rel (0) target = $region45
  $region44: #{covidx_forward.6} parent=0 // pred_region
    _
  $region45: #{covidx_forward.6} parent=0 // pred_fallthru
    _

// kernel: covidx_forward.7
$region0: #{covidx_forward.7}
  #allocation0 [shape = 'u32[]', space=smem, size = 0x4, offset = 0x4, fixed_abs, tag = 'smem constant byte address 0x4 - core index']
  #allocation1 [shape = 'u32[144,128]{1,0:T(1,128)}', space=vmem, size = 0x12000, scoped, tag = 'internal scratch']
  %s0 = inlined_call_operand.vmem [shape: f32[2,64,64], index: 0, kind: input, shape index: {}]
  %s1 = inlined_call_operand.vmem [shape: bf16[9,64,64], index: 1, kind: input, shape index: {}]
  %s2 = inlined_call_operand.vmem [shape: f32[1,64], index: 2, kind: input, shape index: {}]
  %s3 = inlined_call_operand.vmem [shape: f32[1,64], index: 3, kind: input, shape index: {}]
  %s4 = inlined_call_operand.vmem [shape: f32[2,32,64], index: 4, kind: output, shape index: {}]
  %s5 = sld [smem:[#allocation0]]
  $region49: #{covidx_forward.7} parent=0
    _
  %s7 = ssub.s32 1, %s5
  %s8 = scalar_select 0, %s7, %s5
  loop: start=0, step=1, limit=4
  $region2: #{covidx_forward.7} parent=0 // loop_pre_header
    _
  $region3: #{covidx_forward.7} parent=0 // loop_header
    %s10 = sphi 0, %s14
    %p11 = scmp.ge.s32.totalorder %s10, 4
    %s20 = sphi 0, %s22
    %s23 = sphi 0, %s20
    %s24 = sphi 0, %s23
    %s40 = sphi 0, %s24
    %s44 = sphi 0, %s44
    %s46 = sphi 0, %s44
    %s47 = sphi 0, %s46
    %s61 = sphi 0, %s47
    %s65 = sphi 0, %s65
    %s67 = sphi 0, %s65
    %s68 = sphi 0, %s67
    %s82 = sphi 0, %s68
    %s86 = sphi 0, %s86
    %s88 = sphi 0, %s86
    %s89 = sphi 0, %s88
    %s103 = sphi 0, %s89
    %s109 = sphi 0, %s111
    %s112 = sphi 0, %s109
    %s113 = sphi 0, %s112
    %s129 = sphi 0, %s113
  $region4: #{covidx_forward.7} parent=0 // loop_header_branch
    %13 = sbr.rel (%p11) target = $region8
  $region5: #{covidx_forward.7} parent=0 // loop_body
    %s15 = ssub.s32 %s10, 1
    %s16 = ssub.s32 %s10, 2
    %s17 = sadd.s32 %s10, 1
    %s18 = ssub.s32 %s10, %s17
    %p19 = scmp.eq.s32.totalorder %s18, 0
    %s21 = sadd.s32 %s20, 1
    %s22 = scalar_select %p19, %s20, %s21
    %p25 = pneg %p19
    %p26 = scmp.eq.s32.totalorder %s10, 1
    %p27 = por %p25, %p26
    %p28 = scmp.ne.s32.totalorder %s20, %s23
    %p29 = scmp.eq.s32.totalorder %s10, 0
    %p30 = por %p28, %p29
    %p31 = scmp.ne.s32.totalorder %s20, %s23
    %p32 = scmp.eq.s32.totalorder %s15, 1
    %p33 = por %p31, %p32
    %p34 = scmp.ne.s32.totalorder %s23, %s24
    %p35 = scmp.eq.s32.totalorder %s15, 0
    %p36 = por %p34, %p35
    %p37 = scmp.ne.s32.totalorder %s23, %s24
    %p38 = scmp.eq.s32.totalorder %s16, 1
    %p39 = por %p37, %p38
    %p41 = scmp.ne.s32.totalorder %s24, %s40
    %p42 = scmp.eq.s32.totalorder %s16, 0
    %p43 = por %p41, %p42
    %s45 = sadd.s32 %s44, 1
    %p48 = scmp.eq.s32.totalorder %s10, 1
    %p49 = scmp.ne.s32.totalorder %s44, %s46
    %p50 = scmp.eq.s32.totalorder %s10, 0
    %p51 = por %p49, %p50
    %p52 = scmp.ne.s32.totalorder %s44, %s46
    %p53 = scmp.eq.s32.totalorder %s15, 1
    %p54 = por %p52, %p53
    %p55 = scmp.ne.s32.totalorder %s46, %s47
    %p56 = scmp.eq.s32.totalorder %s15, 0
    %p57 = por %p55, %p56
    %p58 = scmp.ne.s32.totalorder %s46, %s47
    %p59 = scmp.eq.s32.totalorder %s16, 1
    %p60 = por %p58, %p59
    %p62 = scmp.ne.s32.totalorder %s47, %s61
    %p63 = scmp.eq.s32.totalorder %s16, 0
    %p64 = por %p62, %p63
    %s66 = sadd.s32 %s65, 1
    %p69 = scmp.eq.s32.totalorder %s10, 1
    %p70 = scmp.ne.s32.totalorder %s65, %s67
    %p71 = scmp.eq.s32.totalorder %s10, 0
    %p72 = por %p70, %p71
    %p73 = scmp.ne.s32.totalorder %s65, %s67
    %p74 = scmp.eq.s32.totalorder %s15, 1
    %p75 = por %p73, %p74
    %p76 = scmp.ne.s32.totalorder %s67, %s68
    %p77 = scmp.eq.s32.totalorder %s15, 0
    %p78 = por %p76, %p77
    %p79 = scmp.ne.s32.totalorder %s67, %s68
    %p80 = scmp.eq.s32.totalorder %s16, 1
    %p81 = por %p79, %p80
    %p83 = scmp.ne.s32.totalorder %s68, %s82
    %p84 = scmp.eq.s32.totalorder %s16, 0
    %p85 = por %p83, %p84
    %s87 = sadd.s32 %s86, 1
    %p90 = scmp.eq.s32.totalorder %s10, 1
    %p91 = scmp.ne.s32.totalorder %s86, %s88
    %p92 = scmp.eq.s32.totalorder %s10, 0
    %p93 = por %p91, %p92
    %p94 = scmp.ne.s32.totalorder %s86, %s88
    %p95 = scmp.eq.s32.totalorder %s15, 1
    %p96 = por %p94, %p95
    %p97 = scmp.ne.s32.totalorder %s88, %s89
    %p98 = scmp.eq.s32.totalorder %s15, 0
    %p99 = por %p97, %p98
    %p100 = scmp.ne.s32.totalorder %s88, %s89
    %p101 = scmp.eq.s32.totalorder %s16, 1
    %p102 = por %p100, %p101
    %p104 = scmp.ne.s32.totalorder %s89, %s103
    %p105 = scmp.eq.s32.totalorder %s16, 0
    %p106 = por %p104, %p105
    %s107 = ssub.s32 %s10, %s17
    %p108 = scmp.eq.s32.totalorder %s107, 0
    %s110 = sadd.s32 %s109, 1
    %s111 = scalar_select %p108, %s109, %s110
    %p114 = pneg %p108
    %p115 = scmp.eq.s32.totalorder %s10, 1
    %p116 = por %p114, %p115
    %p117 = scmp.ne.s32.totalorder %s109, %s112
    %p118 = scmp.eq.s32.totalorder %s10, 0
    %p119 = por %p117, %p118
    %p120 = scmp.ne.s32.totalorder %s109, %s112
    %p121 = scmp.eq.s32.totalorder %s15, 1
    %p122 = por %p120, %p121
    %p123 = scmp.ne.s32.totalorder %s112, %s113
    %p124 = scmp.eq.s32.totalorder %s15, 0
    %p125 = por %p123, %p124
    %p126 = scmp.ne.s32.totalorder %s112, %s113
    %p127 = scmp.eq.s32.totalorder %s16, 1
    %p128 = por %p126, %p127
    %p130 = scmp.ne.s32.totalorder %s113, %s129
    %p131 = scmp.eq.s32.totalorder %s16, 0
    %p132 = por %p130, %p131
    %p133 = scmp.le.s32.totalorder 1, %s10
    %p134 = scmp.lt.s32.totalorder %s10, 3
    %p135 = pnand %p133, %p134
    %p136 = pneg %p135
    // Predicated region
    $region9: #{covidx_forward.7} parent=5 // pred_check
      _
    $region10: #{covidx_forward.7} parent=5 // pred_check_branch
      %138 = sbr.rel (%p135) target = $region12
    $region11: #{covidx_forward.7} parent=5 // pred_region
      %s139 = ssub.s32 %s10, 1
      // Predicated region
      $region13: #{covidx_forward.7} parent=11 // pred_check
        %p140 = pneg %p57
      $region14: #{covidx_forward.7} parent=11 // pred_check_branch
        %142 = sbr.rel (%p140) target = $region16
      $region15: #{covidx_forward.7} parent=11 // pred_region
        _
      $region16: #{covidx_forward.7} parent=11 // pred_fallthru
        _
      // Predicated region
      $region17: #{covidx_forward.7} parent=11 // pred_check
        %p143 = pneg %p78
      $region18: #{covidx_forward.7} parent=11 // pred_check_branch
        %145 = sbr.rel (%p143) target = $region20
      $region19: #{covidx_forward.7} parent=11 // pred_region
        _
      $region20: #{covidx_forward.7} parent=11 // pred_fallthru
        _
      // Predicated region
      $region21: #{covidx_forward.7} parent=11 // pred_check
        %p146 = pneg %p99
      $region22: #{covidx_forward.7} parent=11 // pred_check_branch
        %148 = sbr.rel (%p146) target = $region24
      $region23: #{covidx_forward.7} parent=11 // pred_region
        _
      $region24: #{covidx_forward.7} parent=11 // pred_fallthru
        _
    $region12: #{covidx_forward.7} parent=5 // pred_fallthru
      _
    %p149 = scmp.lt.s32.totalorder %s10, 2
    // Predicated region
    $region25: #{covidx_forward.7} parent=5 // pred_check
      %p150 = pneg %p149
    $region26: #{covidx_forward.7} parent=5 // pred_check_branch
      %152 = sbr.rel (%p150) target = $region28
    $region27: #{covidx_forward.7} parent=5 // pred_region
      // Predicated region
      $region29: #{covidx_forward.7} parent=27 // pred_check
        %p153 = pneg %p30
      $region30: #{covidx_forward.7} parent=27 // pred_check_branch
        %155 = sbr.rel (%p153) target = $region32
      $region31: #{covidx_forward.7} parent=27 // pred_region
        %p156 = scmp.lt.s32.totalorder %s10, 1
        %s157 = scalar_select %p156, %s10, 1
        %s158 = smul.addr %s157, 8
        %s159 = smul.addr %s158, 8
        %s160 = scalar_lea.vmem %s0, %s159
      $region32: #{covidx_forward.7} parent=27 // pred_fallthru
        _
    $region28: #{covidx_forward.7} parent=5 // pred_fallthru
      _
    %p161 = scmp.le.s32.totalorder 1, %s10
    %p162 = scmp.lt.s32.totalorder %s10, 3
    %p163 = pnand %p161, %p162
    %p164 = pneg %p163
    // Predicated region
    $region33: #{covidx_forward.7} parent=5 // pred_check
      _
    $region34: #{covidx_forward.7} parent=5 // pred_check_branch
      %166 = sbr.rel (%p163) target = $region36
    $region35: #{covidx_forward.7} parent=5 // pred_region
      %s167 = ssub.s32 %s10, 1
      %p168 = scmp.lt.s32.totalorder %s15, 1
      %s169 = scalar_select %p168, %s15, 1
      %s170 = smul.addr %s169, 8
      %s171 = smul.addr %s170, 8
      %s172 = scalar_lea.vmem %s0, %s171
      %p173 = pneg %p36
      %p174 = pneg %p33
      %p175 = pneg %p57
      %p176 = pneg %p54
      %p177 = pneg %p78
      %p178 = pneg %p75
      %p179 = pneg %p99
      %p180 = pneg %p96
      %p181 = pneg %p125
      %p182 = pneg %p122
      %p183 = scmp.lt.s32.totalorder %s15, 1
      %s184 = scalar_select %p183, %s15, 1
      %s185 = smul.addr %s184, 4
      %s186 = smul.addr %s185, 8
      %s187 = scalar_lea.vmem %s4, %s186
      %p188 = scmp.lt.s32.totalorder %s15, 1
      %s189 = scalar_select %p188, %s15, 1
      %s190 = smul.addr %s189, 8
      %s191 = smul.addr %s190, 8
      %s192 = scalar_lea.vmem %s0, %s191
      %p193 = scmp.lt.s32.totalorder %s15, 1
      %s194 = scalar_select %p193, %s15, 1
      %s195 = smul.addr %s194, 4
      %s196 = smul.addr %s195, 8
      %s197 = scalar_lea.vmem %s4, %s196
      %v199 = vld [vmem:[%s192 + $0x8] sm:$0xff]
      %v200 = vld [vmem:[%s192 + $0x10] sm:$0xff]
      %v201 = vld [vmem:[%s192 + $0x18] sm:$0xff]
      %v202 = vld [vmem:[%s192 + $0x20] sm:$0xff]
      %v203 = vpack.c.bf16 %v200, %v199
      %v204 = vpack.c.bf16 %v202, %v201
      %v205 = vld [vmem:[%s1] sm:$0xf]
      %v206 = vld [vmem:[%s1 + $0x4] sm:$0xf]
      %v207 = vld [vmem:[%s1 + $0x8] sm:$0xf]
      %v208 = vld [vmem:[%s1 + $0xc] sm:$0xf]
      %v209 = vld [vmem:[%s1 + $0x10] sm:$0xf]
      %v210 = vld [vmem:[%s1 + $0x14] sm:$0xf]
      %v211 = vld [vmem:[%s1 + $0x18] sm:$0xf]
      %v212 = vld [vmem:[%s1 + $0x1c] sm:$0xf]
      %v221 = vunpack.c.l.b16 %v205
      %v222 = vunpack.c.l.b16 %v206
      %v223 = vunpack.c.l.b16 %v207
      %v224 = vunpack.c.l.b16 %v208
      %v225 = vunpack.c.l.b16 %v209
      %v226 = vunpack.c.l.b16 %v210
      %v227 = vunpack.c.l.b16 %v211
      %v228 = vunpack.c.l.b16 %v212
      %v229 = vpack.c.b16 %v222, %v221
      %v230 = vpack.c.b16 %v224, %v223
      %v231 = vpack.c.b16 %v226, %v225
      %v232 = vpack.c.b16 %v228, %v227
      %vm237 = vcmask 523264
      %v239 = vsel %vm237, %v203, 0
      %v242 = vsel %vm237, %v204, 0
      %244 = vmatprep.subr.bf16.mxu0 0
      %245 = vmatpush1.bf16.msra.mxu0 %v229
      %246 = vmatprep.subr.bf16.mxu0 0
      %247 = vmatpush1.bf16.msra.mxu0 %v230
      %248 = vmatprep.subr.bf16.mxu0 0
      %249 = vmatpush1.bf16.msra.mxu0 %v231
      %250 = vmatprep.subr.bf16.mxu0 0
      %251 = vmatpush1.bf16.msra.mxu0 %v232
      %252 = vmatprep.subr.bf16.mxu0 0
      %253 = vmatpush1.bf16.msra.mxu0 0
      %254 = vmatprep.subr.bf16.mxu0 0
      %255 = vmatpush1.bf16.msra.mxu0 0
      %256 = vmatprep.subr.bf16.mxu0 0
      %257 = vmatpush1.bf16.msra.mxu0 0
      %258 = vmatprep.subr.bf16.mxu0 0
      %259 = vmatpush1.bf16.msra.mxu0 0
      %260 = vmatprep.subr.bf16.mxu0 0
      %261 = vmatpush1.bf16.msra.mxu0 0
      %262 = vmatprep.subr.bf16.mxu0 0
      %263 = vmatpush1.bf16.msra.mxu0 0
      %264 = vmatprep.subr.bf16.mxu0 0
      %265 = vmatpush1.bf16.msra.mxu0 0
      %266 = vmatprep.subr.bf16.mxu0 0
      %267 = vmatpush1.bf16.msra.mxu0 0
      %268 = vmatprep.subr.bf16.mxu0 0
      %269 = vmatpush1.bf16.msra.mxu0 0
      %270 = vmatprep.subr.bf16.mxu0 0
      %271 = vmatpush1.bf16.msra.mxu0 0
      %272 = vmatprep.subr.bf16.mxu0 0
      %273 = vmatpush1.bf16.msra.mxu0 0
      %274 = vmatprep.subr.bf16.mxu0 0
      %275 = vmatpush1.bf16.msra.mxu0 0
      %276 = vmatprep.mubr.bf16.mxu0 0
      %277 = vmatmul.mubr.bf16.gmra.mrb[0].mxu0 %v239
      %v278 = vpop.f32.mrb[0].mxu0
      %v279 = vadd.f32 0.0, %v278
      %v280 = vpop.f32.mrb[0].mxu0
      %v281 = vpop.f32.mrb[0].mxu0
      %v282 = vadd.f32 0.0, %v281
      %v283 = vpop.f32.mrb[0].mxu0
      %284 = vmatprep.mubr.bf16.mxu0 0
      %285 = vmatmul.mubr.bf16.gmra.mrb[0].mxu0 %v242
      %v286 = vpop.f32.mrb[0].mxu0
      %v287 = vadd.f32 0.0, %v286
      %v288 = vpop.f32.mrb[0].mxu0
      %v289 = vpop.f32.mrb[0].mxu0
      %v290 = vadd.f32 0.0, %v289
      %v291 = vpop.f32.mrb[0].mxu0
      %292 = vdwg.mxu0
      %293 = vst.msk [vmem:[%s197] sm:$0xff] %vm237, %v279
      %294 = vst.msk [vmem:[%s197 + $0x8] sm:$0xff] %vm237, %v282
      %295 = vst.msk [vmem:[%s197 + $0x10] sm:$0xff] %vm237, %v287
      %296 = vst.msk [vmem:[%s197 + $0x18] sm:$0xff] %vm237, %v290
      %v297 = vld [vmem:[%s197] sm:$0xff]
      %v298 = vld [vmem:[%s197 + $0x8] sm:$0xff]
      %v299 = vld [vmem:[%s197 + $0x10] sm:$0xff]
      %v300 = vld [vmem:[%s197 + $0x18] sm:$0xff]
      %v301 = vld [vmem:[%s192 + $0x9] sm:$0xff]
      %v302 = vld [vmem:[%s192 + $0x11] sm:$0xff]
      %v303 = vld [vmem:[%s192 + $0x19] sm:$0xff]
      %v304 = vld [vmem:[%s192 + $0x21] sm:$0xff]
      %v305 = vpack.c.bf16 %v302, %v301
      %v306 = vpack.c.bf16 %v304, %v303
      %s307 = scalar_lea.vmem %s1, 32
      %v308 = vld [vmem:[%s307] sm:$0xf]
      %v309 = vld [vmem:[%s307 + $0x4] sm:$0xf]
      %v310 = vld [vmem:[%s307 + $0x8] sm:$0xf]
      %v311 = vld [vmem:[%s307 + $0xc] sm:$0xf]
      %v312 = vld [vmem:[%s307 + $0x10] sm:$0xf]
      %v313 = vld [vmem:[%s307 + $0x14] sm:$0xf]
      %v314 = vld [vmem:[%s307 + $0x18] sm:$0xf]
      %v315 = vld [vmem:[%s307 + $0x1c] sm:$0xf]
      %v324 = vunpack.c.l.b16 %v308
      %v325 = vunpack.c.l.b16 %v309
      %v326 = vunpack.c.l.b16 %v310
      %v327 = vunpack.c.l.b16 %v311
      %v328 = vunpack.c.l.b16 %v312
      %v329 = vunpack.c.l.b16 %v313
      %v330 = vunpack.c.l.b16 %v314
      %v331 = vunpack.c.l.b16 %v315
      %v332 = vpack.c.b16 %v325, %v324
      %v333 = vpack.c.b16 %v327, %v326
      %v334 = vpack.c.b16 %v329, %v328
      %v335 = vpack.c.b16 %v331, %v330
      %v341 = vsel %vm237, %v305, 0
      %v344 = vsel %vm237, %v306, 0
      %346 = vmatprep.subr.bf16.mxu0 0
      %347 = vmatpush1.bf16.msra.mxu0 %v332
      %348 = vmatprep.subr.bf16.mxu0 0
      %349 = vmatpush1.bf16.msra.mxu0 %v333
      %350 = vmatprep.subr.bf16.mxu0 0
      %351 = vmatpush1.bf16.msra.mxu0 %v334
      %352 = vmatprep.subr.bf16.mxu0 0
      %353 = vmatpush1.bf16.msra.mxu0 %v335
      %354 = vmatprep.subr.bf16.mxu0 0
      %355 = vmatpush1.bf16.msra.mxu0 0
      %356 = vmatprep.subr.bf16.mxu0 0
      %357 = vmatpush1.bf16.msra.mxu0 0
      %358 = vmatprep.subr.bf16.mxu0 0
      %359 = vmatpush1.bf16.msra.mxu0 0
      %360 = vmatprep.subr.bf16.mxu0 0
      %361 = vmatpush1.bf16.msra.mxu0 0
      %362 = vmatprep.subr.bf16.mxu0 0
      %363 = vmatpush1.bf16.msra.mxu0 0
      %364 = vmatprep.subr.bf16.mxu0 0
      %365 = vmatpush1.bf16.msra.mxu0 0
      %366 = vmatprep.subr.bf16.mxu0 0
      %367 = vmatpush1.bf16.msra.mxu0 0
      %368 = vmatprep.subr.bf16.mxu0 0
      %369 = vmatpush1.bf16.msra.mxu0 0
      %370 = vmatprep.subr.bf16.mxu0 0
      %371 = vmatpush1.bf16.msra.mxu0 0
      %372 = vmatprep.subr.bf16.mxu0 0
      %373 = vmatpush1.bf16.msra.mxu0 0
      %374 = vmatprep.subr.bf16.mxu0 0
      %375 = vmatpush1.bf16.msra.mxu0 0
      %376 = vmatprep.subr.bf16.mxu0 0
      %377 = vmatpush1.bf16.msra.mxu0 0
      %378 = vmatprep.mubr.bf16.mxu0 0
      %379 = vmatmul.mubr.bf16.gmra.mrb[0].mxu0 %v341
      %v380 = vpop.f32.mrb[0].mxu0
      %v381 = vadd.f32 0.0, %v380
      %v382 = vpop.f32.mrb[0].mxu0
      %v383 = vpop.f32.mrb[0].mxu0
      %v384 = vadd.f32 0.0, %v383
      %v385 = vpop.f32.mrb[0].mxu0
      %386 = vmatprep.mubr.bf16.mxu0 0
      %387 = vmatmul.mubr.bf16.gmra.mrb[0].mxu0 %v344
      %v388 = vpop.f32.mrb[0].mxu0
      %v389 = vadd.f32 0.0, %v388
      %v390 = vpop.f32.mrb[0].mxu0
      %v391 = vpop.f32.mrb[0].mxu0
      %v392 = vadd.f32 0.0, %v391
      %v393 = vpop.f32.mrb[0].mxu0
      %394 = vdwg.mxu0
      %v395 = vadd.f32 %v297, %v381
      %v396 = vadd.f32 %v298, %v384
      %v397 = vadd.f32 %v299, %v389
      %v398 = vadd.f32 %v300, %v392
      %399 = vst.msk [vmem:[%s197] sm:$0xff] %vm237, %v395
      %400 = vst.msk [vmem:[%s197 + $0x8] sm:$0xff] %vm237, %v396
      %401 = vst.msk [vmem:[%s197 + $0x10] sm:$0xff] %vm237, %v397
      %402 = vst.msk [vmem:[%s197 + $0x18] sm:$0xff] %vm237, %v398
      %v403 = vld [vmem:[%s197] sm:$0xff]
      %v404 = vld [vmem:[%s197 + $0x8] sm:$0xff]
      %v405 = vld [vmem:[%s197 + $0x10] sm:$0xff]
      %v406 = vld [vmem:[%s197 + $0x18] sm:$0xff]
      %v407 = vld [vmem:[%s192 + $0xa] sm:$0xff]
      %v408 = vld [vmem:[%s192 + $0x12] sm:$0xff]
      %v409 = vld [vmem:[%s192 + $0x1a] sm:$0xff]
      %v410 = vld [vmem:[%s192 + $0x22] sm:$0xff]
      %v411 = vpack.c.bf16 %v408, %v407
      %v412 = vpack.c.bf16 %v410, %v409
      %s413 = scalar_lea.vmem %s1, 64
      %v414 = vld [vmem:[%s413] sm:$0xf]
      %v415 = vld [vmem:[%s413 + $0x4] sm:$0xf]
      %v416 = vld [vmem:[%s413 + $0x8] sm:$0xf]
      %v417 = vld [vmem:[%s413 + $0xc] sm:$0xf]
      %v418 = vld [vmem:[%s413 + $0x10] sm:$0xf]
      %v419 = vld [vmem:[%s413 + $0x14] sm:$0xf]
      %v420 = vld [vmem:[%s413 + $0x18] sm:$0xf]
      %v421 = vld [vmem:[%s413 + $0x1c] sm:$0xf]
      %v430 = vunpack.c.l.b16 %v414
      %v431 = vunpack.c.l.b16 %v415
      %v432 = vunpack.c.l.b16 %v416
      %v433 = vunpack.c.l.b16 %v417
      %v434 = vunpack.c.l.b16 %v418
      %v435 = vunpack.c.l.b16 %v419
      %v436 = vunpack.c.l.b16 %v420
      %v437 = vunpack.c.l.b16 %v421
      %v438 = vpack.c.b16 %v431, %v430
      %v439 = vpack.c.b16 %v433, %v432
      %v440 = vpack.c.b16 %v435, %v434
      %v441 = vpack.c.b16 %v437, %v436
      %v447 = vsel %vm237, %v411, 0
      %v450 = vsel %vm237, %v412, 0
      %452 = vmatprep.subr.bf16.mxu0 0
      %453 = vmatpush1.bf16.msra.mxu0 %v438
      %454 = vmatprep.subr.bf16.mxu0 0
      %455 = vmatpush1.bf16.msra.mxu0 %v439
      %456 = vmatprep.subr.bf16.mxu0 0
      %457 = vmatpush1.bf16.msra.mxu0 %v440
      %458 = vmatprep.subr.bf16.mxu0 0
      %459 = vmatpush1.bf16.msra.mxu0 %v441
      %460 = vmatprep.subr.bf16.mxu0 0
      %461 = vmatpush1.bf16.msra.mxu0 0
      %462 = vmatprep.subr.bf16.mxu0 0
      %463 = vmatpush1.bf16.msra.mxu0 0
      %464 = vmatprep.subr.bf16.mxu0 0
      %465 = vmatpush1.bf16.msra.mxu0 0
      %466 = vmatprep.subr.bf16.mxu0 0
      %467 = vmatpush1.bf16.msra.mxu0 0
      %468 = vmatprep.subr.bf16.mxu0 0
      %469 = vmatpush1.bf16.msra.mxu0 0
      %470 = vmatprep.subr.bf16.mxu0 0
      %471 = vmatpush1.bf16.msra.mxu0 0
      %472 = vmatprep.subr.bf16.mxu0 0
      %473 = vmatpush1.bf16.msra.mxu0 0
      %474 = vmatprep.subr.bf16.mxu0 0
      %475 = vmatpush1.bf16.msra.mxu0 0
      %476 = vmatprep.subr.bf16.mxu0 0
      %477 = vmatpush1.bf16.msra.mxu0 0
      %478 = vmatprep.subr.bf16.mxu0 0
      %479 = vmatpush1.bf16.msra.mxu0 0
      %480 = vmatprep.subr.bf16.mxu0 0
      %481 = vmatpush1.bf16.msra.mxu0 0
      %482 = vmatprep.subr.bf16.mxu0 0
      %483 = vmatpush1.bf16.msra.mxu0 0
      %484 = vmatprep.mubr.bf16.mxu0 0
      %485 = vmatmul.mubr.bf16.gmra.mrb[0].mxu0 %v447
      %v486 = vpop.f32.mrb[0].mxu0
      %v487 = vadd.f32 0.0, %v486
      %v488 = vpop.f32.mrb[0].mxu0
      %v489 = vpop.f32.mrb[0].mxu0
      %v490 = vadd.f32 0.0, %v489
      %v491 = vpop.f32.mrb[0].mxu0
      %492 = vmatprep.mubr.bf16.mxu0 0
      %493 = vmatmul.mubr.bf16.gmra.mrb[0].mxu0 %v450
      %v494 = vpop.f32.mrb[0].mxu0
      %v495 = vadd.f32 0.0, %v494
      %v496 = vpop.f32.mrb[0].mxu0
      %v497 = vpop.f32.mrb[0].mxu0
      %v498 = vadd.f32 0.0, %v497
      %v499 = vpop.f32.mrb[0].mxu0
      %500 = vdwg.mxu0
      %v501 = vadd.f32 %v403, %v487
      %v502 = vadd.f32 %v404, %v490
      %v503 = vadd.f32 %v405, %v495
      %v504 = vadd.f32 %v406, %v498
      %505 = vst.msk [vmem:[%s197] sm:$0xff] %vm237, %v501
      %506 = vst.msk [vmem:[%s197 + $0x8] sm:$0xff] %vm237, %v502
      %507 = vst.msk [vmem:[%s197 + $0x10] sm:$0xff] %vm237, %v503
      %508 = vst.msk [vmem:[%s197 + $0x18] sm:$0xff] %vm237, %v504
      %v509 = vld [vmem:[%s197] sm:$0xff]
      %v510 = vld [vmem:[%s197 + $0x8] sm:$0xff]
      %v511 = vld [vmem:[%s197 + $0x10] sm:$0xff]
      %v512 = vld [vmem:[%s197 + $0x18] sm:$0xff]
      %v513 = vld [vmem:[%s192 + $0x10] sm:$0xff]
      %v514 = vld [vmem:[%s192 + $0x18] sm:$0xff]
      %v515 = vld [vmem:[%s192 + $0x20] sm:$0xff]
      %v516 = vld [vmem:[%s192 + $0x28] sm:$0xff]
      %v517 = vpack.c.bf16 %v514, %v513
      %v518 = vpack.c.bf16 %v516, %v515
      %s519 = scalar_lea.vmem %s1, 96
      %v520 = vld [vmem:[%s519] sm:$0xf]
      %v521 = vld [vmem:[%s519 + $0x4] sm:$0xf]
      %v522 = vld [vmem:[%s519 + $0x8] sm:$0xf]
      %v523 = vld [vmem:[%s519 + $0xc] sm:$0xf]
      %v524 = vld [vmem:[%s519 + $0x10] sm:$0xf]
      %v525 = vld [vmem:[%s519 + $0x14] sm:$0xf]
      %v526 = vld [vmem:[%s519 + $0x18] sm:$0xf]
      %v527 = vld [vmem:[%s519 + $0x1c] sm:$0xf]
      %v536 = vunpack.c.l.b16 %v520
      %v537 = vunpack.c.l.b16 %v521
      %v538 = vunpack.c.l.b16 %v522
      %v539 = vunpack.c.l.b16 %v523
      %v540 = vunpack.c.l.b16 %v524
      %v541 = vunpack.c.l.b16 %v525
      %v542 = vunpack.c.l.b16 %v526
      %v543 = vunpack.c.l.b16 %v527
      %v544 = vpack.c.b16 %v537, %v536
      %v545 = vpack.c.b16 %v539, %v538
      %v546 = vpack.c.b16 %v541, %v540
      %v547 = vpack.c.b16 %v543, %v542
      %v553 = vsel %vm237, %v517, 0
      %v556 = vsel %vm237, %v518, 0
      %558 = vmatprep.subr.bf16.mxu0 0
      %559 = vmatpush1.bf16.msra.mxu0 %v544
      %560 = vmatprep.subr.bf16.mxu0 0
      %561 = vmatpush1.bf16.msra.mxu0 %v545
      %562 = vmatprep.subr.bf16.mxu0 0
      %563 = vmatpush1.bf16.msra.mxu0 %v546
      %564 = vmatprep.subr.bf16.mxu0 0
      %565 = vmatpush1.bf16.msra.mxu0 %v547
      %566 = vmatprep.subr.bf16.mxu0 0
      %567 = vmatpush1.bf16.msra.mxu0 0
      %568 = vmatprep.subr.bf16.mxu0 0
      %569 = vmatpush1.bf16.msra.mxu0 0
      %570 = vmatprep.subr.bf16.mxu0 0
      %571 = vmatpush1.bf16.msra.mxu0 0
      %572 = vmatprep.subr.bf16.mxu0 0
      %573 = vmatpush1.bf16.msra.mxu0 0
      %574 = vmatprep.subr.bf16.mxu0 0
      %575 = vmatpush1.bf16.msra.mxu0 0
      %576 = vmatprep.subr.bf16.mxu0 0
      %577 = vmatpush1.bf16.msra.mxu0 0
      %578 = vmatprep.subr.bf16.mxu0 0
      %579 = vmatpush1.bf16.msra.mxu0 0
      %580 = vmatprep.subr.bf16.mxu0 0
      %581 = vmatpush1.bf16.msra.mxu0 0
      %582 = vmatprep.subr.bf16.mxu0 0
      %583 = vmatpush1.bf16.msra.mxu0 0
      %584 = vmatprep.subr.bf16.mxu0 0
      %585 = vmatpush1.bf16.msra.mxu0 0
      %586 = vmatprep.subr.bf16.mxu0 0
      %587 = vmatpush1.bf16.msra.mxu0 0
      %588 = vmatprep.subr.bf16.mxu0 0
      %589 = vmatpush1.bf16.msra.mxu0 0
      %590 = vmatprep.mubr.bf16.mxu0 0
      %591 = vmatmul.mubr.bf16.gmra.mrb[0].mxu0 %v553
      %v592 = vpop.f32.mrb[0].mxu0
      %v593 = vadd.f32 0.0, %v592
      %v594 = vpop.f32.mrb[0].mxu0
      %v595 = vpop.f32.mrb[0].mxu0
      %v596 = vadd.f32 0.0, %v595
      %v597 = vpop.f32.mrb[0].mxu0
      %598 = vmatprep.mubr.bf16.mxu0 0
      %599 = vmatmul.mubr.bf16.gmra.mrb[0].mxu0 %v556
      %v600 = vpop.f32.mrb[0].mxu0
      %v601 = vadd.f32 0.0, %v600
      %v602 = vpop.f32.mrb[0].mxu0
      %v603 = vpop.f32.mrb[0].mxu0
      %v604 = vadd.f32 0.0, %v603
      %v605 = vpop.f32.mrb[0].mxu0
      %606 = vdwg.mxu0
      %v607 = vadd.f32 %v509, %v593
      %v608 = vadd.f32 %v510, %v596
      %v609 = vadd.f32 %v511, %v601
      %v610 = vadd.f32 %v512, %v604
      %611 = vst.msk [vmem:[%s197] sm:$0xff] %vm237, %v607
      %612 = vst.msk [vmem:[%s197 + $0x8] sm:$0xff] %vm237, %v608
      %613 = vst.msk [vmem:[%s197 + $0x10] sm:$0xff] %vm237, %v609
      %614 = vst.msk [vmem:[%s197 + $0x18] sm:$0xff] %vm237, %v610
      %v615 = vld [vmem:[%s197] sm:$0xff]
      %v616 = vld [vmem:[%s197 + $0x8] sm:$0xff]
      %v617 = vld [vmem:[%s197 + $0x10] sm:$0xff]
      %v618 = vld [vmem:[%s197 + $0x18] sm:$0xff]
      %v619 = vld [vmem:[%s192 + $0x11] sm:$0xff]
      %v620 = vld [vmem:[%s192 + $0x19] sm:$0xff]
      %v621 = vld [vmem:[%s192 + $0x21] sm:$0xff]
      %v622 = vld [vmem:[%s192 + $0x29] sm:$0xff]
      %v623 = vpack.c.bf16 %v620, %v619
      %v624 = vpack.c.bf16 %v622, %v621
      %s625 = scalar_lea.vmem %s1, 128
      %v626 = vld [vmem:[%s625] sm:$0xf]
      %v627 = vld [vmem:[%s625 + $0x4] sm:$0xf]
      %v628 = vld [vmem:[%s625 + $0x8] sm:$0xf]
      %v629 = vld [vmem:[%s625 + $0xc] sm:$0xf]
      %v630 = vld [vmem:[%s625 + $0x10] sm:$0xf]
      %v631 = vld [vmem:[%s625 + $0x14] sm:$0xf]
      %v632 = vld [vmem:[%s625 + $0x18] sm:$0xf]
      %v633 = vld [vmem:[%s625 + $0x1c] sm:$0xf]
      %v642 = vunpack.c.l.b16 %v626
      %v643 = vunpack.c.l.b16 %v627
      %v644 = vunpack.c.l.b16 %v628
      %v645 = vunpack.c.l.b16 %v629
      %v646 = vunpack.c.l.b16 %v630
      %v647 = vunpack.c.l.b16 %v631
      %v648 = vunpack.c.l.b16 %v632
      %v649 = vunpack.c.l.b16 %v633
      %v650 = vpack.c.b16 %v643, %v642
      %v651 = vpack.c.b16 %v645, %v644
      %v652 = vpack.c.b16 %v647, %v646
      %v653 = vpack.c.b16 %v649, %v648
      %v659 = vsel %vm237, %v623, 0
      %v662 = vsel %vm237, %v624, 0
      %664 = vmatprep.subr.bf16.mxu0 0
      %665 = vmatpush1.bf16.msra.mxu0 %v650
      %666 = vmatprep.subr.bf16.mxu0 0
      %667 = vmatpush1.bf16.msra.mxu0 %v651
      %668 = vmatprep.subr.bf16.mxu0 0
      %669 = vmatpush1.bf16.msra.mxu0 %v652
      %670 = vmatprep.subr.bf16.mxu0 0
      %671 = vmatpush1.bf16.msra.mxu0 %v653
      %672 = vmatprep.subr.bf16.mxu0 0
      %673 = vmatpush1.bf16.msra.mxu0 0
      %674 = vmatprep.subr.bf16.mxu0 0
      %675 = vmatpush1.bf16.msra.mxu0 0
      %676 = vmatprep.subr.bf16.mxu0 0
      %677 = vmatpush1.bf16.msra.mxu0 0
      %678 = vmatprep.subr.bf16.mxu0 0
      %679 = vmatpush1.bf16.msra.mxu0 0
      %680 = vmatprep.subr.bf16.mxu0 0
      %681 = vmatpush1.bf16.msra.mxu0 0
      %682 = vmatprep.subr.bf16.mxu0 0
      %683 = vmatpush1.bf16.msra.mxu0 0
      %684 = vmatprep.subr.bf16.mxu0 0
      %685 = vmatpush1.bf16.msra.mxu0 0
      %686 = vmatprep.subr.bf16.mxu0 0
      %687 = vmatpush1.bf16.msra.mxu0 0
      %688 = vmatprep.subr.bf16.mxu0 0
      %689 = vmatpush1.bf16.msra.mxu0 0
      %690 = vmatprep.subr.bf16.mxu0 0
      %691 = vmatpush1.bf16.msra.mxu0 0
      %692 = vmatprep.subr.bf16.mxu0 0
      %693 = vmatpush1.bf16.msra.mxu0 0
      %694 = vmatprep.subr.bf16.mxu0 0
      %695 = vmatpush1.bf16.msra.mxu0 0
      %696 = vmatprep.mubr.bf16.mxu0 0
      %697 = vmatmul.mubr.bf16.gmra.mrb[0].mxu0 %v659
      %v698 = vpop.f32.mrb[0].mxu0
      %v699 = vadd.f32 0.0, %v698
      %v700 = vpop.f32.mrb[0].mxu0
      %v701 = vpop.f32.mrb[0].mxu0
      %v702 = vadd.f32 0.0, %v701
      %v703 = vpop.f32.mrb[0].mxu0
      %704 = vmatprep.mubr.bf16.mxu0 0
      %705 = vmatmul.mubr.bf16.gmra.mrb[0].mxu0 %v662
      %v706 = vpop.f32.mrb[0].mxu0
      %v707 = vadd.f32 0.0, %v706
      %v708 = vpop.f32.mrb[0].mxu0
      %v709 = vpop.f32.mrb[0].mxu0
      %v710 = vadd.f32 0.0, %v709
      %v711 = vpop.f32.mrb[0].mxu0
      %712 = vdwg.mxu0
      %v713 = vadd.f32 %v615, %v699
      %v714 = vadd.f32 %v616, %v702
      %v715 = vadd.f32 %v617, %v707
      %v716 = vadd.f32 %v618, %v710
      %717 = vst.msk [vmem:[%s197] sm:$0xff] %vm237, %v713
      %718 = vst.msk [vmem:[%s197 + $0x8] sm:$0xff] %vm237, %v714
      %719 = vst.msk [vmem:[%s197 + $0x10] sm:$0xff] %vm237, %v715
      %720 = vst.msk [vmem:[%s197 + $0x18] sm:$0xff] %vm237, %v716
      %v721 = vld [vmem:[%s197] sm:$0xff]
      %v722 = vld [vmem:[%s197 + $0x8] sm:$0xff]
      %v723 = vld [vmem:[%s197 + $0x10] sm:$0xff]
      %v724 = vld [vmem:[%s197 + $0x18] sm:$0xff]
      %v725 = vld [vmem:[%s192 + $0x12] sm:$0xff]
      %v726 = vld [vmem:[%s192 + $0x1a] sm:$0xff]
      %v727 = vld [vmem:[%s192 + $0x22] sm:$0xff]
      %v728 = vld [vmem:[%s192 + $0x2a] sm:$0xff]
      %v729 = vpack.c.bf16 %v726, %v725
      %v730 = vpack.c.bf16 %v728, %v727
      %s731 = scalar_lea.vmem %s1, 160
      %v732 = vld [vmem:[%s731] sm:$0xf]
      %v733 = vld [vmem:[%s731 + $0x4] sm:$0xf]
      %v734 = vld [vmem:[%s731 + $0x8] sm:$0xf]
      %v735 = vld [vmem:[%s731 + $0xc] sm:$0xf]
      %v736 = vld [vmem:[%s731 + $0x10] sm:$0xf]
      %v737 = vld [vmem:[%s731 + $0x14] sm:$0xf]
      %v738 = vld [vmem:[%s731 + $0x18] sm:$0xf]
      %v739 = vld [vmem:[%s731 + $0x1c] sm:$0xf]
      %v748 = vunpack.c.l.b16 %v732
      %v749 = vunpack.c.l.b16 %v733
      %v750 = vunpack.c.l.b16 %v734
      %v751 = vunpack.c.l.b16 %v735
      %v752 = vunpack.c.l.b16 %v736
      %v753 = vunpack.c.l.b16 %v737
      %v754 = vunpack.c.l.b16 %v738
      %v755 = vunpack.c.l.b16 %v739
      %v756 = vpack.c.b16 %v749, %v748
      %v757 = vpack.c.b16 %v751, %v750
      %v758 = vpack.c.b16 %v753, %v752
      %v759 = vpack.c.b16 %v755, %v754
      %v765 = vsel %vm237, %v729, 0
      %v768 = vsel %vm237, %v730, 0
      %770 = vmatprep.subr.bf16.mxu0 0
      %771 = vmatpush1.bf16.msra.mxu0 %v756
      %772 = vmatprep.subr.bf16.mxu0 0
      %773 = vmatpush1.bf16.msra.mxu0 %v757
      %774 = vmatprep.subr.bf16.mxu0 0
      %775 = vmatpush1.bf16.msra.mxu0 %v758
      %776 = vmatprep.subr.bf16.mxu0 0
      %777 = vmatpush1.bf16.msra.mxu0 %v759
      %778 = vmatprep.subr.bf16.mxu0 0
      %779 = vmatpush1.bf16.msra.mxu0 0
      %780 = vmatprep.subr.bf16.mxu0 0
      %781 = vmatpush1.bf16.msra.mxu0 0
      %782 = vmatprep.subr.bf16.mxu0 0
      %783 = vmatpush1.bf16.msra.mxu0 0
      %784 = vmatprep.subr.bf16.mxu0 0
      %785 = vmatpush1.bf16.msra.mxu0 0
      %786 = vmatprep.subr.bf16.mxu0 0
      %787 = vmatpush1.bf16.msra.mxu0 0
      %788 = vmatprep.subr.bf16.mxu0 0
      %789 = vmatpush1.bf16.msra.mxu0 0
      %790 = vmatprep.subr.bf16.mxu0 0
      %791 = vmatpush1.bf16.msra.mxu0 0
      %792 = vmatprep.subr.bf16.mxu0 0
      %793 = vmatpush1.bf16.msra.mxu0 0
      %794 = vmatprep.subr.bf16.mxu0 0
      %795 = vmatpush1.bf16.msra.mxu0 0
      %796 = vmatprep.subr.bf16.mxu0 0
      %797 = vmatpush1.bf16.msra.mxu0 0
      %798 = vmatprep.subr.bf16.mxu0 0
      %799 = vmatpush1.bf16.msra.mxu0 0
      %800 = vmatprep.subr.bf16.mxu0 0
      %801 = vmatpush1.bf16.msra.mxu0 0
      %802 = vmatprep.mubr.bf16.mxu0 0
      %803 = vmatmul.mubr.bf16.gmra.mrb[0].mxu0 %v765
      %v804 = vpop.f32.mrb[0].mxu0
      %v805 = vadd.f32 0.0, %v804
      %v806 = vpop.f32.mrb[0].mxu0
      %v807 = vpop.f32.mrb[0].mxu0
      %v808 = vadd.f32 0.0, %v807
      %v809 = vpop.f32.mrb[0].mxu0
      %810 = vmatprep.mubr.bf16.mxu0 0
      %811 = vmatmul.mubr.bf16.gmra.mrb[0].mxu0 %v768
      %v812 = vpop.f32.mrb[0].mxu0
      %v813 = vadd.f32 0.0, %v812
      %v814 = vpop.f32.mrb[0].mxu0
      %v815 = vpop.f32.mrb[0].mxu0
      %v816 = vadd.f32 0.0, %v815
      %v817 = vpop.f32.mrb[0].mxu0
      %818 = vdwg.mxu0
      %v819 = vadd.f32 %v721, %v805
      %v820 = vadd.f32 %v722, %v808
      %v821 = vadd.f32 %v723, %v813
      %v822 = vadd.f32 %v724, %v816
      %823 = vst.msk [vmem:[%s197] sm:$0xff] %vm237, %v819
      %824 = vst.msk [vmem:[%s197 + $0x8] sm:$0xff] %vm237, %v820
      %825 = vst.msk [vmem:[%s197 + $0x10] sm:$0xff] %vm237, %v821
      %826 = vst.msk [vmem:[%s197 + $0x18] sm:$0xff] %vm237, %v822
      %v827 = vld [vmem:[%s197] sm:$0xff]
      %v828 = vld [vmem:[%s197 + $0x8] sm:$0xff]
      %v829 = vld [vmem:[%s197 + $0x10] sm:$0xff]
      %v830 = vld [vmem:[%s197 + $0x18] sm:$0xff]
      %v831 = vld [vmem:[%s192 + $0x18] sm:$0xff]
      %v832 = vld [vmem:[%s192 + $0x20] sm:$0xff]
      %v833 = vld [vmem:[%s192 + $0x28] sm:$0xff]
      %v834 = vld [vmem:[%s192 + $0x30] sm:$0xff]
      %v835 = vpack.c.bf16 %v832, %v831
      %v836 = vpack.c.bf16 %v834, %v833
      %s837 = scalar_lea.vmem %s1, 192
      %v838 = vld [vmem:[%s837] sm:$0xf]
      %v839 = vld [vmem:[%s837 + $0x4] sm:$0xf]
      %v840 = vld [vmem:[%s837 + $0x8] sm:$0xf]
      %v841 = vld [vmem:[%s837 + $0xc] sm:$0xf]
      %v842 = vld [vmem:[%s837 + $0x10] sm:$0xf]
      %v843 = vld [vmem:[%s837 + $0x14] sm:$0xf]
      %v844 = vld [vmem:[%s837 + $0x18] sm:$0xf]
      %v845 = vld [vmem:[%s837 + $0x1c] sm:$0xf]
      %v854 = vunpack.c.l.b16 %v838
      %v855 = vunpack.c.l.b16 %v839
      %v856 = vunpack.c.l.b16 %v840
      %v857 = vunpack.c.l.b16 %v841
      %v858 = vunpack.c.l.b16 %v842
      %v859 = vunpack.c.l.b16 %v843
      %v860 = vunpack.c.l.b16 %v844
      %v861 = vunpack.c.l.b16 %v845
      %v862 = vpack.c.b16 %v855, %v854
      %v863 = vpack.c.b16 %v857, %v856
      %v864 = vpack.c.b16 %v859, %v858
      %v865 = vpack.c.b16 %v861, %v860
      %v871 = vsel %vm237, %v835, 0
      %v874 = vsel %vm237, %v836, 0
      %876 = vmatprep.subr.bf16.mxu0 0
      %877 = vmatpush1.bf16.msra.mxu0 %v862
      %878 = vmatprep.subr.bf16.mxu0 0
      %879 = vmatpush1.bf16.msra.mxu0 %v863
      %880 = vmatprep.subr.bf16.mxu0 0
      %881 = vmatpush1.bf16.msra.mxu0 %v864
      %882 = vmatprep.subr.bf16.mxu0 0
      %883 = vmatpush1.bf16.msra.mxu0 %v865
      %884 = vmatprep.subr.bf16.mxu0 0
      %885 = vmatpush1.bf16.msra.mxu0 0
      %886 = vmatprep.subr.bf16.mxu0 0
      %887 = vmatpush1.bf16.msra.mxu0 0
      %888 = vmatprep.subr.bf16.mxu0 0
      %889 = vmatpush1.bf16.msra.mxu0 0
      %890 = vmatprep.subr.bf16.mxu0 0
      %891 = vmatpush1.bf16.msra.mxu0 0
      %892 = vmatprep.subr.bf16.mxu0 0
      %893 = vmatpush1.bf16.msra.mxu0 0
      %894 = vmatprep.subr.bf16.mxu0 0
      %895 = vmatpush1.bf16.msra.mxu0 0
      %896 = vmatprep.subr.bf16.mxu0 0
      %897 = vmatpush1.bf16.msra.mxu0 0
      %898 = vmatprep.subr.bf16.mxu0 0
      %899 = vmatpush1.bf16.msra.mxu0 0
      %900 = vmatprep.subr.bf16.mxu0 0
      %901 = vmatpush1.bf16.msra.mxu0 0
      %902 = vmatprep.subr.bf16.mxu0 0
      %903 = vmatpush1.bf16.msra.mxu0 0
      %904 = vmatprep.subr.bf16.mxu0 0
      %905 = vmatpush1.bf16.msra.mxu0 0
      %906 = vmatprep.subr.bf16.mxu0 0
      %907 = vmatpush1.bf16.msra.mxu0 0
      %908 = vmatprep.mubr.bf16.mxu0 0
      %909 = vmatmul.mubr.bf16.gmra.mrb[0].mxu0 %v871
      %v910 = vpop.f32.mrb[0].mxu0
      %v911 = vadd.f32 0.0, %v910
      %v912 = vpop.f32.mrb[0].mxu0
      %v913 = vpop.f32.mrb[0].mxu0
      %v914 = vadd.f32 0.0, %v913
      %v915 = vpop.f32.mrb[0].mxu0
      %916 = vmatprep.mubr.bf16.mxu0 0
      %917 = vmatmul.mubr.bf16.gmra.mrb[0].mxu0 %v874
      %v918 = vpop.f32.mrb[0].mxu0
      %v919 = vadd.f32 0.0, %v918
      %v920 = vpop.f32.mrb[0].mxu0
      %v921 = vpop.f32.mrb[0].mxu0
      %v922 = vadd.f32 0.0, %v921
      %v923 = vpop.f32.mrb[0].mxu0
      %924 = vdwg.mxu0
      %v925 = vadd.f32 %v827, %v911
      %v926 = vadd.f32 %v828, %v914
      %v927 = vadd.f32 %v829, %v919
      %v928 = vadd.f32 %v830, %v922
      %929 = vst.msk [vmem:[%s197] sm:$0xff] %vm237, %v925
      %930 = vst.msk [vmem:[%s197 + $0x8] sm:$0xff] %vm237, %v926
      %931 = vst.msk [vmem:[%s197 + $0x10] sm:$0xff] %vm237, %v927
      %932 = vst.msk [vmem:[%s197 + $0x18] sm:$0xff] %vm237, %v928
      %v933 = vld [vmem:[%s197] sm:$0xff]
      %v934 = vld [vmem:[%s197 + $0x8] sm:$0xff]
      %v935 = vld [vmem:[%s197 + $0x10] sm:$0xff]
      %v936 = vld [vmem:[%s197 + $0x18] sm:$0xff]
      %v937 = vld [vmem:[%s192 + $0x19] sm:$0xff]
      %v938 = vld [vmem:[%s192 + $0x21] sm:$0xff]
      %v939 = vld [vmem:[%s192 + $0x29] sm:$0xff]
      %v940 = vld [vmem:[%s192 + $0x31] sm:$0xff]
      %v941 = vpack.c.bf16 %v938, %v937
      %v942 = vpack.c.bf16 %v940, %v939
      %s943 = scalar_lea.vmem %s1, 224
      %v944 = vld [vmem:[%s943] sm:$0xf]
      %v945 = vld [vmem:[%s943 + $0x4] sm:$0xf]
      %v946 = vld [vmem:[%s943 + $0x8] sm:$0xf]
      %v947 = vld [vmem:[%s943 + $0xc] sm:$0xf]
      %v948 = vld [vmem:[%s943 + $0x10] sm:$0xf]
      %v949 = vld [vmem:[%s943 + $0x14] sm:$0xf]
      %v950 = vld [vmem:[%s943 + $0x18] sm:$0xf]
      %v951 = vld [vmem:[%s943 + $0x1c] sm:$0xf]
      %v960 = vunpack.c.l.b16 %v944
      %v961 = vunpack.c.l.b16 %v945
      %v962 = vunpack.c.l.b16 %v946
      %v963 = vunpack.c.l.b16 %v947
      %v964 = vunpack.c.l.b16 %v948
      %v965 = vunpack.c.l.b16 %v949
      %v966 = vunpack.c.l.b16 %v950
      %v967 = vunpack.c.l.b16 %v951
      %v968 = vpack.c.b16 %v961, %v960
      %v969 = vpack.c.b16 %v963, %v962
      %v970 = vpack.c.b16 %v965, %v964
      %v971 = vpack.c.b16 %v967, %v966
      %v977 = vsel %vm237, %v941, 0
      %v980 = vsel %vm237, %v942, 0
      %982 = vmatprep.subr.bf16.mxu0 0
      %983 = vmatpush1.bf16.msra.mxu0 %v968
      %984 = vmatprep.subr.bf16.mxu0 0
      %985 = vmatpush1.bf16.msra.mxu0 %v969
      %986 = vmatprep.subr.bf16.mxu0 0
      %987 = vmatpush1.bf16.msra.mxu0 %v970
      %988 = vmatprep.subr.bf16.mxu0 0
      %989 = vmatpush1.bf16.msra.mxu0 %v971
      %990 = vmatprep.subr.bf16.mxu0 0
      %991 = vmatpush1.bf16.msra.mxu0 0
      %992 = vmatprep.subr.bf16.mxu0 0
      %993 = vmatpush1.bf16.msra.mxu0 0
      %994 = vmatprep.subr.bf16.mxu0 0
      %995 = vmatpush1.bf16.msra.mxu0 0
      %996 = vmatprep.subr.bf16.mxu0 0
      %997 = vmatpush1.bf16.msra.mxu0 0
      %998 = vmatprep.subr.bf16.mxu0 0
      %999 = vmatpush1.bf16.msra.mxu0 0
      %1000 = vmatprep.subr.bf16.mxu0 0
      %1001 = vmatpush1.bf16.msra.mxu0 0
      %1002 = vmatprep.subr.bf16.mxu0 0
      %1003 = vmatpush1.bf16.msra.mxu0 0
      %1004 = vmatprep.subr.bf16.mxu0 0
      %1005 = vmatpush1.bf16.msra.mxu0 0
      %1006 = vmatprep.subr.bf16.mxu0 0
      %1007 = vmatpush1.bf16.msra.mxu0 0
      %1008 = vmatprep.subr.bf16.mxu0 0
      %1009 = vmatpush1.bf16.msra.mxu0 0
      %1010 = vmatprep.subr.bf16.mxu0 0
      %1011 = vmatpush1.bf16.msra.mxu0 0
      %1012 = vmatprep.subr.bf16.mxu0 0
      %1013 = vmatpush1.bf16.msra.mxu0 0
      %1014 = vmatprep.mubr.bf16.mxu0 0
      %1015 = vmatmul.mubr.bf16.gmra.mrb[0].mxu0 %v977
      %v1016 = vpop.f32.mrb[0].mxu0
      %v1017 = vadd.f32 0.0, %v1016
      %v1018 = vpop.f32.mrb[0].mxu0
      %v1019 = vpop.f32.mrb[0].mxu0
      %v1020 = vadd.f32 0.0, %v1019
      %v1021 = vpop.f32.mrb[0].mxu0
      %1022 = vmatprep.mubr.bf16.mxu0 0
      %1023 = vmatmul.mubr.bf16.gmra.mrb[0].mxu0 %v980
      %v1024 = vpop.f32.mrb[0].mxu0
      %v1025 = vadd.f32 0.0, %v1024
      %v1026 = vpop.f32.mrb[0].mxu0
      %v1027 = vpop.f32.mrb[0].mxu0
      %v1028 = vadd.f32 0.0, %v1027
      %v1029 = vpop.f32.mrb[0].mxu0
      %1030 = vdwg.mxu0
      %v1031 = vadd.f32 %v933, %v1017
      %v1032 = vadd.f32 %v934, %v1020
      %v1033 = vadd.f32 %v935, %v1025
      %v1034 = vadd.f32 %v936, %v1028
      %1035 = vst.msk [vmem:[%s197] sm:$0xff] %vm237, %v1031
      %1036 = vst.msk [vmem:[%s197 + $0x8] sm:$0xff] %vm237, %v1032
      %1037 = vst.msk [vmem:[%s197 + $0x10] sm:$0xff] %vm237, %v1033
      %1038 = vst.msk [vmem:[%s197 + $0x18] sm:$0xff] %vm237, %v1034
      %v1039 = vld [vmem:[%s197] sm:$0xff]
      %v1040 = vld [vmem:[%s197 + $0x8] sm:$0xff]
      %v1041 = vld [vmem:[%s197 + $0x10] sm:$0xff]
      %v1042 = vld [vmem:[%s197 + $0x18] sm:$0xff]
      %v1043 = vld [vmem:[%s192 + $0x1a] sm:$0xff]
      %v1044 = vld [vmem:[%s192 + $0x22] sm:$0xff]
      %v1045 = vld [vmem:[%s192 + $0x2a] sm:$0xff]
      %v1046 = vld [vmem:[%s192 + $0x32] sm:$0xff]
      %v1047 = vpack.c.bf16 %v1044, %v1043
      %v1048 = vpack.c.bf16 %v1046, %v1045
      %s1049 = scalar_lea.vmem %s1, 256
      %v1050 = vld [vmem:[%s1049] sm:$0xf]
      %v1051 = vld [vmem:[%s1049 + $0x4] sm:$0xf]
      %v1052 = vld [vmem:[%s1049 + $0x8] sm:$0xf]
      %v1053 = vld [vmem:[%s1049 + $0xc] sm:$0xf]
      %v1054 = vld [vmem:[%s1049 + $0x10] sm:$0xf]
      %v1055 = vld [vmem:[%s1049 + $0x14] sm:$0xf]
      %v1056 = vld [vmem:[%s1049 + $0x18] sm:$0xf]
      %v1057 = vld [vmem:[%s1049 + $0x1c] sm:$0xf]
      %v1066 = vunpack.c.l.b16 %v1050
      %v1067 = vunpack.c.l.b16 %v1051
      %v1068 = vunpack.c.l.b16 %v1052
      %v1069 = vunpack.c.l.b16 %v1053
      %v1070 = vunpack.c.l.b16 %v1054
      %v1071 = vunpack.c.l.b16 %v1055
      %v1072 = vunpack.c.l.b16 %v1056
      %v1073 = vunpack.c.l.b16 %v1057
      %v1074 = vpack.c.b16 %v1067, %v1066
      %v1075 = vpack.c.b16 %v1069, %v1068
      %v1076 = vpack.c.b16 %v1071, %v1070
      %v1077 = vpack.c.b16 %v1073, %v1072
      %v1083 = vsel %vm237, %v1047, 0
      %v1086 = vsel %vm237, %v1048, 0
      %1088 = vmatprep.subr.bf16.mxu0 0
      %1089 = vmatpush1.bf16.msra.mxu0 %v1074
      %1090 = vmatprep.subr.bf16.mxu0 0
      %1091 = vmatpush1.bf16.msra.mxu0 %v1075
      %1092 = vmatprep.subr.bf16.mxu0 0
      %1093 = vmatpush1.bf16.msra.mxu0 %v1076
      %1094 = vmatprep.subr.bf16.mxu0 0
      %1095 = vmatpush1.bf16.msra.mxu0 %v1077
      %1096 = vmatprep.subr.bf16.mxu0 0
      %1097 = vmatpush1.bf16.msra.mxu0 0
      %1098 = vmatprep.subr.bf16.mxu0 0
      %1099 = vmatpush1.bf16.msra.mxu0 0
      %1100 = vmatprep.subr.bf16.mxu0 0
      %1101 = vmatpush1.bf16.msra.mxu0 0
      %1102 = vmatprep.subr.bf16.mxu0 0
      %1103 = vmatpush1.bf16.msra.mxu0 0
      %1104 = vmatprep.subr.bf16.mxu0 0
      %1105 = vmatpush1.bf16.msra.mxu0 0
      %1106 = vmatprep.subr.bf16.mxu0 0
      %1107 = vmatpush1.bf16.msra.mxu0 0
      %1108 = vmatprep.subr.bf16.mxu0 0
      %1109 = vmatpush1.bf16.msra.mxu0 0
      %1110 = vmatprep.subr.bf16.mxu0 0
      %1111 = vmatpush1.bf16.msra.mxu0 0
      %1112 = vmatprep.subr.bf16.mxu0 0
      %1113 = vmatpush1.bf16.msra.mxu0 0
      %1114 = vmatprep.subr.bf16.mxu0 0
      %1115 = vmatpush1.bf16.msra.mxu0 0
      %1116 = vmatprep.subr.bf16.mxu0 0
      %1117 = vmatpush1.bf16.msra.mxu0 0
      %1118 = vmatprep.subr.bf16.mxu0 0
      %1119 = vmatpush1.bf16.msra.mxu0 0
      %1120 = vmatprep.mubr.bf16.mxu0 0
      %1121 = vmatmul.mubr.bf16.gmra.mrb[0].mxu0 %v1083
      %v1122 = vpop.f32.mrb[0].mxu0
      %v1123 = vadd.f32 0.0, %v1122
      %v1124 = vpop.f32.mrb[0].mxu0
      %v1125 = vpop.f32.mrb[0].mxu0
      %v1126 = vadd.f32 0.0, %v1125
      %v1127 = vpop.f32.mrb[0].mxu0
      %1128 = vmatprep.mubr.bf16.mxu0 0
      %1129 = vmatmul.mubr.bf16.gmra.mrb[0].mxu0 %v1086
      %v1130 = vpop.f32.mrb[0].mxu0
      %v1131 = vadd.f32 0.0, %v1130
      %v1132 = vpop.f32.mrb[0].mxu0
      %v1133 = vpop.f32.mrb[0].mxu0
      %v1134 = vadd.f32 0.0, %v1133
      %v1135 = vpop.f32.mrb[0].mxu0
      %1136 = vdwg.mxu0
      %v1137 = vadd.f32 %v1039, %v1123
      %v1138 = vadd.f32 %v1040, %v1126
      %v1139 = vadd.f32 %v1041, %v1131
      %v1140 = vadd.f32 %v1042, %v1134
      %1141 = vst.msk [vmem:[%s197] sm:$0xff] %vm237, %v1137
      %1142 = vst.msk [vmem:[%s197 + $0x8] sm:$0xff] %vm237, %v1138
      %1143 = vst.msk [vmem:[%s197 + $0x10] sm:$0xff] %vm237, %v1139
      %1144 = vst.msk [vmem:[%s197 + $0x18] sm:$0xff] %vm237, %v1140
      %v1145 = vld [vmem:[%s197] sm:$0xff]
      %v1146 = vld [vmem:[%s197 + $0x8] sm:$0xff]
      %v1147 = vld [vmem:[%s197 + $0x10] sm:$0xff]
      %v1148 = vld [vmem:[%s197 + $0x18] sm:$0xff]
      %v1149 = vld [vmem:[%s2] sm:$0x1]
      %v1151 = vlaneseq
      %v1152 = vshrl.u32 %v1151, 7
      %v1153 = vsub.s32 0, %v1152
      %v1154 = vrot.slane %v1149, %v1153
      %v1156 = vmul.f32 %v1145, %v1154
      %v1157 = vmul.f32 %v1146, %v1154
      %v1158 = vmul.f32 %v1147, %v1154
      %v1159 = vmul.f32 %v1148, %v1154
      %v1160 = vld [vmem:[%s3] sm:$0x1]
      %v1162 = vlaneseq
      %v1163 = vshrl.u32 %v1162, 7
      %v1164 = vsub.s32 0, %v1163
      %v1165 = vrot.slane %v1160, %v1164
      %v1167 = vadd.f32 %v1156, %v1165
      %v1168 = vadd.f32 %v1157, %v1165
      %v1169 = vadd.f32 %v1158, %v1165
      %v1170 = vadd.f32 %v1159, %v1165
      %v1171 = vmax.f32 %v1167, 0.0
      %v1172 = vmax.f32 %v1168, 0.0
      %v1173 = vmax.f32 %v1169, 0.0
      %v1174 = vmax.f32 %v1170, 0.0
      %1175 = vst.msk [vmem:[%s197] sm:$0xff] %vm237, %v1171
      %1176 = vst.msk [vmem:[%s197 + $0x8] sm:$0xff] %vm237, %v1172
      %1177 = vst.msk [vmem:[%s197 + $0x10] sm:$0xff] %vm237, %v1173
      %1178 = vst.msk [vmem:[%s197 + $0x18] sm:$0xff] %vm237, %v1174
      %p1179 = scmp.lt.s32.totalorder %s15, 1
      %s1180 = scalar_select %p1179, %s15, 1
      %s1181 = smul.addr %s1180, 4
      %s1182 = smul.addr %s1181, 8
      %s1183 = scalar_lea.vmem %s4, %s1182
      // Predicated region
      $region37: #{covidx_forward.7} parent=35 // pred_check
        %p1184 = pneg %p122
      $region38: #{covidx_forward.7} parent=35 // pred_check_branch
        %1186 = sbr.rel (%p1184) target = $region40
      $region39: #{covidx_forward.7} parent=35 // pred_region
        _
      $region40: #{covidx_forward.7} parent=35 // pred_fallthru
        _
    $region36: #{covidx_forward.7} parent=5 // pred_fallthru
      _
    %p1187 = scmp.le.s32.totalorder 2, %s10
    // Predicated region
    $region41: #{covidx_forward.7} parent=5 // pred_check
      %p1188 = pneg %p1187
    $region42: #{covidx_forward.7} parent=5 // pred_check_branch
      %1190 = sbr.rel (%p1188) target = $region44
    $region43: #{covidx_forward.7} parent=5 // pred_region
      %s1191 = ssub.s32 %s10, 2
      // Predicated region
      $region45: #{covidx_forward.7} parent=43 // pred_check
        %p1192 = pneg %p128
      $region46: #{covidx_forward.7} parent=43 // pred_check_branch
        %1194 = sbr.rel (%p1192) target = $region48
      $region47: #{covidx_forward.7} parent=43 // pred_region
        %p1195 = scmp.lt.s32.totalorder %s16, 1
        %s1196 = scalar_select %p1195, %s16, 1
        %s1197 = smul.addr %s1196, 4
        %s1198 = smul.addr %s1197, 8
        %s1199 = scalar_lea.vmem %s4, %s1198
      $region48: #{covidx_forward.7} parent=43 // pred_fallthru
        _
    $region44: #{covidx_forward.7} parent=5 // pred_fallthru
      _
  $region6: #{covidx_forward.7} parent=0 // loop_footer
    %s14 = sadd.s32 1, %s10
  $region7: #{covidx_forward.7} parent=0 // loop_footer_branch
    %9 = sbr.rel target = $region3
  $region8: #{covidx_forward.7} parent=0 // loop_exit
    _

// kernel: covidx_forward.8
$region0: #{covidx_forward.8}
  #allocation0 [shape = 'u32[]', space=smem, size = 0x4, offset = 0x4, fixed_abs, tag = 'smem constant byte address 0x4 - core index']
  #allocation1 [shape = 'u32[144,128]{1,0:T(1,128)}', space=vmem, size = 0x12000, scoped, tag = 'internal scratch']
  #allocation2 [shape = 'f32[32,64]{1,0:T(8,128)}', space=vmem, size = 0x4000, scoped, tag = 'scratch operand']
  %s0 = inlined_call_operand.vmem [shape: f32[2,64,64], index: 0, kind: input, shape index: {}]
  %s1 = inlined_call_operand.vmem [shape: bf16[9,64,64], index: 1, kind: input, shape index: {}]
  %s2 = inlined_call_operand.vmem [shape: f32[1,64], index: 2, kind: input, shape index: {}]
  %s3 = inlined_call_operand.vmem [shape: f32[1,64], index: 3, kind: input, shape index: {}]
  %s4 = inlined_call_operand.vmem [shape: f32[2,32,64], index: 4, kind: input, shape index: {}]
  %s5 = inlined_call_operand.vmem [shape: f32[2,1,64], index: 5, kind: output, shape index: {}]
  %s6 = sld [smem:[#allocation0]]
  $region53: #{covidx_forward.8} parent=0
    _
  %s8 = ssub.s32 1, %s6
  %s9 = scalar_select 0, %s8, %s6
  loop: start=0, step=1, limit=4
  $region2: #{covidx_forward.8} parent=0 // loop_pre_header
    _
  $region3: #{covidx_forward.8} parent=0 // loop_header
    %s11 = sphi 0, %s15
    %p12 = scmp.ge.s32.totalorder %s11, 4
    %s21 = sphi 0, %s23
    %s24 = sphi 0, %s21
    %s25 = sphi 0, %s24
    %s41 = sphi 0, %s25
    %s45 = sphi 0, %s45
    %s47 = sphi 0, %s45
    %s48 = sphi 0, %s47
    %s62 = sphi 0, %s48
    %s66 = sphi 0, %s66
    %s68 = sphi 0, %s66
    %s69 = sphi 0, %s68
    %s83 = sphi 0, %s69
    %s87 = sphi 0, %s87
    %s89 = sphi 0, %s87
    %s90 = sphi 0, %s89
    %s104 = sphi 0, %s90
    %s110 = sphi 0, %s112
    %s113 = sphi 0, %s110
    %s114 = sphi 0, %s113
    %s130 = sphi 0, %s114
    %s136 = sphi 0, %s138
    %s139 = sphi 0, %s136
    %s140 = sphi 0, %s139
    %s156 = sphi 0, %s140
  $region4: #{covidx_forward.8} parent=0 // loop_header_branch
    %14 = sbr.rel (%p12) target = $region8
  $region5: #{covidx_forward.8} parent=0 // loop_body
    %s16 = ssub.s32 %s11, 1
    %s17 = ssub.s32 %s11, 2
    %s18 = sadd.s32 %s11, 1
    %s19 = ssub.s32 %s11, %s18
    %p20 = scmp.eq.s32.totalorder %s19, 0
    %s22 = sadd.s32 %s21, 1
    %s23 = scalar_select %p20, %s21, %s22
    %p26 = pneg %p20
    %p27 = scmp.eq.s32.totalorder %s11, 1
    %p28 = por %p26, %p27
    %p29 = scmp.ne.s32.totalorder %s21, %s24
    %p30 = scmp.eq.s32.totalorder %s11, 0
    %p31 = por %p29, %p30
    %p32 = scmp.ne.s32.totalorder %s21, %s24
    %p33 = scmp.eq.s32.totalorder %s16, 1
    %p34 = por %p32, %p33
    %p35 = scmp.ne.s32.totalorder %s24, %s25
    %p36 = scmp.eq.s32.totalorder %s16, 0
    %p37 = por %p35, %p36
    %p38 = scmp.ne.s32.totalorder %s24, %s25
    %p39 = scmp.eq.s32.totalorder %s17, 1
    %p40 = por %p38, %p39
    %p42 = scmp.ne.s32.totalorder %s25, %s41
    %p43 = scmp.eq.s32.totalorder %s17, 0
    %p44 = por %p42, %p43
    %s46 = sadd.s32 %s45, 1
    %p49 = scmp.eq.s32.totalorder %s11, 1
    %p50 = scmp.ne.s32.totalorder %s45, %s47
    %p51 = scmp.eq.s32.totalorder %s11, 0
    %p52 = por %p50, %p51
    %p53 = scmp.ne.s32.totalorder %s45, %s47
    %p54 = scmp.eq.s32.totalorder %s16, 1
    %p55 = por %p53, %p54
    %p56 = scmp.ne.s32.totalorder %s47, %s48
    %p57 = scmp.eq.s32.totalorder %s16, 0
    %p58 = por %p56, %p57
    %p59 = scmp.ne.s32.totalorder %s47, %s48
    %p60 = scmp.eq.s32.totalorder %s17, 1
    %p61 = por %p59, %p60
    %p63 = scmp.ne.s32.totalorder %s48, %s62
    %p64 = scmp.eq.s32.totalorder %s17, 0
    %p65 = por %p63, %p64
    %s67 = sadd.s32 %s66, 1
    %p70 = scmp.eq.s32.totalorder %s11, 1
    %p71 = scmp.ne.s32.totalorder %s66, %s68
    %p72 = scmp.eq.s32.totalorder %s11, 0
    %p73 = por %p71, %p72
    %p74 = scmp.ne.s32.totalorder %s66, %s68
    %p75 = scmp.eq.s32.totalorder %s16, 1
    %p76 = por %p74, %p75
    %p77 = scmp.ne.s32.totalorder %s68, %s69
    %p78 = scmp.eq.s32.totalorder %s16, 0
    %p79 = por %p77, %p78
    %p80 = scmp.ne.s32.totalorder %s68, %s69
    %p81 = scmp.eq.s32.totalorder %s17, 1
    %p82 = por %p80, %p81
    %p84 = scmp.ne.s32.totalorder %s69, %s83
    %p85 = scmp.eq.s32.totalorder %s17, 0
    %p86 = por %p84, %p85
    %s88 = sadd.s32 %s87, 1
    %p91 = scmp.eq.s32.totalorder %s11, 1
    %p92 = scmp.ne.s32.totalorder %s87, %s89
    %p93 = scmp.eq.s32.totalorder %s11, 0
    %p94 = por %p92, %p93
    %p95 = scmp.ne.s32.totalorder %s87, %s89
    %p96 = scmp.eq.s32.totalorder %s16, 1
    %p97 = por %p95, %p96
    %p98 = scmp.ne.s32.totalorder %s89, %s90
    %p99 = scmp.eq.s32.totalorder %s16, 0
    %p100 = por %p98, %p99
    %p101 = scmp.ne.s32.totalorder %s89, %s90
    %p102 = scmp.eq.s32.totalorder %s17, 1
    %p103 = por %p101, %p102
    %p105 = scmp.ne.s32.totalorder %s90, %s104
    %p106 = scmp.eq.s32.totalorder %s17, 0
    %p107 = por %p105, %p106
    %s108 = ssub.s32 %s11, %s18
    %p109 = scmp.eq.s32.totalorder %s108, 0
    %s111 = sadd.s32 %s110, 1
    %s112 = scalar_select %p109, %s110, %s111
    %p115 = pneg %p109
    %p116 = scmp.eq.s32.totalorder %s11, 1
    %p117 = por %p115, %p116
    %p118 = scmp.ne.s32.totalorder %s110, %s113
    %p119 = scmp.eq.s32.totalorder %s11, 0
    %p120 = por %p118, %p119
    %p121 = scmp.ne.s32.totalorder %s110, %s113
    %p122 = scmp.eq.s32.totalorder %s16, 1
    %p123 = por %p121, %p122
    %p124 = scmp.ne.s32.totalorder %s113, %s114
    %p125 = scmp.eq.s32.totalorder %s16, 0
    %p126 = por %p124, %p125
    %p127 = scmp.ne.s32.totalorder %s113, %s114
    %p128 = scmp.eq.s32.totalorder %s17, 1
    %p129 = por %p127, %p128
    %p131 = scmp.ne.s32.totalorder %s114, %s130
    %p132 = scmp.eq.s32.totalorder %s17, 0
    %p133 = por %p131, %p132
    %s134 = ssub.s32 %s11, %s18
    %p135 = scmp.eq.s32.totalorder %s134, 0
    %s137 = sadd.s32 %s136, 1
    %s138 = scalar_select %p135, %s136, %s137
    %p141 = pneg %p135
    %p142 = scmp.eq.s32.totalorder %s11, 1
    %p143 = por %p141, %p142
    %p144 = scmp.ne.s32.totalorder %s136, %s139
    %p145 = scmp.eq.s32.totalorder %s11, 0
    %p146 = por %p144, %p145
    %p147 = scmp.ne.s32.totalorder %s136, %s139
    %p148 = scmp.eq.s32.totalorder %s16, 1
    %p149 = por %p147, %p148
    %p150 = scmp.ne.s32.totalorder %s139, %s140
    %p151 = scmp.eq.s32.totalorder %s16, 0
    %p152 = por %p150, %p151
    %p153 = scmp.ne.s32.totalorder %s139, %s140
    %p154 = scmp.eq.s32.totalorder %s17, 1
    %p155 = por %p153, %p154
    %p157 = scmp.ne.s32.totalorder %s140, %s156
    %p158 = scmp.eq.s32.totalorder %s17, 0
    %p159 = por %p157, %p158
    %p160 = scmp.le.s32.totalorder 1, %s11
    %p161 = scmp.lt.s32.totalorder %s11, 3
    %p162 = pnand %p160, %p161
    %p163 = pneg %p162
    // Predicated region
    $region9: #{covidx_forward.8} parent=5 // pred_check
      _
    $region10: #{covidx_forward.8} parent=5 // pred_check_branch
      %165 = sbr.rel (%p162) target = $region12
    $region11: #{covidx_forward.8} parent=5 // pred_region
      %s166 = ssub.s32 %s11, 1
      // Predicated region
      $region13: #{covidx_forward.8} parent=11 // pred_check
        %p167 = pneg %p58
      $region14: #{covidx_forward.8} parent=11 // pred_check_branch
        %169 = sbr.rel (%p167) target = $region16
      $region15: #{covidx_forward.8} parent=11 // pred_region
        _
      $region16: #{covidx_forward.8} parent=11 // pred_fallthru
        _
      // Predicated region
      $region17: #{covidx_forward.8} parent=11 // pred_check
        %p170 = pneg %p79
      $region18: #{covidx_forward.8} parent=11 // pred_check_branch
        %172 = sbr.rel (%p170) target = $region20
      $region19: #{covidx_forward.8} parent=11 // pred_region
        _
      $region20: #{covidx_forward.8} parent=11 // pred_fallthru
        _
      // Predicated region
      $region21: #{covidx_forward.8} parent=11 // pred_check
        %p173 = pneg %p100
      $region22: #{covidx_forward.8} parent=11 // pred_check_branch
        %175 = sbr.rel (%p173) target = $region24
      $region23: #{covidx_forward.8} parent=11 // pred_region
        _
      $region24: #{covidx_forward.8} parent=11 // pred_fallthru
        _
    $region12: #{covidx_forward.8} parent=5 // pred_fallthru
      _
    %p176 = scmp.lt.s32.totalorder %s11, 2
    // Predicated region
    $region25: #{covidx_forward.8} parent=5 // pred_check
      %p177 = pneg %p176
    $region26: #{covidx_forward.8} parent=5 // pred_check_branch
      %179 = sbr.rel (%p177) target = $region28
    $region27: #{covidx_forward.8} parent=5 // pred_region
      // Predicated region
      $region29: #{covidx_forward.8} parent=27 // pred_check
        %p180 = pneg %p31
      $region30: #{covidx_forward.8} parent=27 // pred_check_branch
        %182 = sbr.rel (%p180) target = $region32
      $region31: #{covidx_forward.8} parent=27 // pred_region
        %p183 = scmp.lt.s32.totalorder %s11, 1
        %s184 = scalar_select %p183, %s11, 1
        %s185 = smul.addr %s184, 8
        %s186 = smul.addr %s185, 8
        %s187 = scalar_lea.vmem %s0, %s186
      $region32: #{covidx_forward.8} parent=27 // pred_fallthru
        _
      // Predicated region
      $region33: #{covidx_forward.8} parent=27 // pred_check
        %p188 = pneg %p120
      $region34: #{covidx_forward.8} parent=27 // pred_check_branch
        %190 = sbr.rel (%p188) target = $region36
      $region35: #{covidx_forward.8} parent=27 // pred_region
        %p191 = scmp.lt.s32.totalorder %s11, 1
        %s192 = scalar_select %p191, %s11, 1
        %s193 = smul.addr %s192, 4
        %s194 = smul.addr %s193, 8
        %s195 = scalar_lea.vmem %s4, %s194
      $region36: #{covidx_forward.8} parent=27 // pred_fallthru
        _
    $region28: #{covidx_forward.8} parent=5 // pred_fallthru
      _
    %p196 = scmp.le.s32.totalorder 1, %s11
    %p197 = scmp.lt.s32.totalorder %s11, 3
    %p198 = pnand %p196, %p197
    %p199 = pneg %p198
    // Predicated region
    $region37: #{covidx_forward.8} parent=5 // pred_check
      _
    $region38: #{covidx_forward.8} parent=5 // pred_check_branch
      %201 = sbr.rel (%p198) target = $region40
    $region39: #{covidx_forward.8} parent=5 // pred_region
      %s202 = ssub.s32 %s11, 1
      %p203 = scmp.lt.s32.totalorder %s16, 1
      %s204 = scalar_select %p203, %s16, 1
      %s205 = smul.addr %s204, 8
      %s206 = smul.addr %s205, 8
      %s207 = scalar_lea.vmem %s0, %s206
      %p208 = pneg %p37
      %p209 = pneg %p34
      %p210 = pneg %p58
      %p211 = pneg %p55
      %p212 = pneg %p79
      %p213 = pneg %p76
      %p214 = pneg %p100
      %p215 = pneg %p97
      %p216 = scmp.lt.s32.totalorder %s16, 1
      %s217 = scalar_select %p216, %s16, 1
      %s218 = smul.addr %s217, 4
      %s219 = smul.addr %s218, 8
      %s220 = scalar_lea.vmem %s4, %s219
      %p221 = pneg %p126
      %p222 = pneg %p123
      %p223 = pneg %p152
      %p224 = pneg %p149
      %p225 = scmp.lt.s32.totalorder %s16, 1
      %s226 = scalar_select %p225, %s16, 1
      %s227 = scalar_lea.vmem %s5, %s226
      %p228 = scmp.lt.s32.totalorder %s16, 1
      %s229 = scalar_select %p228, %s16, 1
      %s230 = smul.addr %s229, 8
      %s231 = smul.addr %s230, 8
      %s232 = scalar_lea.vmem %s0, %s231
      %p233 = scmp.lt.s32.totalorder %s16, 1
      %s234 = scalar_select %p233, %s16, 1
      %s235 = smul.addr %s234, 4
      %s236 = smul.addr %s235, 8
      %s237 = scalar_lea.vmem %s4, %s236
      %p238 = scmp.lt.s32.totalorder %s16, 1
      %s239 = scalar_select %p238, %s16, 1
      %s240 = scalar_lea.vmem %s5, %s239
      %v242 = vld [vmem:[%s232 + $0x8] sm:$0xff]
      %v243 = vld [vmem:[%s232 + $0x10] sm:$0xff]
      %v244 = vld [vmem:[%s232 + $0x18] sm:$0xff]
      %v245 = vld [vmem:[%s232 + $0x20] sm:$0xff]
      %v246 = vpack.c.bf16 %v243, %v242
      %v247 = vpack.c.bf16 %v245, %v244
      %v248 = vld [vmem:[%s1] sm:$0xf]
      %v249 = vld [vmem:[%s1 + $0x4] sm:$0xf]
      %v250 = vld [vmem:[%s1 + $0x8] sm:$0xf]
      %v251 = vld [vmem:[%s1 + $0xc] sm:$0xf]
      %v252 = vld [vmem:[%s1 + $0x10] sm:$0xf]
      %v253 = vld [vmem:[%s1 + $0x14] sm:$0xf]
      %v254 = vld [vmem:[%s1 + $0x18] sm:$0xf]
      %v255 = vld [vmem:[%s1 + $0x1c] sm:$0xf]
      %v264 = vunpack.c.l.b16 %v248
      %v265 = vunpack.c.l.b16 %v249
      %v266 = vunpack.c.l.b16 %v250
      %v267 = vunpack.c.l.b16 %v251
      %v268 = vunpack.c.l.b16 %v252
      %v269 = vunpack.c.l.b16 %v253
      %v270 = vunpack.c.l.b16 %v254
      %v271 = vunpack.c.l.b16 %v255
      %v272 = vpack.c.b16 %v265, %v264
      %v273 = vpack.c.b16 %v267, %v266
      %v274 = vpack.c.b16 %v269, %v268
      %v275 = vpack.c.b16 %v271, %v270
      %vm280 = vcmask 523264
      %v282 = vsel %vm280, %v246, 0
      %v285 = vsel %vm280, %v247, 0
      %287 = vmatprep.subr.bf16.mxu0 0
      %288 = vmatpush1.bf16.msra.mxu0 %v272
      %289 = vmatprep.subr.bf16.mxu0 0
      %290 = vmatpush1.bf16.msra.mxu0 %v273
      %291 = vmatprep.subr.bf16.mxu0 0
      %292 = vmatpush1.bf16.msra.mxu0 %v274
      %293 = vmatprep.subr.bf16.mxu0 0
      %294 = vmatpush1.bf16.msra.mxu0 %v275
      %295 = vmatprep.subr.bf16.mxu0 0
      %296 = vmatpush1.bf16.msra.mxu0 0
      %297 = vmatprep.subr.bf16.mxu0 0
      %298 = vmatpush1.bf16.msra.mxu0 0
      %299 = vmatprep.subr.bf16.mxu0 0
      %300 = vmatpush1.bf16.msra.mxu0 0
      %301 = vmatprep.subr.bf16.mxu0 0
      %302 = vmatpush1.bf16.msra.mxu0 0
      %303 = vmatprep.subr.bf16.mxu0 0
      %304 = vmatpush1.bf16.msra.mxu0 0
      %305 = vmatprep.subr.bf16.mxu0 0
      %306 = vmatpush1.bf16.msra.mxu0 0
      %307 = vmatprep.subr.bf16.mxu0 0
      %308 = vmatpush1.bf16.msra.mxu0 0
      %309 = vmatprep.subr.bf16.mxu0 0
      %310 = vmatpush1.bf16.msra.mxu0 0
      %311 = vmatprep.subr.bf16.mxu0 0
      %312 = vmatpush1.bf16.msra.mxu0 0
      %313 = vmatprep.subr.bf16.mxu0 0
      %314 = vmatpush1.bf16.msra.mxu0 0
      %315 = vmatprep.subr.bf16.mxu0 0
      %316 = vmatpush1.bf16.msra.mxu0 0
      %317 = vmatprep.subr.bf16.mxu0 0
      %318 = vmatpush1.bf16.msra.mxu0 0
      %319 = vmatprep.mubr.bf16.mxu0 0
      %320 = vmatmul.mubr.bf16.gmra.mrb[0].mxu0 %v282
      %v321 = vpop.f32.mrb[0].mxu0
      %v322 = vadd.f32 0.0, %v321
      %v323 = vpop.f32.mrb[0].mxu0
      %v324 = vpop.f32.mrb[0].mxu0
      %v325 = vadd.f32 0.0, %v324
      %v326 = vpop.f32.mrb[0].mxu0
      %327 = vmatprep.mubr.bf16.mxu0 0
      %328 = vmatmul.mubr.bf16.gmra.mrb[0].mxu0 %v285
      %v329 = vpop.f32.mrb[0].mxu0
      %v330 = vadd.f32 0.0, %v329
      %v331 = vpop.f32.mrb[0].mxu0
      %v332 = vpop.f32.mrb[0].mxu0
      %v333 = vadd.f32 0.0, %v332
      %v334 = vpop.f32.mrb[0].mxu0
      %335 = vdwg.mxu0
      %336 = vst.msk [vmem:[#allocation2] sm:$0xff] %vm280, %v322
      %337 = vst.msk [vmem:[#allocation2 + $0x8] sm:$0xff] %vm280, %v325
      %338 = vst.msk [vmem:[#allocation2 + $0x10] sm:$0xff] %vm280, %v330
      %339 = vst.msk [vmem:[#allocation2 + $0x18] sm:$0xff] %vm280, %v333
      %v340 = vld [vmem:[#allocation2] sm:$0xff]
      %v341 = vld [vmem:[#allocation2 + $0x8] sm:$0xff]
      %v342 = vld [vmem:[#allocation2 + $0x10] sm:$0xff]
      %v343 = vld [vmem:[#allocation2 + $0x18] sm:$0xff]
      %v344 = vld [vmem:[%s232 + $0x9] sm:$0xff]
      %v345 = vld [vmem:[%s232 + $0x11] sm:$0xff]
      %v346 = vld [vmem:[%s232 + $0x19] sm:$0xff]
      %v347 = vld [vmem:[%s232 + $0x21] sm:$0xff]
      %v348 = vpack.c.bf16 %v345, %v344
      %v349 = vpack.c.bf16 %v347, %v346
      %s350 = scalar_lea.vmem %s1, 32
      %v351 = vld [vmem:[%s350] sm:$0xf]
      %v352 = vld [vmem:[%s350 + $0x4] sm:$0xf]
      %v353 = vld [vmem:[%s350 + $0x8] sm:$0xf]
      %v354 = vld [vmem:[%s350 + $0xc] sm:$0xf]
      %v355 = vld [vmem:[%s350 + $0x10] sm:$0xf]
      %v356 = vld [vmem:[%s350 + $0x14] sm:$0xf]
      %v357 = vld [vmem:[%s350 + $0x18] sm:$0xf]
      %v358 = vld [vmem:[%s350 + $0x1c] sm:$0xf]
      %v367 = vunpack.c.l.b16 %v351
      %v368 = vunpack.c.l.b16 %v352
      %v369 = vunpack.c.l.b16 %v353
      %v370 = vunpack.c.l.b16 %v354
      %v371 = vunpack.c.l.b16 %v355
      %v372 = vunpack.c.l.b16 %v356
      %v373 = vunpack.c.l.b16 %v357
      %v374 = vunpack.c.l.b16 %v358
      %v375 = vpack.c.b16 %v368, %v367
      %v376 = vpack.c.b16 %v370, %v369
      %v377 = vpack.c.b16 %v372, %v371
      %v378 = vpack.c.b16 %v374, %v373
      %v384 = vsel %vm280, %v348, 0
      %v387 = vsel %vm280, %v349, 0
      %389 = vmatprep.subr.bf16.mxu0 0
      %390 = vmatpush1.bf16.msra.mxu0 %v375
      %391 = vmatprep.subr.bf16.mxu0 0
      %392 = vmatpush1.bf16.msra.mxu0 %v376
      %393 = vmatprep.subr.bf16.mxu0 0
      %394 = vmatpush1.bf16.msra.mxu0 %v377
      %395 = vmatprep.subr.bf16.mxu0 0
      %396 = vmatpush1.bf16.msra.mxu0 %v378
      %397 = vmatprep.subr.bf16.mxu0 0
      %398 = vmatpush1.bf16.msra.mxu0 0
      %399 = vmatprep.subr.bf16.mxu0 0
      %400 = vmatpush1.bf16.msra.mxu0 0
      %401 = vmatprep.subr.bf16.mxu0 0
      %402 = vmatpush1.bf16.msra.mxu0 0
      %403 = vmatprep.subr.bf16.mxu0 0
      %404 = vmatpush1.bf16.msra.mxu0 0
      %405 = vmatprep.subr.bf16.mxu0 0
      %406 = vmatpush1.bf16.msra.mxu0 0
      %407 = vmatprep.subr.bf16.mxu0 0
      %408 = vmatpush1.bf16.msra.mxu0 0
      %409 = vmatprep.subr.bf16.mxu0 0
      %410 = vmatpush1.bf16.msra.mxu0 0
      %411 = vmatprep.subr.bf16.mxu0 0
      %412 = vmatpush1.bf16.msra.mxu0 0
      %413 = vmatprep.subr.bf16.mxu0 0
      %414 = vmatpush1.bf16.msra.mxu0 0
      %415 = vmatprep.subr.bf16.mxu0 0
      %416 = vmatpush1.bf16.msra.mxu0 0
      %417 = vmatprep.subr.bf16.mxu0 0
      %418 = vmatpush1.bf16.msra.mxu0 0
      %419 = vmatprep.subr.bf16.mxu0 0
      %420 = vmatpush1.bf16.msra.mxu0 0
      %421 = vmatprep.mubr.bf16.mxu0 0
      %422 = vmatmul.mubr.bf16.gmra.mrb[0].mxu0 %v384
      %v423 = vpop.f32.mrb[0].mxu0
      %v424 = vadd.f32 0.0, %v423
      %v425 = vpop.f32.mrb[0].mxu0
      %v426 = vpop.f32.mrb[0].mxu0
      %v427 = vadd.f32 0.0, %v426
      %v428 = vpop.f32.mrb[0].mxu0
      %429 = vmatprep.mubr.bf16.mxu0 0
      %430 = vmatmul.mubr.bf16.gmra.mrb[0].mxu0 %v387
      %v431 = vpop.f32.mrb[0].mxu0
      %v432 = vadd.f32 0.0, %v431
      %v433 = vpop.f32.mrb[0].mxu0
      %v434 = vpop.f32.mrb[0].mxu0
      %v435 = vadd.f32 0.0, %v434
      %v436 = vpop.f32.mrb[0].mxu0
      %437 = vdwg.mxu0
      %v438 = vadd.f32 %v340, %v424
      %v439 = vadd.f32 %v341, %v427
      %v440 = vadd.f32 %v342, %v432
      %v441 = vadd.f32 %v343, %v435
      %442 = vst.msk [vmem:[#allocation2] sm:$0xff] %vm280, %v438
      %443 = vst.msk [vmem:[#allocation2 + $0x8] sm:$0xff] %vm280, %v439
      %444 = vst.msk [vmem:[#allocation2 + $0x10] sm:$0xff] %vm280, %v440
      %445 = vst.msk [vmem:[#allocation2 + $0x18] sm:$0xff] %vm280, %v441
      %v446 = vld [vmem:[#allocation2] sm:$0xff]
      %v447 = vld [vmem:[#allocation2 + $0x8] sm:$0xff]
      %v448 = vld [vmem:[#allocation2 + $0x10] sm:$0xff]
      %v449 = vld [vmem:[#allocation2 + $0x18] sm:$0xff]
      %v450 = vld [vmem:[%s232 + $0xa] sm:$0xff]
      %v451 = vld [vmem:[%s232 + $0x12] sm:$0xff]
      %v452 = vld [vmem:[%s232 + $0x1a] sm:$0xff]
      %v453 = vld [vmem:[%s232 + $0x22] sm:$0xff]
      %v454 = vpack.c.bf16 %v451, %v450
      %v455 = vpack.c.bf16 %v453, %v452
      %s456 = scalar_lea.vmem %s1, 64
      %v457 = vld [vmem:[%s456] sm:$0xf]
      %v458 = vld [vmem:[%s456 + $0x4] sm:$0xf]
      %v459 = vld [vmem:[%s456 + $0x8] sm:$0xf]
      %v460 = vld [vmem:[%s456 + $0xc] sm:$0xf]
      %v461 = vld [vmem:[%s456 + $0x10] sm:$0xf]
      %v462 = vld [vmem:[%s456 + $0x14] sm:$0xf]
      %v463 = vld [vmem:[%s456 + $0x18] sm:$0xf]
      %v464 = vld [vmem:[%s456 + $0x1c] sm:$0xf]
      %v473 = vunpack.c.l.b16 %v457
      %v474 = vunpack.c.l.b16 %v458
      %v475 = vunpack.c.l.b16 %v459
      %v476 = vunpack.c.l.b16 %v460
      %v477 = vunpack.c.l.b16 %v461
      %v478 = vunpack.c.l.b16 %v462
      %v479 = vunpack.c.l.b16 %v463
      %v480 = vunpack.c.l.b16 %v464
      %v481 = vpack.c.b16 %v474, %v473
      %v482 = vpack.c.b16 %v476, %v475
      %v483 = vpack.c.b16 %v478, %v477
      %v484 = vpack.c.b16 %v480, %v479
      %v490 = vsel %vm280, %v454, 0
      %v493 = vsel %vm280, %v455, 0
      %495 = vmatprep.subr.bf16.mxu0 0
      %496 = vmatpush1.bf16.msra.mxu0 %v481
      %497 = vmatprep.subr.bf16.mxu0 0
      %498 = vmatpush1.bf16.msra.mxu0 %v482
      %499 = vmatprep.subr.bf16.mxu0 0
      %500 = vmatpush1.bf16.msra.mxu0 %v483
      %501 = vmatprep.subr.bf16.mxu0 0
      %502 = vmatpush1.bf16.msra.mxu0 %v484
      %503 = vmatprep.subr.bf16.mxu0 0
      %504 = vmatpush1.bf16.msra.mxu0 0
      %505 = vmatprep.subr.bf16.mxu0 0
      %506 = vmatpush1.bf16.msra.mxu0 0
      %507 = vmatprep.subr.bf16.mxu0 0
      %508 = vmatpush1.bf16.msra.mxu0 0
      %509 = vmatprep.subr.bf16.mxu0 0
      %510 = vmatpush1.bf16.msra.mxu0 0
      %511 = vmatprep.subr.bf16.mxu0 0
      %512 = vmatpush1.bf16.msra.mxu0 0
      %513 = vmatprep.subr.bf16.mxu0 0
      %514 = vmatpush1.bf16.msra.mxu0 0
      %515 = vmatprep.subr.bf16.mxu0 0
      %516 = vmatpush1.bf16.msra.mxu0 0
      %517 = vmatprep.subr.bf16.mxu0 0
      %518 = vmatpush1.bf16.msra.mxu0 0
      %519 = vmatprep.subr.bf16.mxu0 0
      %520 = vmatpush1.bf16.msra.mxu0 0
      %521 = vmatprep.subr.bf16.mxu0 0
      %522 = vmatpush1.bf16.msra.mxu0 0
      %523 = vmatprep.subr.bf16.mxu0 0
      %524 = vmatpush1.bf16.msra.mxu0 0
      %525 = vmatprep.subr.bf16.mxu0 0
      %526 = vmatpush1.bf16.msra.mxu0 0
      %527 = vmatprep.mubr.bf16.mxu0 0
      %528 = vmatmul.mubr.bf16.gmra.mrb[0].mxu0 %v490
      %v529 = vpop.f32.mrb[0].mxu0
      %v530 = vadd.f32 0.0, %v529
      %v531 = vpop.f32.mrb[0].mxu0
      %v532 = vpop.f32.mrb[0].mxu0
      %v533 = vadd.f32 0.0, %v532
      %v534 = vpop.f32.mrb[0].mxu0
      %535 = vmatprep.mubr.bf16.mxu0 0
      %536 = vmatmul.mubr.bf16.gmra.mrb[0].mxu0 %v493
      %v537 = vpop.f32.mrb[0].mxu0
      %v538 = vadd.f32 0.0, %v537
      %v539 = vpop.f32.mrb[0].mxu0
      %v540 = vpop.f32.mrb[0].mxu0
      %v541 = vadd.f32 0.0, %v540
      %v542 = vpop.f32.mrb[0].mxu0
      %543 = vdwg.mxu0
      %v544 = vadd.f32 %v446, %v530
      %v545 = vadd.f32 %v447, %v533
      %v546 = vadd.f32 %v448, %v538
      %v547 = vadd.f32 %v449, %v541
      %548 = vst.msk [vmem:[#allocation2] sm:$0xff] %vm280, %v544
      %549 = vst.msk [vmem:[#allocation2 + $0x8] sm:$0xff] %vm280, %v545
      %550 = vst.msk [vmem:[#allocation2 + $0x10] sm:$0xff] %vm280, %v546
      %551 = vst.msk [vmem:[#allocation2 + $0x18] sm:$0xff] %vm280, %v547
      %v552 = vld [vmem:[#allocation2] sm:$0xff]
      %v553 = vld [vmem:[#allocation2 + $0x8] sm:$0xff]
      %v554 = vld [vmem:[#allocation2 + $0x10] sm:$0xff]
      %v555 = vld [vmem:[#allocation2 + $0x18] sm:$0xff]
      %v556 = vld [vmem:[%s232 + $0x10] sm:$0xff]
      %v557 = vld [vmem:[%s232 + $0x18] sm:$0xff]
      %v558 = vld [vmem:[%s232 + $0x20] sm:$0xff]
      %v559 = vld [vmem:[%s232 + $0x28] sm:$0xff]
      %v560 = vpack.c.bf16 %v557, %v556
      %v561 = vpack.c.bf16 %v559, %v558
      %s562 = scalar_lea.vmem %s1, 96
      %v563 = vld [vmem:[%s562] sm:$0xf]
      %v564 = vld [vmem:[%s562 + $0x4] sm:$0xf]
      %v565 = vld [vmem:[%s562 + $0x8] sm:$0xf]
      %v566 = vld [vmem:[%s562 + $0xc] sm:$0xf]
      %v567 = vld [vmem:[%s562 + $0x10] sm:$0xf]
      %v568 = vld [vmem:[%s562 + $0x14] sm:$0xf]
      %v569 = vld [vmem:[%s562 + $0x18] sm:$0xf]
      %v570 = vld [vmem:[%s562 + $0x1c] sm:$0xf]
      %v579 = vunpack.c.l.b16 %v563
      %v580 = vunpack.c.l.b16 %v564
      %v581 = vunpack.c.l.b16 %v565
      %v582 = vunpack.c.l.b16 %v566
      %v583 = vunpack.c.l.b16 %v567
      %v584 = vunpack.c.l.b16 %v568
      %v585 = vunpack.c.l.b16 %v569
      %v586 = vunpack.c.l.b16 %v570
      %v587 = vpack.c.b16 %v580, %v579
      %v588 = vpack.c.b16 %v582, %v581
      %v589 = vpack.c.b16 %v584, %v583
      %v590 = vpack.c.b16 %v586, %v585
      %v596 = vsel %vm280, %v560, 0
      %v599 = vsel %vm280, %v561, 0
      %601 = vmatprep.subr.bf16.mxu0 0
      %602 = vmatpush1.bf16.msra.mxu0 %v587
      %603 = vmatprep.subr.bf16.mxu0 0
      %604 = vmatpush1.bf16.msra.mxu0 %v588
      %605 = vmatprep.subr.bf16.mxu0 0
      %606 = vmatpush1.bf16.msra.mxu0 %v589
      %607 = vmatprep.subr.bf16.mxu0 0
      %608 = vmatpush1.bf16.msra.mxu0 %v590
      %609 = vmatprep.subr.bf16.mxu0 0
      %610 = vmatpush1.bf16.msra.mxu0 0
      %611 = vmatprep.subr.bf16.mxu0 0
      %612 = vmatpush1.bf16.msra.mxu0 0
      %613 = vmatprep.subr.bf16.mxu0 0
      %614 = vmatpush1.bf16.msra.mxu0 0
      %615 = vmatprep.subr.bf16.mxu0 0
      %616 = vmatpush1.bf16.msra.mxu0 0
      %617 = vmatprep.subr.bf16.mxu0 0
      %618 = vmatpush1.bf16.msra.mxu0 0
      %619 = vmatprep.subr.bf16.mxu0 0
      %620 = vmatpush1.bf16.msra.mxu0 0
      %621 = vmatprep.subr.bf16.mxu0 0
      %622 = vmatpush1.bf16.msra.mxu0 0
      %623 = vmatprep.subr.bf16.mxu0 0
      %624 = vmatpush1.bf16.msra.mxu0 0
      %625 = vmatprep.subr.bf16.mxu0 0
      %626 = vmatpush1.bf16.msra.mxu0 0
      %627 = vmatprep.subr.bf16.mxu0 0
      %628 = vmatpush1.bf16.msra.mxu0 0
      %629 = vmatprep.subr.bf16.mxu0 0
      %630 = vmatpush1.bf16.msra.mxu0 0
      %631 = vmatprep.subr.bf16.mxu0 0
      %632 = vmatpush1.bf16.msra.mxu0 0
      %633 = vmatprep.mubr.bf16.mxu0 0
      %634 = vmatmul.mubr.bf16.gmra.mrb[0].mxu0 %v596
      %v635 = vpop.f32.mrb[0].mxu0
      %v636 = vadd.f32 0.0, %v635
      %v637 = vpop.f32.mrb[0].mxu0
      %v638 = vpop.f32.mrb[0].mxu0
      %v639 = vadd.f32 0.0, %v638
      %v640 = vpop.f32.mrb[0].mxu0
      %641 = vmatprep.mubr.bf16.mxu0 0
      %642 = vmatmul.mubr.bf16.gmra.mrb[0].mxu0 %v599
      %v643 = vpop.f32.mrb[0].mxu0
      %v644 = vadd.f32 0.0, %v643
      %v645 = vpop.f32.mrb[0].mxu0
      %v646 = vpop.f32.mrb[0].mxu0
      %v647 = vadd.f32 0.0, %v646
      %v648 = vpop.f32.mrb[0].mxu0
      %649 = vdwg.mxu0
      %v650 = vadd.f32 %v552, %v636
      %v651 = vadd.f32 %v553, %v639
      %v652 = vadd.f32 %v554, %v644
      %v653 = vadd.f32 %v555, %v647
      %654 = vst.msk [vmem:[#allocation2] sm:$0xff] %vm280, %v650
      %655 = vst.msk [vmem:[#allocation2 + $0x8] sm:$0xff] %vm280, %v651
      %656 = vst.msk [vmem:[#allocation2 + $0x10] sm:$0xff] %vm280, %v652
      %657 = vst.msk [vmem:[#allocation2 + $0x18] sm:$0xff] %vm280, %v653
      %v658 = vld [vmem:[#allocation2] sm:$0xff]
      %v659 = vld [vmem:[#allocation2 + $0x8] sm:$0xff]
      %v660 = vld [vmem:[#allocation2 + $0x10] sm:$0xff]
      %v661 = vld [vmem:[#allocation2 + $0x18] sm:$0xff]
      %v662 = vld [vmem:[%s232 + $0x11] sm:$0xff]
      %v663 = vld [vmem:[%s232 + $0x19] sm:$0xff]
      %v664 = vld [vmem:[%s232 + $0x21] sm:$0xff]
      %v665 = vld [vmem:[%s232 + $0x29] sm:$0xff]
      %v666 = vpack.c.bf16 %v663, %v662
      %v667 = vpack.c.bf16 %v665, %v664
      %s668 = scalar_lea.vmem %s1, 128
      %v669 = vld [vmem:[%s668] sm:$0xf]
      %v670 = vld [vmem:[%s668 + $0x4] sm:$0xf]
      %v671 = vld [vmem:[%s668 + $0x8] sm:$0xf]
      %v672 = vld [vmem:[%s668 + $0xc] sm:$0xf]
      %v673 = vld [vmem:[%s668 + $0x10] sm:$0xf]
      %v674 = vld [vmem:[%s668 + $0x14] sm:$0xf]
      %v675 = vld [vmem:[%s668 + $0x18] sm:$0xf]
      %v676 = vld [vmem:[%s668 + $0x1c] sm:$0xf]
      %v685 = vunpack.c.l.b16 %v669
      %v686 = vunpack.c.l.b16 %v670
      %v687 = vunpack.c.l.b16 %v671
      %v688 = vunpack.c.l.b16 %v672
      %v689 = vunpack.c.l.b16 %v673
      %v690 = vunpack.c.l.b16 %v674
      %v691 = vunpack.c.l.b16 %v675
      %v692 = vunpack.c.l.b16 %v676
      %v693 = vpack.c.b16 %v686, %v685
      %v694 = vpack.c.b16 %v688, %v687
      %v695 = vpack.c.b16 %v690, %v689
      %v696 = vpack.c.b16 %v692, %v691
      %v702 = vsel %vm280, %v666, 0
      %v705 = vsel %vm280, %v667, 0
      %707 = vmatprep.subr.bf16.mxu0 0
      %708 = vmatpush1.bf16.msra.mxu0 %v693
      %709 = vmatprep.subr.bf16.mxu0 0
      %710 = vmatpush1.bf16.msra.mxu0 %v694
      %711 = vmatprep.subr.bf16.mxu0 0
      %712 = vmatpush1.bf16.msra.mxu0 %v695
      %713 = vmatprep.subr.bf16.mxu0 0
      %714 = vmatpush1.bf16.msra.mxu0 %v696
      %715 = vmatprep.subr.bf16.mxu0 0
      %716 = vmatpush1.bf16.msra.mxu0 0
      %717 = vmatprep.subr.bf16.mxu0 0
      %718 = vmatpush1.bf16.msra.mxu0 0
      %719 = vmatprep.subr.bf16.mxu0 0
      %720 = vmatpush1.bf16.msra.mxu0 0
      %721 = vmatprep.subr.bf16.mxu0 0
      %722 = vmatpush1.bf16.msra.mxu0 0
      %723 = vmatprep.subr.bf16.mxu0 0
      %724 = vmatpush1.bf16.msra.mxu0 0
      %725 = vmatprep.subr.bf16.mxu0 0
      %726 = vmatpush1.bf16.msra.mxu0 0
      %727 = vmatprep.subr.bf16.mxu0 0
      %728 = vmatpush1.bf16.msra.mxu0 0
      %729 = vmatprep.subr.bf16.mxu0 0
      %730 = vmatpush1.bf16.msra.mxu0 0
      %731 = vmatprep.subr.bf16.mxu0 0
      %732 = vmatpush1.bf16.msra.mxu0 0
      %733 = vmatprep.subr.bf16.mxu0 0
      %734 = vmatpush1.bf16.msra.mxu0 0
      %735 = vmatprep.subr.bf16.mxu0 0
      %736 = vmatpush1.bf16.msra.mxu0 0
      %737 = vmatprep.subr.bf16.mxu0 0
      %738 = vmatpush1.bf16.msra.mxu0 0
      %739 = vmatprep.mubr.bf16.mxu0 0
      %740 = vmatmul.mubr.bf16.gmra.mrb[0].mxu0 %v702
      %v741 = vpop.f32.mrb[0].mxu0
      %v742 = vadd.f32 0.0, %v741
      %v743 = vpop.f32.mrb[0].mxu0
      %v744 = vpop.f32.mrb[0].mxu0
      %v745 = vadd.f32 0.0, %v744
      %v746 = vpop.f32.mrb[0].mxu0
      %747 = vmatprep.mubr.bf16.mxu0 0
      %748 = vmatmul.mubr.bf16.gmra.mrb[0].mxu0 %v705
      %v749 = vpop.f32.mrb[0].mxu0
      %v750 = vadd.f32 0.0, %v749
      %v751 = vpop.f32.mrb[0].mxu0
      %v752 = vpop.f32.mrb[0].mxu0
      %v753 = vadd.f32 0.0, %v752
      %v754 = vpop.f32.mrb[0].mxu0
      %755 = vdwg.mxu0
      %v756 = vadd.f32 %v658, %v742
      %v757 = vadd.f32 %v659, %v745
      %v758 = vadd.f32 %v660, %v750
      %v759 = vadd.f32 %v661, %v753
      %760 = vst.msk [vmem:[#allocation2] sm:$0xff] %vm280, %v756
      %761 = vst.msk [vmem:[#allocation2 + $0x8] sm:$0xff] %vm280, %v757
      %762 = vst.msk [vmem:[#allocation2 + $0x10] sm:$0xff] %vm280, %v758
      %763 = vst.msk [vmem:[#allocation2 + $0x18] sm:$0xff] %vm280, %v759
      %v764 = vld [vmem:[#allocation2] sm:$0xff]
      %v765 = vld [vmem:[#allocation2 + $0x8] sm:$0xff]
      %v766 = vld [vmem:[#allocation2 + $0x10] sm:$0xff]
      %v767 = vld [vmem:[#allocation2 + $0x18] sm:$0xff]
      %v768 = vld [vmem:[%s232 + $0x12] sm:$0xff]
      %v769 = vld [vmem:[%s232 + $0x1a] sm:$0xff]
      %v770 = vld [vmem:[%s232 + $0x22] sm:$0xff]
      %v771 = vld [vmem:[%s232 + $0x2a] sm:$0xff]
      %v772 = vpack.c.bf16 %v769, %v768
      %v773 = vpack.c.bf16 %v771, %v770
      %s774 = scalar_lea.vmem %s1, 160
      %v775 = vld [vmem:[%s774] sm:$0xf]
      %v776 = vld [vmem:[%s774 + $0x4] sm:$0xf]
      %v777 = vld [vmem:[%s774 + $0x8] sm:$0xf]
      %v778 = vld [vmem:[%s774 + $0xc] sm:$0xf]
      %v779 = vld [vmem:[%s774 + $0x10] sm:$0xf]
      %v780 = vld [vmem:[%s774 + $0x14] sm:$0xf]
      %v781 = vld [vmem:[%s774 + $0x18] sm:$0xf]
      %v782 = vld [vmem:[%s774 + $0x1c] sm:$0xf]
      %v791 = vunpack.c.l.b16 %v775
      %v792 = vunpack.c.l.b16 %v776
      %v793 = vunpack.c.l.b16 %v777
      %v794 = vunpack.c.l.b16 %v778
      %v795 = vunpack.c.l.b16 %v779
      %v796 = vunpack.c.l.b16 %v780
      %v797 = vunpack.c.l.b16 %v781
      %v798 = vunpack.c.l.b16 %v782
      %v799 = vpack.c.b16 %v792, %v791
      %v800 = vpack.c.b16 %v794, %v793
      %v801 = vpack.c.b16 %v796, %v795
      %v802 = vpack.c.b16 %v798, %v797
      %v808 = vsel %vm280, %v772, 0
      %v811 = vsel %vm280, %v773, 0
      %813 = vmatprep.subr.bf16.mxu0 0
      %814 = vmatpush1.bf16.msra.mxu0 %v799
      %815 = vmatprep.subr.bf16.mxu0 0
      %816 = vmatpush1.bf16.msra.mxu0 %v800
      %817 = vmatprep.subr.bf16.mxu0 0
      %818 = vmatpush1.bf16.msra.mxu0 %v801
      %819 = vmatprep.subr.bf16.mxu0 0
      %820 = vmatpush1.bf16.msra.mxu0 %v802
      %821 = vmatprep.subr.bf16.mxu0 0
      %822 = vmatpush1.bf16.msra.mxu0 0
      %823 = vmatprep.subr.bf16.mxu0 0
      %824 = vmatpush1.bf16.msra.mxu0 0
      %825 = vmatprep.subr.bf16.mxu0 0
      %826 = vmatpush1.bf16.msra.mxu0 0
      %827 = vmatprep.subr.bf16.mxu0 0
      %828 = vmatpush1.bf16.msra.mxu0 0
      %829 = vmatprep.subr.bf16.mxu0 0
      %830 = vmatpush1.bf16.msra.mxu0 0
      %831 = vmatprep.subr.bf16.mxu0 0
      %832 = vmatpush1.bf16.msra.mxu0 0
      %833 = vmatprep.subr.bf16.mxu0 0
      %834 = vmatpush1.bf16.msra.mxu0 0
      %835 = vmatprep.subr.bf16.mxu0 0
      %836 = vmatpush1.bf16.msra.mxu0 0
      %837 = vmatprep.subr.bf16.mxu0 0
      %838 = vmatpush1.bf16.msra.mxu0 0
      %839 = vmatprep.subr.bf16.mxu0 0
      %840 = vmatpush1.bf16.msra.mxu0 0
      %841 = vmatprep.subr.bf16.mxu0 0
      %842 = vmatpush1.bf16.msra.mxu0 0
      %843 = vmatprep.subr.bf16.mxu0 0
      %844 = vmatpush1.bf16.msra.mxu0 0
      %845 = vmatprep.mubr.bf16.mxu0 0
      %846 = vmatmul.mubr.bf16.gmra.mrb[0].mxu0 %v808
      %v847 = vpop.f32.mrb[0].mxu0
      %v848 = vadd.f32 0.0, %v847
      %v849 = vpop.f32.mrb[0].mxu0
      %v850 = vpop.f32.mrb[0].mxu0
      %v851 = vadd.f32 0.0, %v850
      %v852 = vpop.f32.mrb[0].mxu0
      %853 = vmatprep.mubr.bf16.mxu0 0
      %854 = vmatmul.mubr.bf16.gmra.mrb[0].mxu0 %v811
      %v855 = vpop.f32.mrb[0].mxu0
      %v856 = vadd.f32 0.0, %v855
      %v857 = vpop.f32.mrb[0].mxu0
      %v858 = vpop.f32.mrb[0].mxu0
      %v859 = vadd.f32 0.0, %v858
      %v860 = vpop.f32.mrb[0].mxu0
      %861 = vdwg.mxu0
      %v862 = vadd.f32 %v764, %v848
      %v863 = vadd.f32 %v765, %v851
      %v864 = vadd.f32 %v766, %v856
      %v865 = vadd.f32 %v767, %v859
      %866 = vst.msk [vmem:[#allocation2] sm:$0xff] %vm280, %v862
      %867 = vst.msk [vmem:[#allocation2 + $0x8] sm:$0xff] %vm280, %v863
      %868 = vst.msk [vmem:[#allocation2 + $0x10] sm:$0xff] %vm280, %v864
      %869 = vst.msk [vmem:[#allocation2 + $0x18] sm:$0xff] %vm280, %v865
      %v870 = vld [vmem:[#allocation2] sm:$0xff]
      %v871 = vld [vmem:[#allocation2 + $0x8] sm:$0xff]
      %v872 = vld [vmem:[#allocation2 + $0x10] sm:$0xff]
      %v873 = vld [vmem:[#allocation2 + $0x18] sm:$0xff]
      %v874 = vld [vmem:[%s232 + $0x18] sm:$0xff]
      %v875 = vld [vmem:[%s232 + $0x20] sm:$0xff]
      %v876 = vld [vmem:[%s232 + $0x28] sm:$0xff]
      %v877 = vld [vmem:[%s232 + $0x30] sm:$0xff]
      %v878 = vpack.c.bf16 %v875, %v874
      %v879 = vpack.c.bf16 %v877, %v876
      %s880 = scalar_lea.vmem %s1, 192
      %v881 = vld [vmem:[%s880] sm:$0xf]
      %v882 = vld [vmem:[%s880 + $0x4] sm:$0xf]
      %v883 = vld [vmem:[%s880 + $0x8] sm:$0xf]
      %v884 = vld [vmem:[%s880 + $0xc] sm:$0xf]
      %v885 = vld [vmem:[%s880 + $0x10] sm:$0xf]
      %v886 = vld [vmem:[%s880 + $0x14] sm:$0xf]
      %v887 = vld [vmem:[%s880 + $0x18] sm:$0xf]
      %v888 = vld [vmem:[%s880 + $0x1c] sm:$0xf]
      %v897 = vunpack.c.l.b16 %v881
      %v898 = vunpack.c.l.b16 %v882
      %v899 = vunpack.c.l.b16 %v883
      %v900 = vunpack.c.l.b16 %v884
      %v901 = vunpack.c.l.b16 %v885
      %v902 = vunpack.c.l.b16 %v886
      %v903 = vunpack.c.l.b16 %v887
      %v904 = vunpack.c.l.b16 %v888
      %v905 = vpack.c.b16 %v898, %v897
      %v906 = vpack.c.b16 %v900, %v899
      %v907 = vpack.c.b16 %v902, %v901
      %v908 = vpack.c.b16 %v904, %v903
      %v914 = vsel %vm280, %v878, 0
      %v917 = vsel %vm280, %v879, 0
      %919 = vmatprep.subr.bf16.mxu0 0
      %920 = vmatpush1.bf16.msra.mxu0 %v905
      %921 = vmatprep.subr.bf16.mxu0 0
      %922 = vmatpush1.bf16.msra.mxu0 %v906
      %923 = vmatprep.subr.bf16.mxu0 0
      %924 = vmatpush1.bf16.msra.mxu0 %v907
      %925 = vmatprep.subr.bf16.mxu0 0
      %926 = vmatpush1.bf16.msra.mxu0 %v908
      %927 = vmatprep.subr.bf16.mxu0 0
      %928 = vmatpush1.bf16.msra.mxu0 0
      %929 = vmatprep.subr.bf16.mxu0 0
      %930 = vmatpush1.bf16.msra.mxu0 0
      %931 = vmatprep.subr.bf16.mxu0 0
      %932 = vmatpush1.bf16.msra.mxu0 0
      %933 = vmatprep.subr.bf16.mxu0 0
      %934 = vmatpush1.bf16.msra.mxu0 0
      %935 = vmatprep.subr.bf16.mxu0 0
      %936 = vmatpush1.bf16.msra.mxu0 0
      %937 = vmatprep.subr.bf16.mxu0 0
      %938 = vmatpush1.bf16.msra.mxu0 0
      %939 = vmatprep.subr.bf16.mxu0 0
      %940 = vmatpush1.bf16.msra.mxu0 0
      %941 = vmatprep.subr.bf16.mxu0 0
      %942 = vmatpush1.bf16.msra.mxu0 0
      %943 = vmatprep.subr.bf16.mxu0 0
      %944 = vmatpush1.bf16.msra.mxu0 0
      %945 = vmatprep.subr.bf16.mxu0 0
      %946 = vmatpush1.bf16.msra.mxu0 0
      %947 = vmatprep.subr.bf16.mxu0 0
      %948 = vmatpush1.bf16.msra.mxu0 0
      %949 = vmatprep.subr.bf16.mxu0 0
      %950 = vmatpush1.bf16.msra.mxu0 0
      %951 = vmatprep.mubr.bf16.mxu0 0
      %952 = vmatmul.mubr.bf16.gmra.mrb[0].mxu0 %v914
      %v953 = vpop.f32.mrb[0].mxu0
      %v954 = vadd.f32 0.0, %v953
      %v955 = vpop.f32.mrb[0].mxu0
      %v956 = vpop.f32.mrb[0].mxu0
      %v957 = vadd.f32 0.0, %v956
      %v958 = vpop.f32.mrb[0].mxu0
      %959 = vmatprep.mubr.bf16.mxu0 0
      %960 = vmatmul.mubr.bf16.gmra.mrb[0].mxu0 %v917
      %v961 = vpop.f32.mrb[0].mxu0
      %v962 = vadd.f32 0.0, %v961
      %v963 = vpop.f32.mrb[0].mxu0
      %v964 = vpop.f32.mrb[0].mxu0
      %v965 = vadd.f32 0.0, %v964
      %v966 = vpop.f32.mrb[0].mxu0
      %967 = vdwg.mxu0
      %v968 = vadd.f32 %v870, %v954
      %v969 = vadd.f32 %v871, %v957
      %v970 = vadd.f32 %v872, %v962
      %v971 = vadd.f32 %v873, %v965
      %972 = vst.msk [vmem:[#allocation2] sm:$0xff] %vm280, %v968
      %973 = vst.msk [vmem:[#allocation2 + $0x8] sm:$0xff] %vm280, %v969
      %974 = vst.msk [vmem:[#allocation2 + $0x10] sm:$0xff] %vm280, %v970
      %975 = vst.msk [vmem:[#allocation2 + $0x18] sm:$0xff] %vm280, %v971
      %v976 = vld [vmem:[#allocation2] sm:$0xff]
      %v977 = vld [vmem:[#allocation2 + $0x8] sm:$0xff]
      %v978 = vld [vmem:[#allocation2 + $0x10] sm:$0xff]
      %v979 = vld [vmem:[#allocation2 + $0x18] sm:$0xff]
      %v980 = vld [vmem:[%s232 + $0x19] sm:$0xff]
      %v981 = vld [vmem:[%s232 + $0x21] sm:$0xff]
      %v982 = vld [vmem:[%s232 + $0x29] sm:$0xff]
      %v983 = vld [vmem:[%s232 + $0x31] sm:$0xff]
      %v984 = vpack.c.bf16 %v981, %v980
      %v985 = vpack.c.bf16 %v983, %v982
      %s986 = scalar_lea.vmem %s1, 224
      %v987 = vld [vmem:[%s986] sm:$0xf]
      %v988 = vld [vmem:[%s986 + $0x4] sm:$0xf]
      %v989 = vld [vmem:[%s986 + $0x8] sm:$0xf]
      %v990 = vld [vmem:[%s986 + $0xc] sm:$0xf]
      %v991 = vld [vmem:[%s986 + $0x10] sm:$0xf]
      %v992 = vld [vmem:[%s986 + $0x14] sm:$0xf]
      %v993 = vld [vmem:[%s986 + $0x18] sm:$0xf]
      %v994 = vld [vmem:[%s986 + $0x1c] sm:$0xf]
      %v1003 = vunpack.c.l.b16 %v987
      %v1004 = vunpack.c.l.b16 %v988
      %v1005 = vunpack.c.l.b16 %v989
      %v1006 = vunpack.c.l.b16 %v990
      %v1007 = vunpack.c.l.b16 %v991
      %v1008 = vunpack.c.l.b16 %v992
      %v1009 = vunpack.c.l.b16 %v993
      %v1010 = vunpack.c.l.b16 %v994
      %v1011 = vpack.c.b16 %v1004, %v1003
      %v1012 = vpack.c.b16 %v1006, %v1005
      %v1013 = vpack.c.b16 %v1008, %v1007
      %v1014 = vpack.c.b16 %v1010, %v1009
      %v1020 = vsel %vm280, %v984, 0
      %v1023 = vsel %vm280, %v985, 0
      %1025 = vmatprep.subr.bf16.mxu0 0
      %1026 = vmatpush1.bf16.msra.mxu0 %v1011
      %1027 = vmatprep.subr.bf16.mxu0 0
      %1028 = vmatpush1.bf16.msra.mxu0 %v1012
      %1029 = vmatprep.subr.bf16.mxu0 0
      %1030 = vmatpush1.bf16.msra.mxu0 %v1013
      %1031 = vmatprep.subr.bf16.mxu0 0
      %1032 = vmatpush1.bf16.msra.mxu0 %v1014
      %1033 = vmatprep.subr.bf16.mxu0 0
      %1034 = vmatpush1.bf16.msra.mxu0 0
      %1035 = vmatprep.subr.bf16.mxu0 0
      %1036 = vmatpush1.bf16.msra.mxu0 0
      %1037 = vmatprep.subr.bf16.mxu0 0
      %1038 = vmatpush1.bf16.msra.mxu0 0
      %1039 = vmatprep.subr.bf16.mxu0 0
      %1040 = vmatpush1.bf16.msra.mxu0 0
      %1041 = vmatprep.subr.bf16.mxu0 0
      %1042 = vmatpush1.bf16.msra.mxu0 0
      %1043 = vmatprep.subr.bf16.mxu0 0
      %1044 = vmatpush1.bf16.msra.mxu0 0
      %1045 = vmatprep.subr.bf16.mxu0 0
      %1046 = vmatpush1.bf16.msra.mxu0 0
      %1047 = vmatprep.subr.bf16.mxu0 0
      %1048 = vmatpush1.bf16.msra.mxu0 0
      %1049 = vmatprep.subr.bf16.mxu0 0
      %1050 = vmatpush1.bf16.msra.mxu0 0
      %1051 = vmatprep.subr.bf16.mxu0 0
      %1052 = vmatpush1.bf16.msra.mxu0 0
      %1053 = vmatprep.subr.bf16.mxu0 0
      %1054 = vmatpush1.bf16.msra.mxu0 0
      %1055 = vmatprep.subr.bf16.mxu0 0
      %1056 = vmatpush1.bf16.msra.mxu0 0
      %1057 = vmatprep.mubr.bf16.mxu0 0
      %1058 = vmatmul.mubr.bf16.gmra.mrb[0].mxu0 %v1020
      %v1059 = vpop.f32.mrb[0].mxu0
      %v1060 = vadd.f32 0.0, %v1059
      %v1061 = vpop.f32.mrb[0].mxu0
      %v1062 = vpop.f32.mrb[0].mxu0
      %v1063 = vadd.f32 0.0, %v1062
      %v1064 = vpop.f32.mrb[0].mxu0
      %1065 = vmatprep.mubr.bf16.mxu0 0
      %1066 = vmatmul.mubr.bf16.gmra.mrb[0].mxu0 %v1023
      %v1067 = vpop.f32.mrb[0].mxu0
      %v1068 = vadd.f32 0.0, %v1067
      %v1069 = vpop.f32.mrb[0].mxu0
      %v1070 = vpop.f32.mrb[0].mxu0
      %v1071 = vadd.f32 0.0, %v1070
      %v1072 = vpop.f32.mrb[0].mxu0
      %1073 = vdwg.mxu0
      %v1074 = vadd.f32 %v976, %v1060
      %v1075 = vadd.f32 %v977, %v1063
      %v1076 = vadd.f32 %v978, %v1068
      %v1077 = vadd.f32 %v979, %v1071
      %1078 = vst.msk [vmem:[#allocation2] sm:$0xff] %vm280, %v1074
      %1079 = vst.msk [vmem:[#allocation2 + $0x8] sm:$0xff] %vm280, %v1075
      %1080 = vst.msk [vmem:[#allocation2 + $0x10] sm:$0xff] %vm280, %v1076
      %1081 = vst.msk [vmem:[#allocation2 + $0x18] sm:$0xff] %vm280, %v1077
      %v1082 = vld [vmem:[#allocation2] sm:$0xff]
      %v1083 = vld [vmem:[#allocation2 + $0x8] sm:$0xff]
      %v1084 = vld [vmem:[#allocation2 + $0x10] sm:$0xff]
      %v1085 = vld [vmem:[#allocation2 + $0x18] sm:$0xff]
      %v1086 = vld [vmem:[%s232 + $0x1a] sm:$0xff]
      %v1087 = vld [vmem:[%s232 + $0x22] sm:$0xff]
      %v1088 = vld [vmem:[%s232 + $0x2a] sm:$0xff]
      %v1089 = vld [vmem:[%s232 + $0x32] sm:$0xff]
      %v1090 = vpack.c.bf16 %v1087, %v1086
      %v1091 = vpack.c.bf16 %v1089, %v1088
      %s1092 = scalar_lea.vmem %s1, 256
      %v1093 = vld [vmem:[%s1092] sm:$0xf]
      %v1094 = vld [vmem:[%s1092 + $0x4] sm:$0xf]
      %v1095 = vld [vmem:[%s1092 + $0x8] sm:$0xf]
      %v1096 = vld [vmem:[%s1092 + $0xc] sm:$0xf]
      %v1097 = vld [vmem:[%s1092 + $0x10] sm:$0xf]
      %v1098 = vld [vmem:[%s1092 + $0x14] sm:$0xf]
      %v1099 = vld [vmem:[%s1092 + $0x18] sm:$0xf]
      %v1100 = vld [vmem:[%s1092 + $0x1c] sm:$0xf]
      %v1109 = vunpack.c.l.b16 %v1093
      %v1110 = vunpack.c.l.b16 %v1094
      %v1111 = vunpack.c.l.b16 %v1095
      %v1112 = vunpack.c.l.b16 %v1096
      %v1113 = vunpack.c.l.b16 %v1097
      %v1114 = vunpack.c.l.b16 %v1098
      %v1115 = vunpack.c.l.b16 %v1099
      %v1116 = vunpack.c.l.b16 %v1100
      %v1117 = vpack.c.b16 %v1110, %v1109
      %v1118 = vpack.c.b16 %v1112, %v1111
      %v1119 = vpack.c.b16 %v1114, %v1113
      %v1120 = vpack.c.b16 %v1116, %v1115
      %v1126 = vsel %vm280, %v1090, 0
      %v1129 = vsel %vm280, %v1091, 0
      %1131 = vmatprep.subr.bf16.mxu0 0
      %1132 = vmatpush1.bf16.msra.mxu0 %v1117
      %1133 = vmatprep.subr.bf16.mxu0 0
      %1134 = vmatpush1.bf16.msra.mxu0 %v1118
      %1135 = vmatprep.subr.bf16.mxu0 0
      %1136 = vmatpush1.bf16.msra.mxu0 %v1119
      %1137 = vmatprep.subr.bf16.mxu0 0
      %1138 = vmatpush1.bf16.msra.mxu0 %v1120
      %1139 = vmatprep.subr.bf16.mxu0 0
      %1140 = vmatpush1.bf16.msra.mxu0 0
      %1141 = vmatprep.subr.bf16.mxu0 0
      %1142 = vmatpush1.bf16.msra.mxu0 0
      %1143 = vmatprep.subr.bf16.mxu0 0
      %1144 = vmatpush1.bf16.msra.mxu0 0
      %1145 = vmatprep.subr.bf16.mxu0 0
      %1146 = vmatpush1.bf16.msra.mxu0 0
      %1147 = vmatprep.subr.bf16.mxu0 0
      %1148 = vmatpush1.bf16.msra.mxu0 0
      %1149 = vmatprep.subr.bf16.mxu0 0
      %1150 = vmatpush1.bf16.msra.mxu0 0
      %1151 = vmatprep.subr.bf16.mxu0 0
      %1152 = vmatpush1.bf16.msra.mxu0 0
      %1153 = vmatprep.subr.bf16.mxu0 0
      %1154 = vmatpush1.bf16.msra.mxu0 0
      %1155 = vmatprep.subr.bf16.mxu0 0
      %1156 = vmatpush1.bf16.msra.mxu0 0
      %1157 = vmatprep.subr.bf16.mxu0 0
      %1158 = vmatpush1.bf16.msra.mxu0 0
      %1159 = vmatprep.subr.bf16.mxu0 0
      %1160 = vmatpush1.bf16.msra.mxu0 0
      %1161 = vmatprep.subr.bf16.mxu0 0
      %1162 = vmatpush1.bf16.msra.mxu0 0
      %1163 = vmatprep.mubr.bf16.mxu0 0
      %1164 = vmatmul.mubr.bf16.gmra.mrb[0].mxu0 %v1126
      %v1165 = vpop.f32.mrb[0].mxu0
      %v1166 = vadd.f32 0.0, %v1165
      %v1167 = vpop.f32.mrb[0].mxu0
      %v1168 = vpop.f32.mrb[0].mxu0
      %v1169 = vadd.f32 0.0, %v1168
      %v1170 = vpop.f32.mrb[0].mxu0
      %1171 = vmatprep.mubr.bf16.mxu0 0
      %1172 = vmatmul.mubr.bf16.gmra.mrb[0].mxu0 %v1129
      %v1173 = vpop.f32.mrb[0].mxu0
      %v1174 = vadd.f32 0.0, %v1173
      %v1175 = vpop.f32.mrb[0].mxu0
      %v1176 = vpop.f32.mrb[0].mxu0
      %v1177 = vadd.f32 0.0, %v1176
      %v1178 = vpop.f32.mrb[0].mxu0
      %1179 = vdwg.mxu0
      %v1180 = vadd.f32 %v1082, %v1166
      %v1181 = vadd.f32 %v1083, %v1169
      %v1182 = vadd.f32 %v1084, %v1174
      %v1183 = vadd.f32 %v1085, %v1177
      %1184 = vst.msk [vmem:[#allocation2] sm:$0xff] %vm280, %v1180
      %1185 = vst.msk [vmem:[#allocation2 + $0x8] sm:$0xff] %vm280, %v1181
      %1186 = vst.msk [vmem:[#allocation2 + $0x10] sm:$0xff] %vm280, %v1182
      %1187 = vst.msk [vmem:[#allocation2 + $0x18] sm:$0xff] %vm280, %v1183
      %v1188 = vld [vmem:[#allocation2] sm:$0xff]
      %v1189 = vld [vmem:[#allocation2 + $0x8] sm:$0xff]
      %v1190 = vld [vmem:[#allocation2 + $0x10] sm:$0xff]
      %v1191 = vld [vmem:[#allocation2 + $0x18] sm:$0xff]
      %v1192 = vld [vmem:[%s2] sm:$0x1]
      %v1194 = vlaneseq
      %v1195 = vshrl.u32 %v1194, 7
      %v1196 = vsub.s32 0, %v1195
      %v1197 = vrot.slane %v1192, %v1196
      %v1199 = vmul.f32 %v1188, %v1197
      %v1200 = vmul.f32 %v1189, %v1197
      %v1201 = vmul.f32 %v1190, %v1197
      %v1202 = vmul.f32 %v1191, %v1197
      %v1203 = vld [vmem:[%s3] sm:$0x1]
      %v1205 = vlaneseq
      %v1206 = vshrl.u32 %v1205, 7
      %v1207 = vsub.s32 0, %v1206
      %v1208 = vrot.slane %v1203, %v1207
      %v1210 = vadd.f32 %v1199, %v1208
      %v1211 = vadd.f32 %v1200, %v1208
      %v1212 = vadd.f32 %v1201, %v1208
      %v1213 = vadd.f32 %v1202, %v1208
      %v1214 = vld [vmem:[%s237] sm:$0xff]
      %v1215 = vld [vmem:[%s237 + $0x8] sm:$0xff]
      %v1216 = vld [vmem:[%s237 + $0x10] sm:$0xff]
      %v1217 = vld [vmem:[%s237 + $0x18] sm:$0xff]
      %v1218 = vadd.f32 %v1210, %v1214
      %v1219 = vadd.f32 %v1211, %v1215
      %v1220 = vadd.f32 %v1212, %v1216
      %v1221 = vadd.f32 %v1213, %v1217
      %v1222 = vmax.f32 %v1218, 0.0
      %v1223 = vmax.f32 %v1219, 0.0
      %v1224 = vmax.f32 %v1220, 0.0
      %v1225 = vmax.f32 %v1221, 0.0
      %v1226 = vlaneseq
      %v1227 = vshrl.u32 %v1226, 7
      %v1228 = vadd.s32 %v1227, 8
      %v1229 = vadd.s32 %v1227, 16
      %v1230 = vadd.s32 %v1227, 24
      %vm1231 = vcmp.lt.s32.totalorder %v1227, 0
      %v1232 = vsub.s32 0, %v1227
      %v1233 = vsel %vm1231, %v1232, %v1227
      %v1234 = vshrl.u32 %v1233, 3
      %v1235 = vand.u32 %v1233, 7
      %v1236 = vsub.s32 0, %v1235
      %v1237 = vsel %vm1231, %v1236, %v1235
      %vm1238 = vcmp.lt.s32.totalorder %v1228, 0
      %v1239 = vsub.s32 0, %v1228
      %v1240 = vsel %vm1238, %v1239, %v1228
      %v1241 = vshrl.u32 %v1240, 3
      %v1242 = vand.u32 %v1240, 7
      %v1243 = vsub.s32 0, %v1242
      %v1244 = vsel %vm1238, %v1243, %v1242
      %vm1245 = vcmp.lt.s32.totalorder %v1229, 0
      %v1246 = vsub.s32 0, %v1229
      %v1247 = vsel %vm1245, %v1246, %v1229
      %v1248 = vshrl.u32 %v1247, 3
      %v1249 = vand.u32 %v1247, 7
      %v1250 = vsub.s32 0, %v1249
      %v1251 = vsel %vm1245, %v1250, %v1249
      %vm1252 = vcmp.lt.s32.totalorder %v1230, 0
      %v1253 = vsub.s32 0, %v1230
      %v1254 = vsel %vm1252, %v1253, %v1230
      %v1255 = vshrl.u32 %v1254, 3
      %v1256 = vand.u32 %v1254, 7
      %v1257 = vsub.s32 0, %v1256
      %v1258 = vsel %vm1252, %v1257, %v1256
      %vm1259 = vcmp.ne.s32.totalorder %v1237, 0
      %vm1260 = vcmp.ne.s32.totalorder %v1244, 0
      %vm1261 = vcmp.ne.s32.totalorder %v1251, 0
      %vm1262 = vcmp.ne.s32.totalorder %v1258, 0
      %vm1263 = vcmp.lt.s32.totalorder %v1237, 0
      %vm1264 = vcmp.lt.s32.totalorder %v1244, 0
      %vm1265 = vcmp.lt.s32.totalorder %v1251, 0
      %vm1266 = vcmp.lt.s32.totalorder %v1258, 0
      %vm1267 = vmand %vm1263, %vm1259
      %vm1268 = vmand %vm1264, %vm1260
      %vm1269 = vmand %vm1265, %vm1261
      %vm1270 = vmand %vm1266, %vm1262
      %v1271 = vadd.s32 %v1237, 8
      %v1272 = vadd.s32 %v1244, 8
      %v1273 = vadd.s32 %v1251, 8
      %v1274 = vadd.s32 %v1258, 8
      %v1275 = vsel %vm1267, %v1271, %v1237
      %v1276 = vsel %vm1268, %v1272, %v1244
      %v1277 = vsel %vm1269, %v1273, %v1251
      %v1278 = vsel %vm1270, %v1274, %v1258
      %vm1279 = vcmp.ge.s32.totalorder %v1275, 1
      %vm1280 = vcmp.ge.s32.totalorder %v1276, 1
      %vm1281 = vcmp.ge.s32.totalorder %v1277, 1
      %vm1282 = vcmp.ge.s32.totalorder %v1278, 1
      %vm1283 = vcmp.le.s32.totalorder %v1275, 4
      %vm1284 = vcmp.le.s32.totalorder %v1276, 4
      %vm1285 = vcmp.le.s32.totalorder %v1277, 4
      %vm1286 = vcmp.le.s32.totalorder %v1278, 4
      %vm1287 = vmand %vm1279, %vm1283
      %vm1288 = vmand %vm1280, %vm1284
      %vm1289 = vmand %vm1281, %vm1285
      %vm1290 = vmand %vm1282, %vm1286
      %v1291 = vsel %vm1287, %v1222, 0.0
      %v1292 = vsel %vm1288, %v1223, 0.0
      %v1293 = vsel %vm1289, %v1224, 0.0
      %v1294 = vsel %vm1290, %v1225, 0.0
      %v1295 = vsel %vm280, %v1291, 0.0
      %v1296 = vsel %vm280, %v1292, 0.0
      %v1297 = vadd.f32 %v1295, %v1296
      %v1298 = vsel %vm280, %v1293, 0.0
      %v1299 = vadd.f32 %v1297, %v1298
      %v1300 = vsel %vm280, %v1294, 0.0
      %v1301 = vadd.f32 %v1299, %v1300
      %v1302 = vrot.slane %v1301, 4
      %v1303 = vadd.f32 %v1301, %v1302
      %v1304 = vrot.slane %v1303, 2
      %v1305 = vadd.f32 %v1303, %v1304
      %v1306 = vrot.slane %v1305, 1
      %v1307 = vadd.f32 %v1305, %v1306
      %v1308 = vmul.f32 %v1307, 0.0625
      %vm1309 = vcmask 516096
      %1310 = vst.msk [vmem:[%s240] sm:$0x1] %vm1309, %v1308
      %p1311 = scmp.lt.s32.totalorder %s16, 1
      %s1312 = scalar_select %p1311, %s16, 1
      %s1313 = scalar_lea.vmem %s5, %s1312
      // Predicated region
      $region41: #{covidx_forward.8} parent=39 // pred_check
        %p1314 = pneg %p149
      $region42: #{covidx_forward.8} parent=39 // pred_check_branch
        %1316 = sbr.rel (%p1314) target = $region44
      $region43: #{covidx_forward.8} parent=39 // pred_region
        _
      $region44: #{covidx_forward.8} parent=39 // pred_fallthru
        _
    $region40: #{covidx_forward.8} parent=5 // pred_fallthru
      _
    %p1317 = scmp.le.s32.totalorder 2, %s11
    // Predicated region
    $region45: #{covidx_forward.8} parent=5 // pred_check
      %p1318 = pneg %p1317
    $region46: #{covidx_forward.8} parent=5 // pred_check_branch
      %1320 = sbr.rel (%p1318) target = $region48
    $region47: #{covidx_forward.8} parent=5 // pred_region
      %s1321 = ssub.s32 %s11, 2
      // Predicated region
      $region49: #{covidx_forward.8} parent=47 // pred_check
        %p1322 = pneg %p155
      $region50: #{covidx_forward.8} parent=47 // pred_check_branch
        %1324 = sbr.rel (%p1322) target = $region52
      $region51: #{covidx_forward.8} parent=47 // pred_region
        %p1325 = scmp.lt.s32.totalorder %s17, 1
        %s1326 = scalar_select %p1325, %s17, 1
        %s1327 = scalar_lea.vmem %s5, %s1326
      $region52: #{covidx_forward.8} parent=47 // pred_fallthru
        _
    $region48: #{covidx_forward.8} parent=5 // pred_fallthru
      _
  $region6: #{covidx_forward.8} parent=0 // loop_footer
    %s15 = sadd.s32 1, %s11
  $region7: #{covidx_forward.8} parent=0 // loop_footer_branch
    %10 = sbr.rel target = $region3
  $region8: #{covidx_forward.8} parent=0 // loop_exit
    _

// kernel: covidx_forward.9
$region0: #{covidx_forward.9}
  #allocation0 [shape = 'u32[]', space=smem, size = 0x4, offset = 0x4, fixed_abs, tag = 'smem constant byte address 0x4 - core index']
  #allocation1 [shape = 'u32[144,128]{1,0:T(1,128)}', space=vmem, size = 0x12000, scoped, tag = 'internal scratch']
  %s0 = inlined_call_operand.vmem [shape: bf16[2,64], index: 0, kind: input, shape index: {}]
  %s1 = inlined_call_operand.vmem [shape: bf16[64,512], index: 1, kind: input, shape index: {}]
  %s2 = inlined_call_operand.vmem [shape: f32[1,512], index: 2, kind: input, shape index: {}]
  %s3 = inlined_call_operand.vmem [shape: bf16[512,1024], index: 3, kind: input, shape index: {}]
  %s4 = inlined_call_operand.vmem [shape: f32[1,1024], index: 4, kind: input, shape index: {}]
  %s5 = inlined_call_operand.vmem [shape: bf16[1024,128], index: 5, kind: input, shape index: {}]
  %s6 = inlined_call_operand.vmem [shape: f32[1,128], index: 6, kind: input, shape index: {}]
  %s7 = inlined_call_operand.vmem [shape: f32[2,128], index: 7, kind: output, shape index: {}]
  %s8 = sld [smem:[#allocation0]]
  $region38: #{covidx_forward.9} parent=0
    _
  %s10 = ssub.s32 1, %s8
  %s11 = scalar_select 0, %s10, %s8
  // Predicated region
  $region2: #{covidx_forward.9} parent=0 // pred_check
    _
  $region3: #{covidx_forward.9} parent=0 // pred_check_branch
    %13 = sbr.rel (0) target = $region5
  $region4: #{covidx_forward.9} parent=0 // pred_region
    _
  $region5: #{covidx_forward.9} parent=0 // pred_fallthru
    _
  // Predicated region
  $region6: #{covidx_forward.9} parent=0 // pred_check
    _
  $region7: #{covidx_forward.9} parent=0 // pred_check_branch
    %15 = sbr.rel (0) target = $region9
  $region8: #{covidx_forward.9} parent=0 // pred_region
    _
  $region9: #{covidx_forward.9} parent=0 // pred_fallthru
    _
  // Predicated region
  $region10: #{covidx_forward.9} parent=0 // pred_check
    _
  $region11: #{covidx_forward.9} parent=0 // pred_check_branch
    %17 = sbr.rel (0) target = $region13
  $region12: #{covidx_forward.9} parent=0 // pred_region
    _
  $region13: #{covidx_forward.9} parent=0 // pred_fallthru
    _
  // Predicated region
  $region14: #{covidx_forward.9} parent=0 // pred_check
    _
  $region15: #{covidx_forward.9} parent=0 // pred_check_branch
    %19 = sbr.rel (0) target = $region17
  $region16: #{covidx_forward.9} parent=0 // pred_region
    _
  $region17: #{covidx_forward.9} parent=0 // pred_fallthru
    _
  // Predicated region
  $region18: #{covidx_forward.9} parent=0 // pred_check
    _
  $region19: #{covidx_forward.9} parent=0 // pred_check_branch
    %21 = sbr.rel (0) target = $region21
  $region20: #{covidx_forward.9} parent=0 // pred_region
    _
  $region21: #{covidx_forward.9} parent=0 // pred_fallthru
    _
  // Predicated region
  $region22: #{covidx_forward.9} parent=0 // pred_check
    _
  $region23: #{covidx_forward.9} parent=0 // pred_check_branch
    %23 = sbr.rel (0) target = $region25
  $region24: #{covidx_forward.9} parent=0 // pred_region
    _
  $region25: #{covidx_forward.9} parent=0 // pred_fallthru
    _
  // Predicated region
  $region26: #{covidx_forward.9} parent=0 // pred_check
    _
  $region27: #{covidx_forward.9} parent=0 // pred_check_branch
    %25 = sbr.rel (0) target = $region29
  $region28: #{covidx_forward.9} parent=0 // pred_region
    _
  $region29: #{covidx_forward.9} parent=0 // pred_fallthru
    _
  %v27 = vld [vmem:[%s0] sm:$0x1]
  %v28 = vld [vmem:[%s1] sm:$0xff]
  %v29 = vld [vmem:[%s1 + $0x8] sm:$0xff]
  %v30 = vld [vmem:[%s1 + $0x10] sm:$0xff]
  %v31 = vld [vmem:[%s1 + $0x18] sm:$0xff]
  %v32 = vld [vmem:[%s1 + $0x20] sm:$0xff]
  %v33 = vld [vmem:[%s1 + $0x28] sm:$0xff]
  %v34 = vld [vmem:[%s1 + $0x30] sm:$0xff]
  %v35 = vld [vmem:[%s1 + $0x38] sm:$0xff]
  %v36 = vld [vmem:[%s1 + $0x40] sm:$0xff]
  %v37 = vld [vmem:[%s1 + $0x48] sm:$0xff]
  %v38 = vld [vmem:[%s1 + $0x50] sm:$0xff]
  %v39 = vld [vmem:[%s1 + $0x58] sm:$0xff]
  %v40 = vld [vmem:[%s1 + $0x60] sm:$0xff]
  %v41 = vld [vmem:[%s1 + $0x68] sm:$0xff]
  %v42 = vld [vmem:[%s1 + $0x70] sm:$0xff]
  %v43 = vld [vmem:[%s1 + $0x78] sm:$0xff]
  %v44 = vld [vmem:[%s2] sm:$0xf]
  %v46 = vlaneseq
  %v47 = vshrl.u32 %v46, 7
  %v48 = vsub.s32 0, %v47
  %v49 = vrot.slane %v44, %v48
  %v50 = vlaneseq
  %v51 = vshrl.u32 %v50, 7
  %v52 = vsub.s32 1, %v51
  %v53 = vrot.slane %v44, %v52
  %v54 = vlaneseq
  %v55 = vshrl.u32 %v54, 7
  %v56 = vsub.s32 2, %v55
  %v57 = vrot.slane %v44, %v56
  %v58 = vlaneseq
  %v59 = vshrl.u32 %v58, 7
  %v60 = vsub.s32 3, %v59
  %v61 = vrot.slane %v44, %v60
  %v82 = vunpack.c.l.b16 %v28
  %v83 = vunpack.c.h.b16 %v28
  %v84 = vunpack.c.l.b16 %v29
  %v85 = vunpack.c.h.b16 %v29
  %v86 = vunpack.c.l.b16 %v30
  %v87 = vunpack.c.h.b16 %v30
  %v88 = vunpack.c.l.b16 %v31
  %v89 = vunpack.c.h.b16 %v31
  %v90 = vunpack.c.l.b16 %v32
  %v91 = vunpack.c.h.b16 %v32
  %v92 = vunpack.c.l.b16 %v33
  %v93 = vunpack.c.h.b16 %v33
  %v94 = vunpack.c.l.b16 %v34
  %v95 = vunpack.c.h.b16 %v34
  %v96 = vunpack.c.l.b16 %v35
  %v97 = vunpack.c.h.b16 %v35
  %v98 = vunpack.c.l.b16 %v36
  %v99 = vunpack.c.h.b16 %v36
  %v100 = vunpack.c.l.b16 %v37
  %v101 = vunpack.c.h.b16 %v37
  %v102 = vunpack.c.l.b16 %v38
  %v103 = vunpack.c.h.b16 %v38
  %v104 = vunpack.c.l.b16 %v39
  %v105 = vunpack.c.h.b16 %v39
  %v106 = vunpack.c.l.b16 %v40
  %v107 = vunpack.c.h.b16 %v40
  %v108 = vunpack.c.l.b16 %v41
  %v109 = vunpack.c.h.b16 %v41
  %v110 = vunpack.c.l.b16 %v42
  %v111 = vunpack.c.h.b16 %v42
  %v112 = vunpack.c.l.b16 %v43
  %v113 = vunpack.c.h.b16 %v43
  %v114 = vpack.c.b16 %v86, %v82
  %v115 = vpack.c.b16 %v87, %v83
  %v116 = vpack.c.b16 %v88, %v84
  %v117 = vpack.c.b16 %v89, %v85
  %v118 = vpack.c.b16 %v94, %v90
  %v119 = vpack.c.b16 %v95, %v91
  %v120 = vpack.c.b16 %v96, %v92
  %v121 = vpack.c.b16 %v97, %v93
  %v122 = vpack.c.b16 %v102, %v98
  %v123 = vpack.c.b16 %v103, %v99
  %v124 = vpack.c.b16 %v104, %v100
  %v125 = vpack.c.b16 %v105, %v101
  %v126 = vpack.c.b16 %v110, %v106
  %v127 = vpack.c.b16 %v111, %v107
  %v128 = vpack.c.b16 %v112, %v108
  %v129 = vpack.c.b16 %v113, %v109
  %vm146 = vcmask 523264
  %v148 = vsel %vm146, %v27, 0
  %150 = vmatprep.subr.bf16.mxu0 %v115
  %151 = vmatpush1.bf16.msra.mxu0 %v114
  %152 = vmatprep.subr.bf16.mxu0 %v119
  %153 = vmatpush1.bf16.msra.mxu0 %v118
  %154 = vmatprep.subr.bf16.mxu0 %v123
  %155 = vmatpush1.bf16.msra.mxu0 %v122
  %156 = vmatprep.subr.bf16.mxu0 %v127
  %157 = vmatpush1.bf16.msra.mxu0 %v126
  %158 = vmatprep.subr.bf16.mxu0 0
  %159 = vmatpush1.bf16.msra.mxu0 0
  %160 = vmatprep.subr.bf16.mxu0 0
  %161 = vmatpush1.bf16.msra.mxu0 0
  %162 = vmatprep.subr.bf16.mxu0 0
  %163 = vmatpush1.bf16.msra.mxu0 0
  %164 = vmatprep.subr.bf16.mxu0 0
  %165 = vmatpush1.bf16.msra.mxu0 0
  %166 = vmatprep.subr.bf16.mxu0 0
  %167 = vmatpush1.bf16.msra.mxu0 0
  %168 = vmatprep.subr.bf16.mxu0 0
  %169 = vmatpush1.bf16.msra.mxu0 0
  %170 = vmatprep.subr.bf16.mxu0 0
  %171 = vmatpush1.bf16.msra.mxu0 0
  %172 = vmatprep.subr.bf16.mxu0 0
  %173 = vmatpush1.bf16.msra.mxu0 0
  %174 = vmatprep.subr.bf16.mxu0 0
  %175 = vmatpush1.bf16.msra.mxu0 0
  %176 = vmatprep.subr.bf16.mxu0 0
  %177 = vmatpush1.bf16.msra.mxu0 0
  %178 = vmatprep.subr.bf16.mxu0 0
  %179 = vmatpush1.bf16.msra.mxu0 0
  %180 = vmatprep.subr.bf16.mxu0 0
  %181 = vmatpush1.bf16.msra.mxu0 0
  %182 = vmatprep.mubr.bf16.mxu0 0
  %183 = vmatmul.mubr.bf16.gmra.mrb[0].mxu0 %v148
  %v184 = vpop.f32.mrb[0].mxu0
  %v185 = vadd.f32 %v49, %v184
  %v186 = vpop.f32.mrb[0].mxu0
  %v187 = vadd.f32 %v53, %v186
  %v188 = vpop.f32.mrb[0].mxu0
  %v189 = vpop.f32.mrb[0].mxu0
  %190 = vdwg.mxu0
  %191 = vmatprep.subr.bf16.mxu0 %v117
  %192 = vmatpush1.bf16.msra.mxu0 %v116
  %193 = vmatprep.subr.bf16.mxu0 %v121
  %194 = vmatpush1.bf16.msra.mxu0 %v120
  %195 = vmatprep.subr.bf16.mxu0 %v125
  %196 = vmatpush1.bf16.msra.mxu0 %v124
  %197 = vmatprep.subr.bf16.mxu0 %v129
  %198 = vmatpush1.bf16.msra.mxu0 %v128
  %199 = vmatprep.subr.bf16.mxu0 0
  %200 = vmatpush1.bf16.msra.mxu0 0
  %201 = vmatprep.subr.bf16.mxu0 0
  %202 = vmatpush1.bf16.msra.mxu0 0
  %203 = vmatprep.subr.bf16.mxu0 0
  %204 = vmatpush1.bf16.msra.mxu0 0
  %205 = vmatprep.subr.bf16.mxu0 0
  %206 = vmatpush1.bf16.msra.mxu0 0
  %207 = vmatprep.subr.bf16.mxu0 0
  %208 = vmatpush1.bf16.msra.mxu0 0
  %209 = vmatprep.subr.bf16.mxu0 0
  %210 = vmatpush1.bf16.msra.mxu0 0
  %211 = vmatprep.subr.bf16.mxu0 0
  %212 = vmatpush1.bf16.msra.mxu0 0
  %213 = vmatprep.subr.bf16.mxu0 0
  %214 = vmatpush1.bf16.msra.mxu0 0
  %215 = vmatprep.subr.bf16.mxu0 0
  %216 = vmatpush1.bf16.msra.mxu0 0
  %217 = vmatprep.subr.bf16.mxu0 0
  %218 = vmatpush1.bf16.msra.mxu0 0
  %219 = vmatprep.subr.bf16.mxu0 0
  %220 = vmatpush1.bf16.msra.mxu0 0
  %221 = vmatprep.subr.bf16.mxu0 0
  %222 = vmatpush1.bf16.msra.mxu0 0
  %223 = vmatprep.mubr.bf16.mxu0 0
  %224 = vmatmul.mubr.bf16.gmra.mrb[0].mxu0 %v148
  %v225 = vpop.f32.mrb[0].mxu0
  %v226 = vadd.f32 %v57, %v225
  %v227 = vpop.f32.mrb[0].mxu0
  %v228 = vadd.f32 %v61, %v227
  %v229 = vpop.f32.mrb[0].mxu0
  %v230 = vpop.f32.mrb[0].mxu0
  %231 = vdwg.mxu0
  %v232 = vmax.f32 %v185, 0.0
  %v233 = vmax.f32 %v187, 0.0
  %v234 = vmax.f32 %v226, 0.0
  %v235 = vmax.f32 %v228, 0.0
  %v236 = vpack.c.bf16 %v232, %v232
  %v237 = vpack.c.bf16 %v233, %v233
  %v238 = vpack.c.bf16 %v234, %v234
  %v239 = vpack.c.bf16 %v235, %v235
  %v240 = vld [vmem:[%s3] sm:$0xff]
  %v241 = vld [vmem:[%s3 + $0x8] sm:$0xff]
  %v242 = vld [vmem:[%s3 + $0x10] sm:$0xff]
  %v243 = vld [vmem:[%s3 + $0x18] sm:$0xff]
  %v244 = vld [vmem:[%s3 + $0x20] sm:$0xff]
  %v245 = vld [vmem:[%s3 + $0x28] sm:$0xff]
  %v246 = vld [vmem:[%s3 + $0x30] sm:$0xff]
  %v247 = vld [vmem:[%s3 + $0x38] sm:$0xff]
  %v248 = vld [vmem:[%s3 + $0x40] sm:$0xff]
  %v249 = vld [vmem:[%s3 + $0x48] sm:$0xff]
  %v250 = vld [vmem:[%s3 + $0x50] sm:$0xff]
  %v251 = vld [vmem:[%s3 + $0x58] sm:$0xff]
  %v252 = vld [vmem:[%s3 + $0x60] sm:$0xff]
  %v253 = vld [vmem:[%s3 + $0x68] sm:$0xff]
  %v254 = vld [vmem:[%s3 + $0x70] sm:$0xff]
  %v255 = vld [vmem:[%s3 + $0x78] sm:$0xff]
  %v256 = vld [vmem:[%s3 + $0x80] sm:$0xff]
  %v257 = vld [vmem:[%s3 + $0x88] sm:$0xff]
  %v258 = vld [vmem:[%s3 + $0x90] sm:$0xff]
  %v259 = vld [vmem:[%s3 + $0x98] sm:$0xff]
  %v260 = vld [vmem:[%s3 + $0xa0] sm:$0xff]
  %v261 = vld [vmem:[%s3 + $0xa8] sm:$0xff]
  %v262 = vld [vmem:[%s3 + $0xb0] sm:$0xff]
  %v263 = vld [vmem:[%s3 + $0xb8] sm:$0xff]
  %v264 = vld [vmem:[%s3 + $0xc0] sm:$0xff]
  %v265 = vld [vmem:[%s3 + $0xc8] sm:$0xff]
  %v266 = vld [vmem:[%s3 + $0xd0] sm:$0xff]
  %v267 = vld [vmem:[%s3 + $0xd8] sm:$0xff]
  %v268 = vld [vmem:[%s3 + $0xe0] sm:$0xff]
  %v269 = vld [vmem:[%s3 + $0xe8] sm:$0xff]
  %v270 = vld [vmem:[%s3 + $0xf0] sm:$0xff]
  %v271 = vld [vmem:[%s3 + $0xf8] sm:$0xff]
  %v272 = vld [vmem:[%s3 + $0x100] sm:$0xff]
  %v273 = vld [vmem:[%s3 + $0x108] sm:$0xff]
  %v274 = vld [vmem:[%s3 + $0x110] sm:$0xff]
  %v275 = vld [vmem:[%s3 + $0x118] sm:$0xff]
  %v276 = vld [vmem:[%s3 + $0x120] sm:$0xff]
  %v277 = vld [vmem:[%s3 + $0x128] sm:$0xff]
  %v278 = vld [vmem:[%s3 + $0x130] sm:$0xff]
  %v279 = vld [vmem:[%s3 + $0x138] sm:$0xff]
  %v280 = vld [vmem:[%s3 + $0x140] sm:$0xff]
  %v281 = vld [vmem:[%s3 + $0x148] sm:$0xff]
  %v282 = vld [vmem:[%s3 + $0x150] sm:$0xff]
  %v283 = vld [vmem:[%s3 + $0x158] sm:$0xff]
  %v284 = vld [vmem:[%s3 + $0x160] sm:$0xff]
  %v285 = vld [vmem:[%s3 + $0x168] sm:$0xff]
  %v286 = vld [vmem:[%s3 + $0x170] sm:$0xff]
  %v287 = vld [vmem:[%s3 + $0x178] sm:$0xff]
  %v288 = vld [vmem:[%s3 + $0x180] sm:$0xff]
  %v289 = vld [vmem:[%s3 + $0x188] sm:$0xff]
  %v290 = vld [vmem:[%s3 + $0x190] sm:$0xff]
  %v291 = vld [vmem:[%s3 + $0x198] sm:$0xff]
  %v292 = vld [vmem:[%s3 + $0x1a0] sm:$0xff]
  %v293 = vld [vmem:[%s3 + $0x1a8] sm:$0xff]
  %v294 = vld [vmem:[%s3 + $0x1b0] sm:$0xff]
  %v295 = vld [vmem:[%s3 + $0x1b8] sm:$0xff]
  %v296 = vld [vmem:[%s3 + $0x1c0] sm:$0xff]
  %v297 = vld [vmem:[%s3 + $0x1c8] sm:$0xff]
  %v298 = vld [vmem:[%s3 + $0x1d0] sm:$0xff]
  %v299 = vld [vmem:[%s3 + $0x1d8] sm:$0xff]
  %v300 = vld [vmem:[%s3 + $0x1e0] sm:$0xff]
  %v301 = vld [vmem:[%s3 + $0x1e8] sm:$0xff]
  %v302 = vld [vmem:[%s3 + $0x1f0] sm:$0xff]
  %v303 = vld [vmem:[%s3 + $0x1f8] sm:$0xff]
  %v304 = vld [vmem:[%s3 + $0x200] sm:$0xff]
  %v305 = vld [vmem:[%s3 + $0x208] sm:$0xff]
  %v306 = vld [vmem:[%s3 + $0x210] sm:$0xff]
  %v307 = vld [vmem:[%s3 + $0x218] sm:$0xff]
  %v308 = vld [vmem:[%s3 + $0x220] sm:$0xff]
  %v309 = vld [vmem:[%s3 + $0x228] sm:$0xff]
  %v310 = vld [vmem:[%s3 + $0x230] sm:$0xff]
  %v311 = vld [vmem:[%s3 + $0x238] sm:$0xff]
  %v312 = vld [vmem:[%s3 + $0x240] sm:$0xff]
  %v313 = vld [vmem:[%s3 + $0x248] sm:$0xff]
  %v314 = vld [vmem:[%s3 + $0x250] sm:$0xff]
  %v315 = vld [vmem:[%s3 + $0x258] sm:$0xff]
  %v316 = vld [vmem:[%s3 + $0x260] sm:$0xff]
  %v317 = vld [vmem:[%s3 + $0x268] sm:$0xff]
  %v318 = vld [vmem:[%s3 + $0x270] sm:$0xff]
  %v319 = vld [vmem:[%s3 + $0x278] sm:$0xff]
  %v320 = vld [vmem:[%s3 + $0x280] sm:$0xff]
  %v321 = vld [vmem:[%s3 + $0x288] sm:$0xff]
  %v322 = vld [vmem:[%s3 + $0x290] sm:$0xff]
  %v323 = vld [vmem:[%s3 + $0x298] sm:$0xff]
  %v324 = vld [vmem:[%s3 + $0x2a0] sm:$0xff]
  %v325 = vld [vmem:[%s3 + $0x2a8] sm:$0xff]
  %v326 = vld [vmem:[%s3 + $0x2b0] sm:$0xff]
  %v327 = vld [vmem:[%s3 + $0x2b8] sm:$0xff]
  %v328 = vld [vmem:[%s3 + $0x2c0] sm:$0xff]
  %v329 = vld [vmem:[%s3 + $0x2c8] sm:$0xff]
  %v330 = vld [vmem:[%s3 + $0x2d0] sm:$0xff]
  %v331 = vld [vmem:[%s3 + $0x2d8] sm:$0xff]
  %v332 = vld [vmem:[%s3 + $0x2e0] sm:$0xff]
  %v333 = vld [vmem:[%s3 + $0x2e8] sm:$0xff]
  %v334 = vld [vmem:[%s3 + $0x2f0] sm:$0xff]
  %v335 = vld [vmem:[%s3 + $0x2f8] sm:$0xff]
  %v336 = vld [vmem:[%s3 + $0x300] sm:$0xff]
  %v337 = vld [vmem:[%s3 + $0x308] sm:$0xff]
  %v338 = vld [vmem:[%s3 + $0x310] sm:$0xff]
  %v339 = vld [vmem:[%s3 + $0x318] sm:$0xff]
  %v340 = vld [vmem:[%s3 + $0x320] sm:$0xff]
  %v341 = vld [vmem:[%s3 + $0x328] sm:$0xff]
  %v342 = vld [vmem:[%s3 + $0x330] sm:$0xff]
  %v343 = vld [vmem:[%s3 + $0x338] sm:$0xff]
  %v344 = vld [vmem:[%s3 + $0x340] sm:$0xff]
  %v345 = vld [vmem:[%s3 + $0x348] sm:$0xff]
  %v346 = vld [vmem:[%s3 + $0x350] sm:$0xff]
  %v347 = vld [vmem:[%s3 + $0x358] sm:$0xff]
  %v348 = vld [vmem:[%s3 + $0x360] sm:$0xff]
  %v349 = vld [vmem:[%s3 + $0x368] sm:$0xff]
  %v350 = vld [vmem:[%s3 + $0x370] sm:$0xff]
  %v351 = vld [vmem:[%s3 + $0x378] sm:$0xff]
  %v352 = vld [vmem:[%s3 + $0x380] sm:$0xff]
  %v353 = vld [vmem:[%s3 + $0x388] sm:$0xff]
  %v354 = vld [vmem:[%s3 + $0x390] sm:$0xff]
  %v355 = vld [vmem:[%s3 + $0x398] sm:$0xff]
  %v356 = vld [vmem:[%s3 + $0x3a0] sm:$0xff]
  %v357 = vld [vmem:[%s3 + $0x3a8] sm:$0xff]
  %v358 = vld [vmem:[%s3 + $0x3b0] sm:$0xff]
  %v359 = vld [vmem:[%s3 + $0x3b8] sm:$0xff]
  %v360 = vld [vmem:[%s3 + $0x3c0] sm:$0xff]
  %v361 = vld [vmem:[%s3 + $0x3c8] sm:$0xff]
  %v362 = vld [vmem:[%s3 + $0x3d0] sm:$0xff]
  %v363 = vld [vmem:[%s3 + $0x3d8] sm:$0xff]
  %v364 = vld [vmem:[%s3 + $0x3e0] sm:$0xff]
  %v365 = vld [vmem:[%s3 + $0x3e8] sm:$0xff]
  %v366 = vld [vmem:[%s3 + $0x3f0] sm:$0xff]
  %v367 = vld [vmem:[%s3 + $0x3f8] sm:$0xff]
  %v368 = vld [vmem:[%s3 + $0x400] sm:$0xff]
  %v369 = vld [vmem:[%s3 + $0x408] sm:$0xff]
  %v370 = vld [vmem:[%s3 + $0x410] sm:$0xff]
  %v371 = vld [vmem:[%s3 + $0x418] sm:$0xff]
  %v372 = vld [vmem:[%s3 + $0x420] sm:$0xff]
  %v373 = vld [vmem:[%s3 + $0x428] sm:$0xff]
  %v374 = vld [vmem:[%s3 + $0x430] sm:$0xff]
  %v375 = vld [vmem:[%s3 + $0x438] sm:$0xff]
  %v376 = vld [vmem:[%s3 + $0x440] sm:$0xff]
  %v377 = vld [vmem:[%s3 + $0x448] sm:$0xff]
  %v378 = vld [vmem:[%s3 + $0x450] sm:$0xff]
  %v379 = vld [vmem:[%s3 + $0x458] sm:$0xff]
  %v380 = vld [vmem:[%s3 + $0x460] sm:$0xff]
  %v381 = vld [vmem:[%s3 + $0x468] sm:$0xff]
  %v382 = vld [vmem:[%s3 + $0x470] sm:$0xff]
  %v383 = vld [vmem:[%s3 + $0x478] sm:$0xff]
  %v384 = vld [vmem:[%s3 + $0x480] sm:$0xff]
  %v385 = vld [vmem:[%s3 + $0x488] sm:$0xff]
  %v386 = vld [vmem:[%s3 + $0x490] sm:$0xff]
  %v387 = vld [vmem:[%s3 + $0x498] sm:$0xff]
  %v388 = vld [vmem:[%s3 + $0x4a0] sm:$0xff]
  %v389 = vld [vmem:[%s3 + $0x4a8] sm:$0xff]
  %v390 = vld [vmem:[%s3 + $0x4b0] sm:$0xff]
  %v391 = vld [vmem:[%s3 + $0x4b8] sm:$0xff]
  %v392 = vld [vmem:[%s3 + $0x4c0] sm:$0xff]
  %v393 = vld [vmem:[%s3 + $0x4c8] sm:$0xff]
  %v394 = vld [vmem:[%s3 + $0x4d0] sm:$0xff]
  %v395 = vld [vmem:[%s3 + $0x4d8] sm:$0xff]
  %v396 = vld [vmem:[%s3 + $0x4e0] sm:$0xff]
  %v397 = vld [vmem:[%s3 + $0x4e8] sm:$0xff]
  %v398 = vld [vmem:[%s3 + $0x4f0] sm:$0xff]
  %v399 = vld [vmem:[%s3 + $0x4f8] sm:$0xff]
  %v400 = vld [vmem:[%s3 + $0x500] sm:$0xff]
  %v401 = vld [vmem:[%s3 + $0x508] sm:$0xff]
  %v402 = vld [vmem:[%s3 + $0x510] sm:$0xff]
  %v403 = vld [vmem:[%s3 + $0x518] sm:$0xff]
  %v404 = vld [vmem:[%s3 + $0x520] sm:$0xff]
  %v405 = vld [vmem:[%s3 + $0x528] sm:$0xff]
  %v406 = vld [vmem:[%s3 + $0x530] sm:$0xff]
  %v407 = vld [vmem:[%s3 + $0x538] sm:$0xff]
  %v408 = vld [vmem:[%s3 + $0x540] sm:$0xff]
  %v409 = vld [vmem:[%s3 + $0x548] sm:$0xff]
  %v410 = vld [vmem:[%s3 + $0x550] sm:$0xff]
  %v411 = vld [vmem:[%s3 + $0x558] sm:$0xff]
  %v412 = vld [vmem:[%s3 + $0x560] sm:$0xff]
  %v413 = vld [vmem:[%s3 + $0x568] sm:$0xff]
  %v414 = vld [vmem:[%s3 + $0x570] sm:$0xff]
  %v415 = vld [vmem:[%s3 + $0x578] sm:$0xff]
  %v416 = vld [vmem:[%s3 + $0x580] sm:$0xff]
  %v417 = vld [vmem:[%s3 + $0x588] sm:$0xff]
  %v418 = vld [vmem:[%s3 + $0x590] sm:$0xff]
  %v419 = vld [vmem:[%s3 + $0x598] sm:$0xff]
  %v420 = vld [vmem:[%s3 + $0x5a0] sm:$0xff]
  %v421 = vld [vmem:[%s3 + $0x5a8] sm:$0xff]
  %v422 = vld [vmem:[%s3 + $0x5b0] sm:$0xff]
  %v423 = vld [vmem:[%s3 + $0x5b8] sm:$0xff]
  %v424 = vld [vmem:[%s3 + $0x5c0] sm:$0xff]
  %v425 = vld [vmem:[%s3 + $0x5c8] sm:$0xff]
  %v426 = vld [vmem:[%s3 + $0x5d0] sm:$0xff]
  %v427 = vld [vmem:[%s3 + $0x5d8] sm:$0xff]
  %v428 = vld [vmem:[%s3 + $0x5e0] sm:$0xff]
  %v429 = vld [vmem:[%s3 + $0x5e8] sm:$0xff]
  %v430 = vld [vmem:[%s3 + $0x5f0] sm:$0xff]
  %v431 = vld [vmem:[%s3 + $0x5f8] sm:$0xff]
  %v432 = vld [vmem:[%s3 + $0x600] sm:$0xff]
  %v433 = vld [vmem:[%s3 + $0x608] sm:$0xff]
  %v434 = vld [vmem:[%s3 + $0x610] sm:$0xff]
  %v435 = vld [vmem:[%s3 + $0x618] sm:$0xff]
  %v436 = vld [vmem:[%s3 + $0x620] sm:$0xff]
  %v437 = vld [vmem:[%s3 + $0x628] sm:$0xff]
  %v438 = vld [vmem:[%s3 + $0x630] sm:$0xff]
  %v439 = vld [vmem:[%s3 + $0x638] sm:$0xff]
  %v440 = vld [vmem:[%s3 + $0x640] sm:$0xff]
  %v441 = vld [vmem:[%s3 + $0x648] sm:$0xff]
  %v442 = vld [vmem:[%s3 + $0x650] sm:$0xff]
  %v443 = vld [vmem:[%s3 + $0x658] sm:$0xff]
  %v444 = vld [vmem:[%s3 + $0x660] sm:$0xff]
  %v445 = vld [vmem:[%s3 + $0x668] sm:$0xff]
  %v446 = vld [vmem:[%s3 + $0x670] sm:$0xff]
  %v447 = vld [vmem:[%s3 + $0x678] sm:$0xff]
  %v448 = vld [vmem:[%s3 + $0x680] sm:$0xff]
  %v449 = vld [vmem:[%s3 + $0x688] sm:$0xff]
  %v450 = vld [vmem:[%s3 + $0x690] sm:$0xff]
  %v451 = vld [vmem:[%s3 + $0x698] sm:$0xff]
  %v452 = vld [vmem:[%s3 + $0x6a0] sm:$0xff]
  %v453 = vld [vmem:[%s3 + $0x6a8] sm:$0xff]
  %v454 = vld [vmem:[%s3 + $0x6b0] sm:$0xff]
  %v455 = vld [vmem:[%s3 + $0x6b8] sm:$0xff]
  %v456 = vld [vmem:[%s3 + $0x6c0] sm:$0xff]
  %v457 = vld [vmem:[%s3 + $0x6c8] sm:$0xff]
  %v458 = vld [vmem:[%s3 + $0x6d0] sm:$0xff]
  %v459 = vld [vmem:[%s3 + $0x6d8] sm:$0xff]
  %v460 = vld [vmem:[%s3 + $0x6e0] sm:$0xff]
  %v461 = vld [vmem:[%s3 + $0x6e8] sm:$0xff]
  %v462 = vld [vmem:[%s3 + $0x6f0] sm:$0xff]
  %v463 = vld [vmem:[%s3 + $0x6f8] sm:$0xff]
  %v464 = vld [vmem:[%s3 + $0x700] sm:$0xff]
  %v465 = vld [vmem:[%s3 + $0x708] sm:$0xff]
  %v466 = vld [vmem:[%s3 + $0x710] sm:$0xff]
  %v467 = vld [vmem:[%s3 + $0x718] sm:$0xff]
  %v468 = vld [vmem:[%s3 + $0x720] sm:$0xff]
  %v469 = vld [vmem:[%s3 + $0x728] sm:$0xff]
  %v470 = vld [vmem:[%s3 + $0x730] sm:$0xff]
  %v471 = vld [vmem:[%s3 + $0x738] sm:$0xff]
  %v472 = vld [vmem:[%s3 + $0x740] sm:$0xff]
  %v473 = vld [vmem:[%s3 + $0x748] sm:$0xff]
  %v474 = vld [vmem:[%s3 + $0x750] sm:$0xff]
  %v475 = vld [vmem:[%s3 + $0x758] sm:$0xff]
  %v476 = vld [vmem:[%s3 + $0x760] sm:$0xff]
  %v477 = vld [vmem:[%s3 + $0x768] sm:$0xff]
  %v478 = vld [vmem:[%s3 + $0x770] sm:$0xff]
  %v479 = vld [vmem:[%s3 + $0x778] sm:$0xff]
  %v480 = vld [vmem:[%s3 + $0x780] sm:$0xff]
  %v481 = vld [vmem:[%s3 + $0x788] sm:$0xff]
  %v482 = vld [vmem:[%s3 + $0x790] sm:$0xff]
  %v483 = vld [vmem:[%s3 + $0x798] sm:$0xff]
  %v484 = vld [vmem:[%s3 + $0x7a0] sm:$0xff]
  %v485 = vld [vmem:[%s3 + $0x7a8] sm:$0xff]
  %v486 = vld [vmem:[%s3 + $0x7b0] sm:$0xff]
  %v487 = vld [vmem:[%s3 + $0x7b8] sm:$0xff]
  %v488 = vld [vmem:[%s3 + $0x7c0] sm:$0xff]
  %v489 = vld [vmem:[%s3 + $0x7c8] sm:$0xff]
  %v490 = vld [vmem:[%s3 + $0x7d0] sm:$0xff]
  %v491 = vld [vmem:[%s3 + $0x7d8] sm:$0xff]
  %v492 = vld [vmem:[%s3 + $0x7e0] sm:$0xff]
  %v493 = vld [vmem:[%s3 + $0x7e8] sm:$0xff]
  %v494 = vld [vmem:[%s3 + $0x7f0] sm:$0xff]
  %v495 = vld [vmem:[%s3 + $0x7f8] sm:$0xff]
  %v496 = vld [vmem:[%s4] sm:$0xff]
  %v498 = vlaneseq
  %v499 = vshrl.u32 %v498, 7
  %v500 = vsub.s32 0, %v499
  %v501 = vrot.slane %v496, %v500
  %v502 = vlaneseq
  %v503 = vshrl.u32 %v502, 7
  %v504 = vsub.s32 1, %v503
  %v505 = vrot.slane %v496, %v504
  %v506 = vlaneseq
  %v507 = vshrl.u32 %v506, 7
  %v508 = vsub.s32 2, %v507
  %v509 = vrot.slane %v496, %v508
  %v510 = vlaneseq
  %v511 = vshrl.u32 %v510, 7
  %v512 = vsub.s32 3, %v511
  %v513 = vrot.slane %v496, %v512
  %v514 = vlaneseq
  %v515 = vshrl.u32 %v514, 7
  %v516 = vsub.s32 4, %v515
  %v517 = vrot.slane %v496, %v516
  %v518 = vlaneseq
  %v519 = vshrl.u32 %v518, 7
  %v520 = vsub.s32 5, %v519
  %v521 = vrot.slane %v496, %v520
  %v522 = vlaneseq
  %v523 = vshrl.u32 %v522, 7
  %v524 = vsub.s32 6, %v523
  %v525 = vrot.slane %v496, %v524
  %v526 = vlaneseq
  %v527 = vshrl.u32 %v526, 7
  %v528 = vsub.s32 7, %v527
  %v529 = vrot.slane %v496, %v528
  %v794 = vunpack.c.l.b16 %v240
  %v795 = vunpack.c.h.b16 %v240
  %v796 = vunpack.c.l.b16 %v241
  %v797 = vunpack.c.h.b16 %v241
  %v798 = vunpack.c.l.b16 %v242
  %v799 = vunpack.c.h.b16 %v242
  %v800 = vunpack.c.l.b16 %v243
  %v801 = vunpack.c.h.b16 %v243
  %v802 = vunpack.c.l.b16 %v244
  %v803 = vunpack.c.h.b16 %v244
  %v804 = vunpack.c.l.b16 %v245
  %v805 = vunpack.c.h.b16 %v245
  %v806 = vunpack.c.l.b16 %v246
  %v807 = vunpack.c.h.b16 %v246
  %v808 = vunpack.c.l.b16 %v247
  %v809 = vunpack.c.h.b16 %v247
  %v810 = vunpack.c.l.b16 %v248
  %v811 = vunpack.c.h.b16 %v248
  %v812 = vunpack.c.l.b16 %v249
  %v813 = vunpack.c.h.b16 %v249
  %v814 = vunpack.c.l.b16 %v250
  %v815 = vunpack.c.h.b16 %v250
  %v816 = vunpack.c.l.b16 %v251
  %v817 = vunpack.c.h.b16 %v251
  %v818 = vunpack.c.l.b16 %v252
  %v819 = vunpack.c.h.b16 %v252
  %v820 = vunpack.c.l.b16 %v253
  %v821 = vunpack.c.h.b16 %v253
  %v822 = vunpack.c.l.b16 %v254
  %v823 = vunpack.c.h.b16 %v254
  %v824 = vunpack.c.l.b16 %v255
  %v825 = vunpack.c.h.b16 %v255
  %v826 = vunpack.c.l.b16 %v256
  %v827 = vunpack.c.h.b16 %v256
  %v828 = vunpack.c.l.b16 %v257
  %v829 = vunpack.c.h.b16 %v257
  %v830 = vunpack.c.l.b16 %v258
  %v831 = vunpack.c.h.b16 %v258
  %v832 = vunpack.c.l.b16 %v259
  %v833 = vunpack.c.h.b16 %v259
  %v834 = vunpack.c.l.b16 %v260
  %v835 = vunpack.c.h.b16 %v260
  %v836 = vunpack.c.l.b16 %v261
  %v837 = vunpack.c.h.b16 %v261
  %v838 = vunpack.c.l.b16 %v262
  %v839 = vunpack.c.h.b16 %v262
  %v840 = vunpack.c.l.b16 %v263
  %v841 = vunpack.c.h.b16 %v263
  %v842 = vunpack.c.l.b16 %v264
  %v843 = vunpack.c.h.b16 %v264
  %v844 = vunpack.c.l.b16 %v265
  %v845 = vunpack.c.h.b16 %v265
  %v846 = vunpack.c.l.b16 %v266
  %v847 = vunpack.c.h.b16 %v266
  %v848 = vunpack.c.l.b16 %v267
  %v849 = vunpack.c.h.b16 %v267
  %v850 = vunpack.c.l.b16 %v268
  %v851 = vunpack.c.h.b16 %v268
  %v852 = vunpack.c.l.b16 %v269
  %v853 = vunpack.c.h.b16 %v269
  %v854 = vunpack.c.l.b16 %v270
  %v855 = vunpack.c.h.b16 %v270
  %v856 = vunpack.c.l.b16 %v271
  %v857 = vunpack.c.h.b16 %v271
  %v858 = vunpack.c.l.b16 %v272
  %v859 = vunpack.c.h.b16 %v272
  %v860 = vunpack.c.l.b16 %v273
  %v861 = vunpack.c.h.b16 %v273
  %v862 = vunpack.c.l.b16 %v274
  %v863 = vunpack.c.h.b16 %v274
  %v864 = vunpack.c.l.b16 %v275
  %v865 = vunpack.c.h.b16 %v275
  %v866 = vunpack.c.l.b16 %v276
  %v867 = vunpack.c.h.b16 %v276
  %v868 = vunpack.c.l.b16 %v277
  %v869 = vunpack.c.h.b16 %v277
  %v870 = vunpack.c.l.b16 %v278
  %v871 = vunpack.c.h.b16 %v278
  %v872 = vunpack.c.l.b16 %v279
  %v873 = vunpack.c.h.b16 %v279
  %v874 = vunpack.c.l.b16 %v280
  %v875 = vunpack.c.h.b16 %v280
  %v876 = vunpack.c.l.b16 %v281
  %v877 = vunpack.c.h.b16 %v281
  %v878 = vunpack.c.l.b16 %v282
  %v879 = vunpack.c.h.b16 %v282
  %v880 = vunpack.c.l.b16 %v283
  %v881 = vunpack.c.h.b16 %v283
  %v882 = vunpack.c.l.b16 %v284
  %v883 = vunpack.c.h.b16 %v284
  %v884 = vunpack.c.l.b16 %v285
  %v885 = vunpack.c.h.b16 %v285
  %v886 = vunpack.c.l.b16 %v286
  %v887 = vunpack.c.h.b16 %v286
  %v888 = vunpack.c.l.b16 %v287
  %v889 = vunpack.c.h.b16 %v287
  %v890 = vunpack.c.l.b16 %v288
  %v891 = vunpack.c.h.b16 %v288
  %v892 = vunpack.c.l.b16 %v289
  %v893 = vunpack.c.h.b16 %v289
  %v894 = vunpack.c.l.b16 %v290
  %v895 = vunpack.c.h.b16 %v290
  %v896 = vunpack.c.l.b16 %v291
  %v897 = vunpack.c.h.b16 %v291
  %v898 = vunpack.c.l.b16 %v292
  %v899 = vunpack.c.h.b16 %v292
  %v900 = vunpack.c.l.b16 %v293
  %v901 = vunpack.c.h.b16 %v293
  %v902 = vunpack.c.l.b16 %v294
  %v903 = vunpack.c.h.b16 %v294
  %v904 = vunpack.c.l.b16 %v295
  %v905 = vunpack.c.h.b16 %v295
  %v906 = vunpack.c.l.b16 %v296
  %v907 = vunpack.c.h.b16 %v296
  %v908 = vunpack.c.l.b16 %v297
  %v909 = vunpack.c.h.b16 %v297
  %v910 = vunpack.c.l.b16 %v298
  %v911 = vunpack.c.h.b16 %v298
  %v912 = vunpack.c.l.b16 %v299
  %v913 = vunpack.c.h.b16 %v299
  %v914 = vunpack.c.l.b16 %v300
  %v915 = vunpack.c.h.b16 %v300
  %v916 = vunpack.c.l.b16 %v301
  %v917 = vunpack.c.h.b16 %v301
  %v918 = vunpack.c.l.b16 %v302
  %v919 = vunpack.c.h.b16 %v302
  %v920 = vunpack.c.l.b16 %v303
  %v921 = vunpack.c.h.b16 %v303
  %v922 = vunpack.c.l.b16 %v304
  %v923 = vunpack.c.h.b16 %v304
  %v924 = vunpack.c.l.b16 %v305
  %v925 = vunpack.c.h.b16 %v305
  %v926 = vunpack.c.l.b16 %v306
  %v927 = vunpack.c.h.b16 %v306
  %v928 = vunpack.c.l.b16 %v307
  %v929 = vunpack.c.h.b16 %v307
  %v930 = vunpack.c.l.b16 %v308
  %v931 = vunpack.c.h.b16 %v308
  %v932 = vunpack.c.l.b16 %v309
  %v933 = vunpack.c.h.b16 %v309
  %v934 = vunpack.c.l.b16 %v310
  %v935 = vunpack.c.h.b16 %v310
  %v936 = vunpack.c.l.b16 %v311
  %v937 = vunpack.c.h.b16 %v311
  %v938 = vunpack.c.l.b16 %v312
  %v939 = vunpack.c.h.b16 %v312
  %v940 = vunpack.c.l.b16 %v313
  %v941 = vunpack.c.h.b16 %v313
  %v942 = vunpack.c.l.b16 %v314
  %v943 = vunpack.c.h.b16 %v314
  %v944 = vunpack.c.l.b16 %v315
  %v945 = vunpack.c.h.b16 %v315
  %v946 = vunpack.c.l.b16 %v316
  %v947 = vunpack.c.h.b16 %v316
  %v948 = vunpack.c.l.b16 %v317
  %v949 = vunpack.c.h.b16 %v317
  %v950 = vunpack.c.l.b16 %v318
  %v951 = vunpack.c.h.b16 %v318
  %v952 = vunpack.c.l.b16 %v319
  %v953 = vunpack.c.h.b16 %v319
  %v954 = vunpack.c.l.b16 %v320
  %v955 = vunpack.c.h.b16 %v320
  %v956 = vunpack.c.l.b16 %v321
  %v957 = vunpack.c.h.b16 %v321
  %v958 = vunpack.c.l.b16 %v322
  %v959 = vunpack.c.h.b16 %v322
  %v960 = vunpack.c.l.b16 %v323
  %v961 = vunpack.c.h.b16 %v323
  %v962 = vunpack.c.l.b16 %v324
  %v963 = vunpack.c.h.b16 %v324
  %v964 = vunpack.c.l.b16 %v325
  %v965 = vunpack.c.h.b16 %v325
  %v966 = vunpack.c.l.b16 %v326
  %v967 = vunpack.c.h.b16 %v326
  %v968 = vunpack.c.l.b16 %v327
  %v969 = vunpack.c.h.b16 %v327
  %v970 = vunpack.c.l.b16 %v328
  %v971 = vunpack.c.h.b16 %v328
  %v972 = vunpack.c.l.b16 %v329
  %v973 = vunpack.c.h.b16 %v329
  %v974 = vunpack.c.l.b16 %v330
  %v975 = vunpack.c.h.b16 %v330
  %v976 = vunpack.c.l.b16 %v331
  %v977 = vunpack.c.h.b16 %v331
  %v978 = vunpack.c.l.b16 %v332
  %v979 = vunpack.c.h.b16 %v332
  %v980 = vunpack.c.l.b16 %v333
  %v981 = vunpack.c.h.b16 %v333
  %v982 = vunpack.c.l.b16 %v334
  %v983 = vunpack.c.h.b16 %v334
  %v984 = vunpack.c.l.b16 %v335
  %v985 = vunpack.c.h.b16 %v335
  %v986 = vunpack.c.l.b16 %v336
  %v987 = vunpack.c.h.b16 %v336
  %v988 = vunpack.c.l.b16 %v337
  %v989 = vunpack.c.h.b16 %v337
  %v990 = vunpack.c.l.b16 %v338
  %v991 = vunpack.c.h.b16 %v338
  %v992 = vunpack.c.l.b16 %v339
  %v993 = vunpack.c.h.b16 %v339
  %v994 = vunpack.c.l.b16 %v340
  %v995 = vunpack.c.h.b16 %v340
  %v996 = vunpack.c.l.b16 %v341
  %v997 = vunpack.c.h.b16 %v341
  %v998 = vunpack.c.l.b16 %v342
  %v999 = vunpack.c.h.b16 %v342
  %v1000 = vunpack.c.l.b16 %v343
  %v1001 = vunpack.c.h.b16 %v343
  %v1002 = vunpack.c.l.b16 %v344
  %v1003 = vunpack.c.h.b16 %v344
  %v1004 = vunpack.c.l.b16 %v345
  %v1005 = vunpack.c.h.b16 %v345
  %v1006 = vunpack.c.l.b16 %v346
  %v1007 = vunpack.c.h.b16 %v346
  %v1008 = vunpack.c.l.b16 %v347
  %v1009 = vunpack.c.h.b16 %v347
  %v1010 = vunpack.c.l.b16 %v348
  %v1011 = vunpack.c.h.b16 %v348
  %v1012 = vunpack.c.l.b16 %v349
  %v1013 = vunpack.c.h.b16 %v349
  %v1014 = vunpack.c.l.b16 %v350
  %v1015 = vunpack.c.h.b16 %v350
  %v1016 = vunpack.c.l.b16 %v351
  %v1017 = vunpack.c.h.b16 %v351
  %v1018 = vunpack.c.l.b16 %v352
  %v1019 = vunpack.c.h.b16 %v352
  %v1020 = vunpack.c.l.b16 %v353
  %v1021 = vunpack.c.h.b16 %v353
  %v1022 = vunpack.c.l.b16 %v354
  %v1023 = vunpack.c.h.b16 %v354
  %v1024 = vunpack.c.l.b16 %v355
  %v1025 = vunpack.c.h.b16 %v355
  %v1026 = vunpack.c.l.b16 %v356
  %v1027 = vunpack.c.h.b16 %v356
  %v1028 = vunpack.c.l.b16 %v357
  %v1029 = vunpack.c.h.b16 %v357
  %v1030 = vunpack.c.l.b16 %v358
  %v1031 = vunpack.c.h.b16 %v358
  %v1032 = vunpack.c.l.b16 %v359
  %v1033 = vunpack.c.h.b16 %v359
  %v1034 = vunpack.c.l.b16 %v360
  %v1035 = vunpack.c.h.b16 %v360
  %v1036 = vunpack.c.l.b16 %v361
  %v1037 = vunpack.c.h.b16 %v361
  %v1038 = vunpack.c.l.b16 %v362
  %v1039 = vunpack.c.h.b16 %v362
  %v1040 = vunpack.c.l.b16 %v363
  %v1041 = vunpack.c.h.b16 %v363
  %v1042 = vunpack.c.l.b16 %v364
  %v1043 = vunpack.c.h.b16 %v364
  %v1044 = vunpack.c.l.b16 %v365
  %v1045 = vunpack.c.h.b16 %v365
  %v1046 = vunpack.c.l.b16 %v366
  %v1047 = vunpack.c.h.b16 %v366
  %v1048 = vunpack.c.l.b16 %v367
  %v1049 = vunpack.c.h.b16 %v367
  %v1050 = vunpack.c.l.b16 %v368
  %v1051 = vunpack.c.h.b16 %v368
  %v1052 = vunpack.c.l.b16 %v369
  %v1053 = vunpack.c.h.b16 %v369
  %v1054 = vunpack.c.l.b16 %v370
  %v1055 = vunpack.c.h.b16 %v370
  %v1056 = vunpack.c.l.b16 %v371
  %v1057 = vunpack.c.h.b16 %v371
  %v1058 = vunpack.c.l.b16 %v372
  %v1059 = vunpack.c.h.b16 %v372
  %v1060 = vunpack.c.l.b16 %v373
  %v1061 = vunpack.c.h.b16 %v373
  %v1062 = vunpack.c.l.b16 %v374
  %v1063 = vunpack.c.h.b16 %v374
  %v1064 = vunpack.c.l.b16 %v375
  %v1065 = vunpack.c.h.b16 %v375
  %v1066 = vunpack.c.l.b16 %v376
  %v1067 = vunpack.c.h.b16 %v376
  %v1068 = vunpack.c.l.b16 %v377
  %v1069 = vunpack.c.h.b16 %v377
  %v1070 = vunpack.c.l.b16 %v378
  %v1071 = vunpack.c.h.b16 %v378
  %v1072 = vunpack.c.l.b16 %v379
  %v1073 = vunpack.c.h.b16 %v379
  %v1074 = vunpack.c.l.b16 %v380
  %v1075 = vunpack.c.h.b16 %v380
  %v1076 = vunpack.c.l.b16 %v381
  %v1077 = vunpack.c.h.b16 %v381
  %v1078 = vunpack.c.l.b16 %v382
  %v1079 = vunpack.c.h.b16 %v382
  %v1080 = vunpack.c.l.b16 %v383
  %v1081 = vunpack.c.h.b16 %v383
  %v1082 = vunpack.c.l.b16 %v384
  %v1083 = vunpack.c.h.b16 %v384
  %v1084 = vunpack.c.l.b16 %v385
  %v1085 = vunpack.c.h.b16 %v385
  %v1086 = vunpack.c.l.b16 %v386
  %v1087 = vunpack.c.h.b16 %v386
  %v1088 = vunpack.c.l.b16 %v387
  %v1089 = vunpack.c.h.b16 %v387
  %v1090 = vunpack.c.l.b16 %v388
  %v1091 = vunpack.c.h.b16 %v388
  %v1092 = vunpack.c.l.b16 %v389
  %v1093 = vunpack.c.h.b16 %v389
  %v1094 = vunpack.c.l.b16 %v390
  %v1095 = vunpack.c.h.b16 %v390
  %v1096 = vunpack.c.l.b16 %v391
  %v1097 = vunpack.c.h.b16 %v391
  %v1098 = vunpack.c.l.b16 %v392
  %v1099 = vunpack.c.h.b16 %v392
  %v1100 = vunpack.c.l.b16 %v393
  %v1101 = vunpack.c.h.b16 %v393
  %v1102 = vunpack.c.l.b16 %v394
  %v1103 = vunpack.c.h.b16 %v394
  %v1104 = vunpack.c.l.b16 %v395
  %v1105 = vunpack.c.h.b16 %v395
  %v1106 = vunpack.c.l.b16 %v396
  %v1107 = vunpack.c.h.b16 %v396
  %v1108 = vunpack.c.l.b16 %v397
  %v1109 = vunpack.c.h.b16 %v397
  %v1110 = vunpack.c.l.b16 %v398
  %v1111 = vunpack.c.h.b16 %v398
  %v1112 = vunpack.c.l.b16 %v399
  %v1113 = vunpack.c.h.b16 %v399
  %v1114 = vunpack.c.l.b16 %v400
  %v1115 = vunpack.c.h.b16 %v400
  %v1116 = vunpack.c.l.b16 %v401
  %v1117 = vunpack.c.h.b16 %v401
  %v1118 = vunpack.c.l.b16 %v402
  %v1119 = vunpack.c.h.b16 %v402
  %v1120 = vunpack.c.l.b16 %v403
  %v1121 = vunpack.c.h.b16 %v403
  %v1122 = vunpack.c.l.b16 %v404
  %v1123 = vunpack.c.h.b16 %v404
  %v1124 = vunpack.c.l.b16 %v405
  %v1125 = vunpack.c.h.b16 %v405
  %v1126 = vunpack.c.l.b16 %v406
  %v1127 = vunpack.c.h.b16 %v406
  %v1128 = vunpack.c.l.b16 %v407
  %v1129 = vunpack.c.h.b16 %v407
  %v1130 = vunpack.c.l.b16 %v408
  %v1131 = vunpack.c.h.b16 %v408
  %v1132 = vunpack.c.l.b16 %v409
  %v1133 = vunpack.c.h.b16 %v409
  %v1134 = vunpack.c.l.b16 %v410
  %v1135 = vunpack.c.h.b16 %v410
  %v1136 = vunpack.c.l.b16 %v411
  %v1137 = vunpack.c.h.b16 %v411
  %v1138 = vunpack.c.l.b16 %v412
  %v1139 = vunpack.c.h.b16 %v412
  %v1140 = vunpack.c.l.b16 %v413
  %v1141 = vunpack.c.h.b16 %v413
  %v1142 = vunpack.c.l.b16 %v414
  %v1143 = vunpack.c.h.b16 %v414
  %v1144 = vunpack.c.l.b16 %v415
  %v1145 = vunpack.c.h.b16 %v415
  %v1146 = vunpack.c.l.b16 %v416
  %v1147 = vunpack.c.h.b16 %v416
  %v1148 = vunpack.c.l.b16 %v417
  %v1149 = vunpack.c.h.b16 %v417
  %v1150 = vunpack.c.l.b16 %v418
  %v1151 = vunpack.c.h.b16 %v418
  %v1152 = vunpack.c.l.b16 %v419
  %v1153 = vunpack.c.h.b16 %v419
  %v1154 = vunpack.c.l.b16 %v420
  %v1155 = vunpack.c.h.b16 %v420
  %v1156 = vunpack.c.l.b16 %v421
  %v1157 = vunpack.c.h.b16 %v421
  %v1158 = vunpack.c.l.b16 %v422
  %v1159 = vunpack.c.h.b16 %v422
  %v1160 = vunpack.c.l.b16 %v423
  %v1161 = vunpack.c.h.b16 %v423
  %v1162 = vunpack.c.l.b16 %v424
  %v1163 = vunpack.c.h.b16 %v424
  %v1164 = vunpack.c.l.b16 %v425
  %v1165 = vunpack.c.h.b16 %v425
  %v1166 = vunpack.c.l.b16 %v426
  %v1167 = vunpack.c.h.b16 %v426
  %v1168 = vunpack.c.l.b16 %v427
  %v1169 = vunpack.c.h.b16 %v427
  %v1170 = vunpack.c.l.b16 %v428
  %v1171 = vunpack.c.h.b16 %v428
  %v1172 = vunpack.c.l.b16 %v429
  %v1173 = vunpack.c.h.b16 %v429
  %v1174 = vunpack.c.l.b16 %v430
  %v1175 = vunpack.c.h.b16 %v430
  %v1176 = vunpack.c.l.b16 %v431
  %v1177 = vunpack.c.h.b16 %v431
  %v1178 = vunpack.c.l.b16 %v432
  %v1179 = vunpack.c.h.b16 %v432
  %v1180 = vunpack.c.l.b16 %v433
  %v1181 = vunpack.c.h.b16 %v433
  %v1182 = vunpack.c.l.b16 %v434
  %v1183 = vunpack.c.h.b16 %v434
  %v1184 = vunpack.c.l.b16 %v435
  %v1185 = vunpack.c.h.b16 %v435
  %v1186 = vunpack.c.l.b16 %v436
  %v1187 = vunpack.c.h.b16 %v436
  %v1188 = vunpack.c.l.b16 %v437
  %v1189 = vunpack.c.h.b16 %v437
  %v1190 = vunpack.c.l.b16 %v438
  %v1191 = vunpack.c.h.b16 %v438
  %v1192 = vunpack.c.l.b16 %v439
  %v1193 = vunpack.c.h.b16 %v439
  %v1194 = vunpack.c.l.b16 %v440
  %v1195 = vunpack.c.h.b16 %v440
  %v1196 = vunpack.c.l.b16 %v441
  %v1197 = vunpack.c.h.b16 %v441
  %v1198 = vunpack.c.l.b16 %v442
  %v1199 = vunpack.c.h.b16 %v442
  %v1200 = vunpack.c.l.b16 %v443
  %v1201 = vunpack.c.h.b16 %v443
  %v1202 = vunpack.c.l.b16 %v444
  %v1203 = vunpack.c.h.b16 %v444
  %v1204 = vunpack.c.l.b16 %v445
  %v1205 = vunpack.c.h.b16 %v445
  %v1206 = vunpack.c.l.b16 %v446
  %v1207 = vunpack.c.h.b16 %v446
  %v1208 = vunpack.c.l.b16 %v447
  %v1209 = vunpack.c.h.b16 %v447
  %v1210 = vunpack.c.l.b16 %v448
  %v1211 = vunpack.c.h.b16 %v448
  %v1212 = vunpack.c.l.b16 %v449
  %v1213 = vunpack.c.h.b16 %v449
  %v1214 = vunpack.c.l.b16 %v450
  %v1215 = vunpack.c.h.b16 %v450
  %v1216 = vunpack.c.l.b16 %v451
  %v1217 = vunpack.c.h.b16 %v451
  %v1218 = vunpack.c.l.b16 %v452
  %v1219 = vunpack.c.h.b16 %v452
  %v1220 = vunpack.c.l.b16 %v453
  %v1221 = vunpack.c.h.b16 %v453
  %v1222 = vunpack.c.l.b16 %v454
  %v1223 = vunpack.c.h.b16 %v454
  %v1224 = vunpack.c.l.b16 %v455
  %v1225 = vunpack.c.h.b16 %v455
  %v1226 = vunpack.c.l.b16 %v456
  %v1227 = vunpack.c.h.b16 %v456
  %v1228 = vunpack.c.l.b16 %v457
  %v1229 = vunpack.c.h.b16 %v457
  %v1230 = vunpack.c.l.b16 %v458
  %v1231 = vunpack.c.h.b16 %v458
  %v1232 = vunpack.c.l.b16 %v459
  %v1233 = vunpack.c.h.b16 %v459
  %v1234 = vunpack.c.l.b16 %v460
  %v1235 = vunpack.c.h.b16 %v460
  %v1236 = vunpack.c.l.b16 %v461
  %v1237 = vunpack.c.h.b16 %v461
  %v1238 = vunpack.c.l.b16 %v462
  %v1239 = vunpack.c.h.b16 %v462
  %v1240 = vunpack.c.l.b16 %v463
  %v1241 = vunpack.c.h.b16 %v463
  %v1242 = vunpack.c.l.b16 %v464
  %v1243 = vunpack.c.h.b16 %v464
  %v1244 = vunpack.c.l.b16 %v465
  %v1245 = vunpack.c.h.b16 %v465
  %v1246 = vunpack.c.l.b16 %v466
  %v1247 = vunpack.c.h.b16 %v466
  %v1248 = vunpack.c.l.b16 %v467
  %v1249 = vunpack.c.h.b16 %v467
  %v1250 = vunpack.c.l.b16 %v468
  %v1251 = vunpack.c.h.b16 %v468
  %v1252 = vunpack.c.l.b16 %v469
  %v1253 = vunpack.c.h.b16 %v469
  %v1254 = vunpack.c.l.b16 %v470
  %v1255 = vunpack.c.h.b16 %v470
  %v1256 = vunpack.c.l.b16 %v471
  %v1257 = vunpack.c.h.b16 %v471
  %v1258 = vunpack.c.l.b16 %v472
  %v1259 = vunpack.c.h.b16 %v472
  %v1260 = vunpack.c.l.b16 %v473
  %v1261 = vunpack.c.h.b16 %v473
  %v1262 = vunpack.c.l.b16 %v474
  %v1263 = vunpack.c.h.b16 %v474
  %v1264 = vunpack.c.l.b16 %v475
  %v1265 = vunpack.c.h.b16 %v475
  %v1266 = vunpack.c.l.b16 %v476
  %v1267 = vunpack.c.h.b16 %v476
  %v1268 = vunpack.c.l.b16 %v477
  %v1269 = vunpack.c.h.b16 %v477
  %v1270 = vunpack.c.l.b16 %v478
  %v1271 = vunpack.c.h.b16 %v478
  %v1272 = vunpack.c.l.b16 %v479
  %v1273 = vunpack.c.h.b16 %v479
  %v1274 = vunpack.c.l.b16 %v480
  %v1275 = vunpack.c.h.b16 %v480
  %v1276 = vunpack.c.l.b16 %v481
  %v1277 = vunpack.c.h.b16 %v481
  %v1278 = vunpack.c.l.b16 %v482
  %v1279 = vunpack.c.h.b16 %v482
  %v1280 = vunpack.c.l.b16 %v483
  %v1281 = vunpack.c.h.b16 %v483
  %v1282 = vunpack.c.l.b16 %v484
  %v1283 = vunpack.c.h.b16 %v484
  %v1284 = vunpack.c.l.b16 %v485
  %v1285 = vunpack.c.h.b16 %v485
  %v1286 = vunpack.c.l.b16 %v486
  %v1287 = vunpack.c.h.b16 %v486
  %v1288 = vunpack.c.l.b16 %v487
  %v1289 = vunpack.c.h.b16 %v487
  %v1290 = vunpack.c.l.b16 %v488
  %v1291 = vunpack.c.h.b16 %v488
  %v1292 = vunpack.c.l.b16 %v489
  %v1293 = vunpack.c.h.b16 %v489
  %v1294 = vunpack.c.l.b16 %v490
  %v1295 = vunpack.c.h.b16 %v490
  %v1296 = vunpack.c.l.b16 %v491
  %v1297 = vunpack.c.h.b16 %v491
  %v1298 = vunpack.c.l.b16 %v492
  %v1299 = vunpack.c.h.b16 %v492
  %v1300 = vunpack.c.l.b16 %v493
  %v1301 = vunpack.c.h.b16 %v493
  %v1302 = vunpack.c.l.b16 %v494
  %v1303 = vunpack.c.h.b16 %v494
  %v1304 = vunpack.c.l.b16 %v495
  %v1305 = vunpack.c.h.b16 %v495
  %v1306 = vpack.c.b16 %v802, %v794
  %v1307 = vpack.c.b16 %v803, %v795
  %v1308 = vpack.c.b16 %v804, %v796
  %v1309 = vpack.c.b16 %v805, %v797
  %v1310 = vpack.c.b16 %v806, %v798
  %v1311 = vpack.c.b16 %v807, %v799
  %v1312 = vpack.c.b16 %v808, %v800
  %v1313 = vpack.c.b16 %v809, %v801
  %v1314 = vpack.c.b16 %v818, %v810
  %v1315 = vpack.c.b16 %v819, %v811
  %v1316 = vpack.c.b16 %v820, %v812
  %v1317 = vpack.c.b16 %v821, %v813
  %v1318 = vpack.c.b16 %v822, %v814
  %v1319 = vpack.c.b16 %v823, %v815
  %v1320 = vpack.c.b16 %v824, %v816
  %v1321 = vpack.c.b16 %v825, %v817
  %v1322 = vpack.c.b16 %v834, %v826
  %v1323 = vpack.c.b16 %v835, %v827
  %v1324 = vpack.c.b16 %v836, %v828
  %v1325 = vpack.c.b16 %v837, %v829
  %v1326 = vpack.c.b16 %v838, %v830
  %v1327 = vpack.c.b16 %v839, %v831
  %v1328 = vpack.c.b16 %v840, %v832
  %v1329 = vpack.c.b16 %v841, %v833
  %v1330 = vpack.c.b16 %v850, %v842
  %v1331 = vpack.c.b16 %v851, %v843
  %v1332 = vpack.c.b16 %v852, %v844
  %v1333 = vpack.c.b16 %v853, %v845
  %v1334 = vpack.c.b16 %v854, %v846
  %v1335 = vpack.c.b16 %v855, %v847
  %v1336 = vpack.c.b16 %v856, %v848
  %v1337 = vpack.c.b16 %v857, %v849
  %v1338 = vpack.c.b16 %v866, %v858
  %v1339 = vpack.c.b16 %v867, %v859
  %v1340 = vpack.c.b16 %v868, %v860
  %v1341 = vpack.c.b16 %v869, %v861
  %v1342 = vpack.c.b16 %v870, %v862
  %v1343 = vpack.c.b16 %v871, %v863
  %v1344 = vpack.c.b16 %v872, %v864
  %v1345 = vpack.c.b16 %v873, %v865
  %v1346 = vpack.c.b16 %v882, %v874
  %v1347 = vpack.c.b16 %v883, %v875
  %v1348 = vpack.c.b16 %v884, %v876
  %v1349 = vpack.c.b16 %v885, %v877
  %v1350 = vpack.c.b16 %v886, %v878
  %v1351 = vpack.c.b16 %v887, %v879
  %v1352 = vpack.c.b16 %v888, %v880
  %v1353 = vpack.c.b16 %v889, %v881
  %v1354 = vpack.c.b16 %v898, %v890
  %v1355 = vpack.c.b16 %v899, %v891
  %v1356 = vpack.c.b16 %v900, %v892
  %v1357 = vpack.c.b16 %v901, %v893
  %v1358 = vpack.c.b16 %v902, %v894
  %v1359 = vpack.c.b16 %v903, %v895
  %v1360 = vpack.c.b16 %v904, %v896
  %v1361 = vpack.c.b16 %v905, %v897
  %v1362 = vpack.c.b16 %v914, %v906
  %v1363 = vpack.c.b16 %v915, %v907
  %v1364 = vpack.c.b16 %v916, %v908
  %v1365 = vpack.c.b16 %v917, %v909
  %v1366 = vpack.c.b16 %v918, %v910
  %v1367 = vpack.c.b16 %v919, %v911
  %v1368 = vpack.c.b16 %v920, %v912
  %v1369 = vpack.c.b16 %v921, %v913
  %v1370 = vpack.c.b16 %v930, %v922
  %v1371 = vpack.c.b16 %v931, %v923
  %v1372 = vpack.c.b16 %v932, %v924
  %v1373 = vpack.c.b16 %v933, %v925
  %v1374 = vpack.c.b16 %v934, %v926
  %v1375 = vpack.c.b16 %v935, %v927
  %v1376 = vpack.c.b16 %v936, %v928
  %v1377 = vpack.c.b16 %v937, %v929
  %v1378 = vpack.c.b16 %v946, %v938
  %v1379 = vpack.c.b16 %v947, %v939
  %v1380 = vpack.c.b16 %v948, %v940
  %v1381 = vpack.c.b16 %v949, %v941
  %v1382 = vpack.c.b16 %v950, %v942
  %v1383 = vpack.c.b16 %v951, %v943
  %v1384 = vpack.c.b16 %v952, %v944
  %v1385 = vpack.c.b16 %v953, %v945
  %v1386 = vpack.c.b16 %v962, %v954
  %v1387 = vpack.c.b16 %v963, %v955
  %v1388 = vpack.c.b16 %v964, %v956
  %v1389 = vpack.c.b16 %v965, %v957
  %v1390 = vpack.c.b16 %v966, %v958
  %v1391 = vpack.c.b16 %v967, %v959
  %v1392 = vpack.c.b16 %v968, %v960
  %v1393 = vpack.c.b16 %v969, %v961
  %v1394 = vpack.c.b16 %v978, %v970
  %v1395 = vpack.c.b16 %v979, %v971
  %v1396 = vpack.c.b16 %v980, %v972
  %v1397 = vpack.c.b16 %v981, %v973
  %v1398 = vpack.c.b16 %v982, %v974
  %v1399 = vpack.c.b16 %v983, %v975
  %v1400 = vpack.c.b16 %v984, %v976
  %v1401 = vpack.c.b16 %v985, %v977
  %v1402 = vpack.c.b16 %v994, %v986
  %v1403 = vpack.c.b16 %v995, %v987
  %v1404 = vpack.c.b16 %v996, %v988
  %v1405 = vpack.c.b16 %v997, %v989
  %v1406 = vpack.c.b16 %v998, %v990
  %v1407 = vpack.c.b16 %v999, %v991
  %v1408 = vpack.c.b16 %v1000, %v992
  %v1409 = vpack.c.b16 %v1001, %v993
  %v1410 = vpack.c.b16 %v1010, %v1002
  %v1411 = vpack.c.b16 %v1011, %v1003
  %v1412 = vpack.c.b16 %v1012, %v1004
  %v1413 = vpack.c.b16 %v1013, %v1005
  %v1414 = vpack.c.b16 %v1014, %v1006
  %v1415 = vpack.c.b16 %v1015, %v1007
  %v1416 = vpack.c.b16 %v1016, %v1008
  %v1417 = vpack.c.b16 %v1017, %v1009
  %v1418 = vpack.c.b16 %v1026, %v1018
  %v1419 = vpack.c.b16 %v1027, %v1019
  %v1420 = vpack.c.b16 %v1028, %v1020
  %v1421 = vpack.c.b16 %v1029, %v1021
  %v1422 = vpack.c.b16 %v1030, %v1022
  %v1423 = vpack.c.b16 %v1031, %v1023
  %v1424 = vpack.c.b16 %v1032, %v1024
  %v1425 = vpack.c.b16 %v1033, %v1025
  %v1426 = vpack.c.b16 %v1042, %v1034
  %v1427 = vpack.c.b16 %v1043, %v1035
  %v1428 = vpack.c.b16 %v1044, %v1036
  %v1429 = vpack.c.b16 %v1045, %v1037
  %v1430 = vpack.c.b16 %v1046, %v1038
  %v1431 = vpack.c.b16 %v1047, %v1039
  %v1432 = vpack.c.b16 %v1048, %v1040
  %v1433 = vpack.c.b16 %v1049, %v1041
  %v1434 = vpack.c.b16 %v1058, %v1050
  %v1435 = vpack.c.b16 %v1059, %v1051
  %v1436 = vpack.c.b16 %v1060, %v1052
  %v1437 = vpack.c.b16 %v1061, %v1053
  %v1438 = vpack.c.b16 %v1062, %v1054
  %v1439 = vpack.c.b16 %v1063, %v1055
  %v1440 = vpack.c.b16 %v1064, %v1056
  %v1441 = vpack.c.b16 %v1065, %v1057
  %v1442 = vpack.c.b16 %v1074, %v1066
  %v1443 = vpack.c.b16 %v1075, %v1067
  %v1444 = vpack.c.b16 %v1076, %v1068
  %v1445 = vpack.c.b16 %v1077, %v1069
  %v1446 = vpack.c.b16 %v1078, %v1070
  %v1447 = vpack.c.b16 %v1079, %v1071
  %v1448 = vpack.c.b16 %v1080, %v1072
  %v1449 = vpack.c.b16 %v1081, %v1073
  %v1450 = vpack.c.b16 %v1090, %v1082
  %v1451 = vpack.c.b16 %v1091, %v1083
  %v1452 = vpack.c.b16 %v1092, %v1084
  %v1453 = vpack.c.b16 %v1093, %v1085
  %v1454 = vpack.c.b16 %v1094, %v1086
  %v1455 = vpack.c.b16 %v1095, %v1087
  %v1456 = vpack.c.b16 %v1096, %v1088
  %v1457 = vpack.c.b16 %v1097, %v1089
  %v1458 = vpack.c.b16 %v1106, %v1098
  %v1459 = vpack.c.b16 %v1107, %v1099
  %v1460 = vpack.c.b16 %v1108, %v1100
  %v1461 = vpack.c.b16 %v1109, %v1101
  %v1462 = vpack.c.b16 %v1110, %v1102
  %v1463 = vpack.c.b16 %v1111, %v1103
  %v1464 = vpack.c.b16 %v1112, %v1104
  %v1465 = vpack.c.b16 %v1113, %v1105
  %v1466 = vpack.c.b16 %v1122, %v1114
  %v1467 = vpack.c.b16 %v1123, %v1115
  %v1468 = vpack.c.b16 %v1124, %v1116
  %v1469 = vpack.c.b16 %v1125, %v1117
  %v1470 = vpack.c.b16 %v1126, %v1118
  %v1471 = vpack.c.b16 %v1127, %v1119
  %v1472 = vpack.c.b16 %v1128, %v1120
  %v1473 = vpack.c.b16 %v1129, %v1121
  %v1474 = vpack.c.b16 %v1138, %v1130
  %v1475 = vpack.c.b16 %v1139, %v1131
  %v1476 = vpack.c.b16 %v1140, %v1132
  %v1477 = vpack.c.b16 %v1141, %v1133
  %v1478 = vpack.c.b16 %v1142, %v1134
  %v1479 = vpack.c.b16 %v1143, %v1135
  %v1480 = vpack.c.b16 %v1144, %v1136
  %v1481 = vpack.c.b16 %v1145, %v1137
  %v1482 = vpack.c.b16 %v1154, %v1146
  %v1483 = vpack.c.b16 %v1155, %v1147
  %v1484 = vpack.c.b16 %v1156, %v1148
  %v1485 = vpack.c.b16 %v1157, %v1149
  %v1486 = vpack.c.b16 %v1158, %v1150
  %v1487 = vpack.c.b16 %v1159, %v1151
  %v1488 = vpack.c.b16 %v1160, %v1152
  %v1489 = vpack.c.b16 %v1161, %v1153
  %v1490 = vpack.c.b16 %v1170, %v1162
  %v1491 = vpack.c.b16 %v1171, %v1163
  %v1492 = vpack.c.b16 %v1172, %v1164
  %v1493 = vpack.c.b16 %v1173, %v1165
  %v1494 = vpack.c.b16 %v1174, %v1166
  %v1495 = vpack.c.b16 %v1175, %v1167
  %v1496 = vpack.c.b16 %v1176, %v1168
  %v1497 = vpack.c.b16 %v1177, %v1169
  %v1498 = vpack.c.b16 %v1186, %v1178
  %v1499 = vpack.c.b16 %v1187, %v1179
  %v1500 = vpack.c.b16 %v1188, %v1180
  %v1501 = vpack.c.b16 %v1189, %v1181
  %v1502 = vpack.c.b16 %v1190, %v1182
  %v1503 = vpack.c.b16 %v1191, %v1183
  %v1504 = vpack.c.b16 %v1192, %v1184
  %v1505 = vpack.c.b16 %v1193, %v1185
  %v1506 = vpack.c.b16 %v1202, %v1194
  %v1507 = vpack.c.b16 %v1203, %v1195
  %v1508 = vpack.c.b16 %v1204, %v1196
  %v1509 = vpack.c.b16 %v1205, %v1197
  %v1510 = vpack.c.b16 %v1206, %v1198
  %v1511 = vpack.c.b16 %v1207, %v1199
  %v1512 = vpack.c.b16 %v1208, %v1200
  %v1513 = vpack.c.b16 %v1209, %v1201
  %v1514 = vpack.c.b16 %v1218, %v1210
  %v1515 = vpack.c.b16 %v1219, %v1211
  %v1516 = vpack.c.b16 %v1220, %v1212
  %v1517 = vpack.c.b16 %v1221, %v1213
  %v1518 = vpack.c.b16 %v1222, %v1214
  %v1519 = vpack.c.b16 %v1223, %v1215
  %v1520 = vpack.c.b16 %v1224, %v1216
  %v1521 = vpack.c.b16 %v1225, %v1217
  %v1522 = vpack.c.b16 %v1234, %v1226
  %v1523 = vpack.c.b16 %v1235, %v1227
  %v1524 = vpack.c.b16 %v1236, %v1228
  %v1525 = vpack.c.b16 %v1237, %v1229
  %v1526 = vpack.c.b16 %v1238, %v1230
  %v1527 = vpack.c.b16 %v1239, %v1231
  %v1528 = vpack.c.b16 %v1240, %v1232
  %v1529 = vpack.c.b16 %v1241, %v1233
  %v1530 = vpack.c.b16 %v1250, %v1242
  %v1531 = vpack.c.b16 %v1251, %v1243
  %v1532 = vpack.c.b16 %v1252, %v1244
  %v1533 = vpack.c.b16 %v1253, %v1245
  %v1534 = vpack.c.b16 %v1254, %v1246
  %v1535 = vpack.c.b16 %v1255, %v1247
  %v1536 = vpack.c.b16 %v1256, %v1248
  %v1537 = vpack.c.b16 %v1257, %v1249
  %v1538 = vpack.c.b16 %v1266, %v1258
  %v1539 = vpack.c.b16 %v1267, %v1259
  %v1540 = vpack.c.b16 %v1268, %v1260
  %v1541 = vpack.c.b16 %v1269, %v1261
  %v1542 = vpack.c.b16 %v1270, %v1262
  %v1543 = vpack.c.b16 %v1271, %v1263
  %v1544 = vpack.c.b16 %v1272, %v1264
  %v1545 = vpack.c.b16 %v1273, %v1265
  %v1546 = vpack.c.b16 %v1282, %v1274
  %v1547 = vpack.c.b16 %v1283, %v1275
  %v1548 = vpack.c.b16 %v1284, %v1276
  %v1549 = vpack.c.b16 %v1285, %v1277
  %v1550 = vpack.c.b16 %v1286, %v1278
  %v1551 = vpack.c.b16 %v1287, %v1279
  %v1552 = vpack.c.b16 %v1288, %v1280
  %v1553 = vpack.c.b16 %v1289, %v1281
  %v1554 = vpack.c.b16 %v1298, %v1290
  %v1555 = vpack.c.b16 %v1299, %v1291
  %v1556 = vpack.c.b16 %v1300, %v1292
  %v1557 = vpack.c.b16 %v1301, %v1293
  %v1558 = vpack.c.b16 %v1302, %v1294
  %v1559 = vpack.c.b16 %v1303, %v1295
  %v1560 = vpack.c.b16 %v1304, %v1296
  %v1561 = vpack.c.b16 %v1305, %v1297
  %1818 = vmatprep.subr.bf16.mxu0 %v1307
  %1819 = vmatpush1.bf16.msra.mxu0 %v1306
  %1820 = vmatprep.subr.bf16.mxu0 %v1315
  %1821 = vmatpush1.bf16.msra.mxu0 %v1314
  %1822 = vmatprep.subr.bf16.mxu0 %v1323
  %1823 = vmatpush1.bf16.msra.mxu0 %v1322
  %1824 = vmatprep.subr.bf16.mxu0 %v1331
  %1825 = vmatpush1.bf16.msra.mxu0 %v1330
  %1826 = vmatprep.subr.bf16.mxu0 %v1339
  %1827 = vmatpush1.bf16.msra.mxu0 %v1338
  %1828 = vmatprep.subr.bf16.mxu0 %v1347
  %1829 = vmatpush1.bf16.msra.mxu0 %v1346
  %1830 = vmatprep.subr.bf16.mxu0 %v1355
  %1831 = vmatpush1.bf16.msra.mxu0 %v1354
  %1832 = vmatprep.subr.bf16.mxu0 %v1363
  %1833 = vmatpush1.bf16.msra.mxu0 %v1362
  %1834 = vmatprep.subr.bf16.mxu0 %v1371
  %1835 = vmatpush1.bf16.msra.mxu0 %v1370
  %1836 = vmatprep.subr.bf16.mxu0 %v1379
  %1837 = vmatpush1.bf16.msra.mxu0 %v1378
  %1838 = vmatprep.subr.bf16.mxu0 %v1387
  %1839 = vmatpush1.bf16.msra.mxu0 %v1386
  %1840 = vmatprep.subr.bf16.mxu0 %v1395
  %1841 = vmatpush1.bf16.msra.mxu0 %v1394
  %1842 = vmatprep.subr.bf16.mxu0 %v1403
  %1843 = vmatpush1.bf16.msra.mxu0 %v1402
  %1844 = vmatprep.subr.bf16.mxu0 %v1411
  %1845 = vmatpush1.bf16.msra.mxu0 %v1410
  %1846 = vmatprep.subr.bf16.mxu0 %v1419
  %1847 = vmatpush1.bf16.msra.mxu0 %v1418
  %1848 = vmatprep.subr.bf16.mxu0 %v1427
  %1849 = vmatpush1.bf16.msra.mxu0 %v1426
  %1850 = vmatprep.mubr.bf16.mxu0 %v237
  %1851 = vmatmul.mubr.bf16.gmra.mrb[0].mxu0 %v236
  %v1852 = vpop.f32.mrb[0].mxu0
  %v1853 = vadd.f32 %v501, %v1852
  %v1854 = vpop.f32.mrb[0].mxu0
  %v1855 = vadd.f32 %v505, %v1854
  %v1856 = vpop.f32.mrb[0].mxu0
  %v1857 = vpop.f32.mrb[0].mxu0
  %1858 = vdwg.mxu0
  %1859 = vmatprep.subr.bf16.mxu0 %v1435
  %1860 = vmatpush1.bf16.msra.mxu0 %v1434
  %1861 = vmatprep.subr.bf16.mxu0 %v1443
  %1862 = vmatpush1.bf16.msra.mxu0 %v1442
  %1863 = vmatprep.subr.bf16.mxu0 %v1451
  %1864 = vmatpush1.bf16.msra.mxu0 %v1450
  %1865 = vmatprep.subr.bf16.mxu0 %v1459
  %1866 = vmatpush1.bf16.msra.mxu0 %v1458
  %1867 = vmatprep.subr.bf16.mxu0 %v1467
  %1868 = vmatpush1.bf16.msra.mxu0 %v1466
  %1869 = vmatprep.subr.bf16.mxu0 %v1475
  %1870 = vmatpush1.bf16.msra.mxu0 %v1474
  %1871 = vmatprep.subr.bf16.mxu0 %v1483
  %1872 = vmatpush1.bf16.msra.mxu0 %v1482
  %1873 = vmatprep.subr.bf16.mxu0 %v1491
  %1874 = vmatpush1.bf16.msra.mxu0 %v1490
  %1875 = vmatprep.subr.bf16.mxu0 %v1499
  %1876 = vmatpush1.bf16.msra.mxu0 %v1498
  %1877 = vmatprep.subr.bf16.mxu0 %v1507
  %1878 = vmatpush1.bf16.msra.mxu0 %v1506
  %1879 = vmatprep.subr.bf16.mxu0 %v1515
  %1880 = vmatpush1.bf16.msra.mxu0 %v1514
  %1881 = vmatprep.subr.bf16.mxu0 %v1523
  %1882 = vmatpush1.bf16.msra.mxu0 %v1522
  %1883 = vmatprep.subr.bf16.mxu0 %v1531
  %1884 = vmatpush1.bf16.msra.mxu0 %v1530
  %1885 = vmatprep.subr.bf16.mxu0 %v1539
  %1886 = vmatpush1.bf16.msra.mxu0 %v1538
  %1887 = vmatprep.subr.bf16.mxu0 %v1547
  %1888 = vmatpush1.bf16.msra.mxu0 %v1546
  %1889 = vmatprep.subr.bf16.mxu0 %v1555
  %1890 = vmatpush1.bf16.msra.mxu0 %v1554
  %1891 = vmatprep.mubr.bf16.mxu0 %v239
  %1892 = vmatmul.mubr.bf16.gmra.mrb[0].mxu0 %v238
  %v1893 = vpop.f32.mrb[0].mxu0
  %v1894 = vadd.f32 %v1853, %v1893
  %v1895 = vpop.f32.mrb[0].mxu0
  %v1896 = vadd.f32 %v1855, %v1895
  %v1897 = vpop.f32.mrb[0].mxu0
  %v1898 = vpop.f32.mrb[0].mxu0
  %1899 = vdwg.mxu0
  %1900 = vmatprep.subr.bf16.mxu0 %v1309
  %1901 = vmatpush1.bf16.msra.mxu0 %v1308
  %1902 = vmatprep.subr.bf16.mxu0 %v1317
  %1903 = vmatpush1.bf16.msra.mxu0 %v1316
  %1904 = vmatprep.subr.bf16.mxu0 %v1325
  %1905 = vmatpush1.bf16.msra.mxu0 %v1324
  %1906 = vmatprep.subr.bf16.mxu0 %v1333
  %1907 = vmatpush1.bf16.msra.mxu0 %v1332
  %1908 = vmatprep.subr.bf16.mxu0 %v1341
  %1909 = vmatpush1.bf16.msra.mxu0 %v1340
  %1910 = vmatprep.subr.bf16.mxu0 %v1349
  %1911 = vmatpush1.bf16.msra.mxu0 %v1348
  %1912 = vmatprep.subr.bf16.mxu0 %v1357
  %1913 = vmatpush1.bf16.msra.mxu0 %v1356
  %1914 = vmatprep.subr.bf16.mxu0 %v1365
  %1915 = vmatpush1.bf16.msra.mxu0 %v1364
  %1916 = vmatprep.subr.bf16.mxu0 %v1373
  %1917 = vmatpush1.bf16.msra.mxu0 %v1372
  %1918 = vmatprep.subr.bf16.mxu0 %v1381
  %1919 = vmatpush1.bf16.msra.mxu0 %v1380
  %1920 = vmatprep.subr.bf16.mxu0 %v1389
  %1921 = vmatpush1.bf16.msra.mxu0 %v1388
  %1922 = vmatprep.subr.bf16.mxu0 %v1397
  %1923 = vmatpush1.bf16.msra.mxu0 %v1396
  %1924 = vmatprep.subr.bf16.mxu0 %v1405
  %1925 = vmatpush1.bf16.msra.mxu0 %v1404
  %1926 = vmatprep.subr.bf16.mxu0 %v1413
  %1927 = vmatpush1.bf16.msra.mxu0 %v1412
  %1928 = vmatprep.subr.bf16.mxu0 %v1421
  %1929 = vmatpush1.bf16.msra.mxu0 %v1420
  %1930 = vmatprep.subr.bf16.mxu0 %v1429
  %1931 = vmatpush1.bf16.msra.mxu0 %v1428
  %1932 = vmatprep.mubr.bf16.mxu0 %v237
  %1933 = vmatmul.mubr.bf16.gmra.mrb[0].mxu0 %v236
  %v1934 = vpop.f32.mrb[0].mxu0
  %v1935 = vadd.f32 %v509, %v1934
  %v1936 = vpop.f32.mrb[0].mxu0
  %v1937 = vadd.f32 %v513, %v1936
  %v1938 = vpop.f32.mrb[0].mxu0
  %v1939 = vpop.f32.mrb[0].mxu0
  %1940 = vdwg.mxu0
  %1941 = vmatprep.subr.bf16.mxu0 %v1437
  %1942 = vmatpush1.bf16.msra.mxu0 %v1436
  %1943 = vmatprep.subr.bf16.mxu0 %v1445
  %1944 = vmatpush1.bf16.msra.mxu0 %v1444
  %1945 = vmatprep.subr.bf16.mxu0 %v1453
  %1946 = vmatpush1.bf16.msra.mxu0 %v1452
  %1947 = vmatprep.subr.bf16.mxu0 %v1461
  %1948 = vmatpush1.bf16.msra.mxu0 %v1460
  %1949 = vmatprep.subr.bf16.mxu0 %v1469
  %1950 = vmatpush1.bf16.msra.mxu0 %v1468
  %1951 = vmatprep.subr.bf16.mxu0 %v1477
  %1952 = vmatpush1.bf16.msra.mxu0 %v1476
  %1953 = vmatprep.subr.bf16.mxu0 %v1485
  %1954 = vmatpush1.bf16.msra.mxu0 %v1484
  %1955 = vmatprep.subr.bf16.mxu0 %v1493
  %1956 = vmatpush1.bf16.msra.mxu0 %v1492
  %1957 = vmatprep.subr.bf16.mxu0 %v1501
  %1958 = vmatpush1.bf16.msra.mxu0 %v1500
  %1959 = vmatprep.subr.bf16.mxu0 %v1509
  %1960 = vmatpush1.bf16.msra.mxu0 %v1508
  %1961 = vmatprep.subr.bf16.mxu0 %v1517
  %1962 = vmatpush1.bf16.msra.mxu0 %v1516
  %1963 = vmatprep.subr.bf16.mxu0 %v1525
  %1964 = vmatpush1.bf16.msra.mxu0 %v1524
  %1965 = vmatprep.subr.bf16.mxu0 %v1533
  %1966 = vmatpush1.bf16.msra.mxu0 %v1532
  %1967 = vmatprep.subr.bf16.mxu0 %v1541
  %1968 = vmatpush1.bf16.msra.mxu0 %v1540
  %1969 = vmatprep.subr.bf16.mxu0 %v1549
  %1970 = vmatpush1.bf16.msra.mxu0 %v1548
  %1971 = vmatprep.subr.bf16.mxu0 %v1557
  %1972 = vmatpush1.bf16.msra.mxu0 %v1556
  %1973 = vmatprep.mubr.bf16.mxu0 %v239
  %1974 = vmatmul.mubr.bf16.gmra.mrb[0].mxu0 %v238
  %v1975 = vpop.f32.mrb[0].mxu0
  %v1976 = vadd.f32 %v1935, %v1975
  %v1977 = vpop.f32.mrb[0].mxu0
  %v1978 = vadd.f32 %v1937, %v1977
  %v1979 = vpop.f32.mrb[0].mxu0
  %v1980 = vpop.f32.mrb[0].mxu0
  %1981 = vdwg.mxu0
  %1982 = vmatprep.subr.bf16.mxu0 %v1311
  %1983 = vmatpush1.bf16.msra.mxu0 %v1310
  %1984 = vmatprep.subr.bf16.mxu0 %v1319
  %1985 = vmatpush1.bf16.msra.mxu0 %v1318
  %1986 = vmatprep.subr.bf16.mxu0 %v1327
  %1987 = vmatpush1.bf16.msra.mxu0 %v1326
  %1988 = vmatprep.subr.bf16.mxu0 %v1335
  %1989 = vmatpush1.bf16.msra.mxu0 %v1334
  %1990 = vmatprep.subr.bf16.mxu0 %v1343
  %1991 = vmatpush1.bf16.msra.mxu0 %v1342
  %1992 = vmatprep.subr.bf16.mxu0 %v1351
  %1993 = vmatpush1.bf16.msra.mxu0 %v1350
  %1994 = vmatprep.subr.bf16.mxu0 %v1359
  %1995 = vmatpush1.bf16.msra.mxu0 %v1358
  %1996 = vmatprep.subr.bf16.mxu0 %v1367
  %1997 = vmatpush1.bf16.msra.mxu0 %v1366
  %1998 = vmatprep.subr.bf16.mxu0 %v1375
  %1999 = vmatpush1.bf16.msra.mxu0 %v1374
  %2000 = vmatprep.subr.bf16.mxu0 %v1383
  %2001 = vmatpush1.bf16.msra.mxu0 %v1382
  %2002 = vmatprep.subr.bf16.mxu0 %v1391
  %2003 = vmatpush1.bf16.msra.mxu0 %v1390
  %2004 = vmatprep.subr.bf16.mxu0 %v1399
  %2005 = vmatpush1.bf16.msra.mxu0 %v1398
  %2006 = vmatprep.subr.bf16.mxu0 %v1407
  %2007 = vmatpush1.bf16.msra.mxu0 %v1406
  %2008 = vmatprep.subr.bf16.mxu0 %v1415
  %2009 = vmatpush1.bf16.msra.mxu0 %v1414
  %2010 = vmatprep.subr.bf16.mxu0 %v1423
  %2011 = vmatpush1.bf16.msra.mxu0 %v1422
  %2012 = vmatprep.subr.bf16.mxu0 %v1431
  %2013 = vmatpush1.bf16.msra.mxu0 %v1430
  %2014 = vmatprep.mubr.bf16.mxu0 %v237
  %2015 = vmatmul.mubr.bf16.gmra.mrb[0].mxu0 %v236
  %v2016 = vpop.f32.mrb[0].mxu0
  %v2017 = vadd.f32 %v517, %v2016
  %v2018 = vpop.f32.mrb[0].mxu0
  %v2019 = vadd.f32 %v521, %v2018
  %v2020 = vpop.f32.mrb[0].mxu0
  %v2021 = vpop.f32.mrb[0].mxu0
  %2022 = vdwg.mxu0
  %2023 = vmatprep.subr.bf16.mxu0 %v1439
  %2024 = vmatpush1.bf16.msra.mxu0 %v1438
  %2025 = vmatprep.subr.bf16.mxu0 %v1447
  %2026 = vmatpush1.bf16.msra.mxu0 %v1446
  %2027 = vmatprep.subr.bf16.mxu0 %v1455
  %2028 = vmatpush1.bf16.msra.mxu0 %v1454
  %2029 = vmatprep.subr.bf16.mxu0 %v1463
  %2030 = vmatpush1.bf16.msra.mxu0 %v1462
  %2031 = vmatprep.subr.bf16.mxu0 %v1471
  %2032 = vmatpush1.bf16.msra.mxu0 %v1470
  %2033 = vmatprep.subr.bf16.mxu0 %v1479
  %2034 = vmatpush1.bf16.msra.mxu0 %v1478
  %2035 = vmatprep.subr.bf16.mxu0 %v1487
  %2036 = vmatpush1.bf16.msra.mxu0 %v1486
  %2037 = vmatprep.subr.bf16.mxu0 %v1495
  %2038 = vmatpush1.bf16.msra.mxu0 %v1494
  %2039 = vmatprep.subr.bf16.mxu0 %v1503
  %2040 = vmatpush1.bf16.msra.mxu0 %v1502
  %2041 = vmatprep.subr.bf16.mxu0 %v1511
  %2042 = vmatpush1.bf16.msra.mxu0 %v1510
  %2043 = vmatprep.subr.bf16.mxu0 %v1519
  %2044 = vmatpush1.bf16.msra.mxu0 %v1518
  %2045 = vmatprep.subr.bf16.mxu0 %v1527
  %2046 = vmatpush1.bf16.msra.mxu0 %v1526
  %2047 = vmatprep.subr.bf16.mxu0 %v1535
  %2048 = vmatpush1.bf16.msra.mxu0 %v1534
  %2049 = vmatprep.subr.bf16.mxu0 %v1543
  %2050 = vmatpush1.bf16.msra.mxu0 %v1542
  %2051 = vmatprep.subr.bf16.mxu0 %v1551
  %2052 = vmatpush1.bf16.msra.mxu0 %v1550
  %2053 = vmatprep.subr.bf16.mxu0 %v1559
  %2054 = vmatpush1.bf16.msra.mxu0 %v1558
  %2055 = vmatprep.mubr.bf16.mxu0 %v239
  %2056 = vmatmul.mubr.bf16.gmra.mrb[0].mxu0 %v238
  %v2057 = vpop.f32.mrb[0].mxu0
  %v2058 = vadd.f32 %v2017, %v2057
  %v2059 = vpop.f32.mrb[0].mxu0
  %v2060 = vadd.f32 %v2019, %v2059
  %v2061 = vpop.f32.mrb[0].mxu0
  %v2062 = vpop.f32.mrb[0].mxu0
  %2063 = vdwg.mxu0
  %2064 = vmatprep.subr.bf16.mxu0 %v1313
  %2065 = vmatpush1.bf16.msra.mxu0 %v1312
  %2066 = vmatprep.subr.bf16.mxu0 %v1321
  %2067 = vmatpush1.bf16.msra.mxu0 %v1320
  %2068 = vmatprep.subr.bf16.mxu0 %v1329
  %2069 = vmatpush1.bf16.msra.mxu0 %v1328
  %2070 = vmatprep.subr.bf16.mxu0 %v1337
  %2071 = vmatpush1.bf16.msra.mxu0 %v1336
  %2072 = vmatprep.subr.bf16.mxu0 %v1345
  %2073 = vmatpush1.bf16.msra.mxu0 %v1344
  %2074 = vmatprep.subr.bf16.mxu0 %v1353
  %2075 = vmatpush1.bf16.msra.mxu0 %v1352
  %2076 = vmatprep.subr.bf16.mxu0 %v1361
  %2077 = vmatpush1.bf16.msra.mxu0 %v1360
  %2078 = vmatprep.subr.bf16.mxu0 %v1369
  %2079 = vmatpush1.bf16.msra.mxu0 %v1368
  %2080 = vmatprep.subr.bf16.mxu0 %v1377
  %2081 = vmatpush1.bf16.msra.mxu0 %v1376
  %2082 = vmatprep.subr.bf16.mxu0 %v1385
  %2083 = vmatpush1.bf16.msra.mxu0 %v1384
  %2084 = vmatprep.subr.bf16.mxu0 %v1393
  %2085 = vmatpush1.bf16.msra.mxu0 %v1392
  %2086 = vmatprep.subr.bf16.mxu0 %v1401
  %2087 = vmatpush1.bf16.msra.mxu0 %v1400
  %2088 = vmatprep.subr.bf16.mxu0 %v1409
  %2089 = vmatpush1.bf16.msra.mxu0 %v1408
  %2090 = vmatprep.subr.bf16.mxu0 %v1417
  %2091 = vmatpush1.bf16.msra.mxu0 %v1416
  %2092 = vmatprep.subr.bf16.mxu0 %v1425
  %2093 = vmatpush1.bf16.msra.mxu0 %v1424
  %2094 = vmatprep.subr.bf16.mxu0 %v1433
  %2095 = vmatpush1.bf16.msra.mxu0 %v1432
  %2096 = vmatprep.mubr.bf16.mxu0 %v237
  %2097 = vmatmul.mubr.bf16.gmra.mrb[0].mxu0 %v236
  %v2098 = vpop.f32.mrb[0].mxu0
  %v2099 = vadd.f32 %v525, %v2098
  %v2100 = vpop.f32.mrb[0].mxu0
  %v2101 = vadd.f32 %v529, %v2100
  %v2102 = vpop.f32.mrb[0].mxu0
  %v2103 = vpop.f32.mrb[0].mxu0
  %2104 = vdwg.mxu0
  %2105 = vmatprep.subr.bf16.mxu0 %v1441
  %2106 = vmatpush1.bf16.msra.mxu0 %v1440
  %2107 = vmatprep.subr.bf16.mxu0 %v1449
  %2108 = vmatpush1.bf16.msra.mxu0 %v1448
  %2109 = vmatprep.subr.bf16.mxu0 %v1457
  %2110 = vmatpush1.bf16.msra.mxu0 %v1456
  %2111 = vmatprep.subr.bf16.mxu0 %v1465
  %2112 = vmatpush1.bf16.msra.mxu0 %v1464
  %2113 = vmatprep.subr.bf16.mxu0 %v1473
  %2114 = vmatpush1.bf16.msra.mxu0 %v1472
  %2115 = vmatprep.subr.bf16.mxu0 %v1481
  %2116 = vmatpush1.bf16.msra.mxu0 %v1480
  %2117 = vmatprep.subr.bf16.mxu0 %v1489
  %2118 = vmatpush1.bf16.msra.mxu0 %v1488
  %2119 = vmatprep.subr.bf16.mxu0 %v1497
  %2120 = vmatpush1.bf16.msra.mxu0 %v1496
  %2121 = vmatprep.subr.bf16.mxu0 %v1505
  %2122 = vmatpush1.bf16.msra.mxu0 %v1504
  %2123 = vmatprep.subr.bf16.mxu0 %v1513
  %2124 = vmatpush1.bf16.msra.mxu0 %v1512
  %2125 = vmatprep.subr.bf16.mxu0 %v1521
  %2126 = vmatpush1.bf16.msra.mxu0 %v1520
  %2127 = vmatprep.subr.bf16.mxu0 %v1529
  %2128 = vmatpush1.bf16.msra.mxu0 %v1528
  %2129 = vmatprep.subr.bf16.mxu0 %v1537
  %2130 = vmatpush1.bf16.msra.mxu0 %v1536
  %2131 = vmatprep.subr.bf16.mxu0 %v1545
  %2132 = vmatpush1.bf16.msra.mxu0 %v1544
  %2133 = vmatprep.subr.bf16.mxu0 %v1553
  %2134 = vmatpush1.bf16.msra.mxu0 %v1552
  %2135 = vmatprep.subr.bf16.mxu0 %v1561
  %2136 = vmatpush1.bf16.msra.mxu0 %v1560
  %2137 = vmatprep.mubr.bf16.mxu0 %v239
  %2138 = vmatmul.mubr.bf16.gmra.mrb[0].mxu0 %v238
  %v2139 = vpop.f32.mrb[0].mxu0
  %v2140 = vadd.f32 %v2099, %v2139
  %v2141 = vpop.f32.mrb[0].mxu0
  %v2142 = vadd.f32 %v2101, %v2141
  %v2143 = vpop.f32.mrb[0].mxu0
  %v2144 = vpop.f32.mrb[0].mxu0
  %2145 = vdwg.mxu0
  %v2146 = vmax.f32 %v1894, 0.0
  %v2147 = vmax.f32 %v1896, 0.0
  %v2148 = vmax.f32 %v1976, 0.0
  %v2149 = vmax.f32 %v1978, 0.0
  %v2150 = vmax.f32 %v2058, 0.0
  %v2151 = vmax.f32 %v2060, 0.0
  %v2152 = vmax.f32 %v2140, 0.0
  %v2153 = vmax.f32 %v2142, 0.0
  %v2154 = vpack.c.bf16 %v2146, %v2146
  %v2155 = vpack.c.bf16 %v2147, %v2147
  %v2156 = vpack.c.bf16 %v2148, %v2148
  %v2157 = vpack.c.bf16 %v2149, %v2149
  %v2158 = vpack.c.bf16 %v2150, %v2150
  %v2159 = vpack.c.bf16 %v2151, %v2151
  %v2160 = vpack.c.bf16 %v2152, %v2152
  %v2161 = vpack.c.bf16 %v2153, %v2153
  %v2162 = vld [vmem:[%s5] sm:$0xf]
  %v2163 = vld [vmem:[%s5 + $0x4] sm:$0xf]
  %v2164 = vld [vmem:[%s5 + $0x8] sm:$0xf]
  %v2165 = vld [vmem:[%s5 + $0xc] sm:$0xf]
  %v2166 = vld [vmem:[%s5 + $0x10] sm:$0xf]
  %v2167 = vld [vmem:[%s5 + $0x14] sm:$0xf]
  %v2168 = vld [vmem:[%s5 + $0x18] sm:$0xf]
  %v2169 = vld [vmem:[%s5 + $0x1c] sm:$0xf]
  %v2170 = vld [vmem:[%s5 + $0x20] sm:$0xf]
  %v2171 = vld [vmem:[%s5 + $0x24] sm:$0xf]
  %v2172 = vld [vmem:[%s5 + $0x28] sm:$0xf]
  %v2173 = vld [vmem:[%s5 + $0x2c] sm:$0xf]
  %v2174 = vld [vmem:[%s5 + $0x30] sm:$0xf]
  %v2175 = vld [vmem:[%s5 + $0x34] sm:$0xf]
  %v2176 = vld [vmem:[%s5 + $0x38] sm:$0xf]
  %v2177 = vld [vmem:[%s5 + $0x3c] sm:$0xf]
  %v2178 = vld [vmem:[%s5 + $0x40] sm:$0xf]
  %v2179 = vld [vmem:[%s5 + $0x44] sm:$0xf]
  %v2180 = vld [vmem:[%s5 + $0x48] sm:$0xf]
  %v2181 = vld [vmem:[%s5 + $0x4c] sm:$0xf]
  %v2182 = vld [vmem:[%s5 + $0x50] sm:$0xf]
  %v2183 = vld [vmem:[%s5 + $0x54] sm:$0xf]
  %v2184 = vld [vmem:[%s5 + $0x58] sm:$0xf]
  %v2185 = vld [vmem:[%s5 + $0x5c] sm:$0xf]
  %v2186 = vld [vmem:[%s5 + $0x60] sm:$0xf]
  %v2187 = vld [vmem:[%s5 + $0x64] sm:$0xf]
  %v2188 = vld [vmem:[%s5 + $0x68] sm:$0xf]
  %v2189 = vld [vmem:[%s5 + $0x6c] sm:$0xf]
  %v2190 = vld [vmem:[%s5 + $0x70] sm:$0xf]
  %v2191 = vld [vmem:[%s5 + $0x74] sm:$0xf]
  %v2192 = vld [vmem:[%s5 + $0x78] sm:$0xf]
  %v2193 = vld [vmem:[%s5 + $0x7c] sm:$0xf]
  %v2194 = vld [vmem:[%s5 + $0x80] sm:$0xf]
  %v2195 = vld [vmem:[%s5 + $0x84] sm:$0xf]
  %v2196 = vld [vmem:[%s5 + $0x88] sm:$0xf]
  %v2197 = vld [vmem:[%s5 + $0x8c] sm:$0xf]
  %v2198 = vld [vmem:[%s5 + $0x90] sm:$0xf]
  %v2199 = vld [vmem:[%s5 + $0x94] sm:$0xf]
  %v2200 = vld [vmem:[%s5 + $0x98] sm:$0xf]
  %v2201 = vld [vmem:[%s5 + $0x9c] sm:$0xf]
  %v2202 = vld [vmem:[%s5 + $0xa0] sm:$0xf]
  %v2203 = vld [vmem:[%s5 + $0xa4] sm:$0xf]
  %v2204 = vld [vmem:[%s5 + $0xa8] sm:$0xf]
  %v2205 = vld [vmem:[%s5 + $0xac] sm:$0xf]
  %v2206 = vld [vmem:[%s5 + $0xb0] sm:$0xf]
  %v2207 = vld [vmem:[%s5 + $0xb4] sm:$0xf]
  %v2208 = vld [vmem:[%s5 + $0xb8] sm:$0xf]
  %v2209 = vld [vmem:[%s5 + $0xbc] sm:$0xf]
  %v2210 = vld [vmem:[%s5 + $0xc0] sm:$0xf]
  %v2211 = vld [vmem:[%s5 + $0xc4] sm:$0xf]
  %v2212 = vld [vmem:[%s5 + $0xc8] sm:$0xf]
  %v2213 = vld [vmem:[%s5 + $0xcc] sm:$0xf]
  %v2214 = vld [vmem:[%s5 + $0xd0] sm:$0xf]
  %v2215 = vld [vmem:[%s5 + $0xd4] sm:$0xf]
  %v2216 = vld [vmem:[%s5 + $0xd8] sm:$0xf]
  %v2217 = vld [vmem:[%s5 + $0xdc] sm:$0xf]
  %v2218 = vld [vmem:[%s5 + $0xe0] sm:$0xf]
  %v2219 = vld [vmem:[%s5 + $0xe4] sm:$0xf]
  %v2220 = vld [vmem:[%s5 + $0xe8] sm:$0xf]
  %v2221 = vld [vmem:[%s5 + $0xec] sm:$0xf]
  %v2222 = vld [vmem:[%s5 + $0xf0] sm:$0xf]
  %v2223 = vld [vmem:[%s5 + $0xf4] sm:$0xf]
  %v2224 = vld [vmem:[%s5 + $0xf8] sm:$0xf]
  %v2225 = vld [vmem:[%s5 + $0xfc] sm:$0xf]
  %v2226 = vld [vmem:[%s5 + $0x100] sm:$0xf]
  %v2227 = vld [vmem:[%s5 + $0x104] sm:$0xf]
  %v2228 = vld [vmem:[%s5 + $0x108] sm:$0xf]
  %v2229 = vld [vmem:[%s5 + $0x10c] sm:$0xf]
  %v2230 = vld [vmem:[%s5 + $0x110] sm:$0xf]
  %v2231 = vld [vmem:[%s5 + $0x114] sm:$0xf]
  %v2232 = vld [vmem:[%s5 + $0x118] sm:$0xf]
  %v2233 = vld [vmem:[%s5 + $0x11c] sm:$0xf]
  %v2234 = vld [vmem:[%s5 + $0x120] sm:$0xf]
  %v2235 = vld [vmem:[%s5 + $0x124] sm:$0xf]
  %v2236 = vld [vmem:[%s5 + $0x128] sm:$0xf]
  %v2237 = vld [vmem:[%s5 + $0x12c] sm:$0xf]
  %v2238 = vld [vmem:[%s5 + $0x130] sm:$0xf]
  %v2239 = vld [vmem:[%s5 + $0x134] sm:$0xf]
  %v2240 = vld [vmem:[%s5 + $0x138] sm:$0xf]
  %v2241 = vld [vmem:[%s5 + $0x13c] sm:$0xf]
  %v2242 = vld [vmem:[%s5 + $0x140] sm:$0xf]
  %v2243 = vld [vmem:[%s5 + $0x144] sm:$0xf]
  %v2244 = vld [vmem:[%s5 + $0x148] sm:$0xf]
  %v2245 = vld [vmem:[%s5 + $0x14c] sm:$0xf]
  %v2246 = vld [vmem:[%s5 + $0x150] sm:$0xf]
  %v2247 = vld [vmem:[%s5 + $0x154] sm:$0xf]
  %v2248 = vld [vmem:[%s5 + $0x158] sm:$0xf]
  %v2249 = vld [vmem:[%s5 + $0x15c] sm:$0xf]
  %v2250 = vld [vmem:[%s5 + $0x160] sm:$0xf]
  %v2251 = vld [vmem:[%s5 + $0x164] sm:$0xf]
  %v2252 = vld [vmem:[%s5 + $0x168] sm:$0xf]
  %v2253 = vld [vmem:[%s5 + $0x16c] sm:$0xf]
  %v2254 = vld [vmem:[%s5 + $0x170] sm:$0xf]
  %v2255 = vld [vmem:[%s5 + $0x174] sm:$0xf]
  %v2256 = vld [vmem:[%s5 + $0x178] sm:$0xf]
  %v2257 = vld [vmem:[%s5 + $0x17c] sm:$0xf]
  %v2258 = vld [vmem:[%s5 + $0x180] sm:$0xf]
  %v2259 = vld [vmem:[%s5 + $0x184] sm:$0xf]
  %v2260 = vld [vmem:[%s5 + $0x188] sm:$0xf]
  %v2261 = vld [vmem:[%s5 + $0x18c] sm:$0xf]
  %v2262 = vld [vmem:[%s5 + $0x190] sm:$0xf]
  %v2263 = vld [vmem:[%s5 + $0x194] sm:$0xf]
  %v2264 = vld [vmem:[%s5 + $0x198] sm:$0xf]
  %v2265 = vld [vmem:[%s5 + $0x19c] sm:$0xf]
  %v2266 = vld [vmem:[%s5 + $0x1a0] sm:$0xf]
  %v2267 = vld [vmem:[%s5 + $0x1a4] sm:$0xf]
  %v2268 = vld [vmem:[%s5 + $0x1a8] sm:$0xf]
  %v2269 = vld [vmem:[%s5 + $0x1ac] sm:$0xf]
  %v2270 = vld [vmem:[%s5 + $0x1b0] sm:$0xf]
  %v2271 = vld [vmem:[%s5 + $0x1b4] sm:$0xf]
  %v2272 = vld [vmem:[%s5 + $0x1b8] sm:$0xf]
  %v2273 = vld [vmem:[%s5 + $0x1bc] sm:$0xf]
  %v2274 = vld [vmem:[%s5 + $0x1c0] sm:$0xf]
  %v2275 = vld [vmem:[%s5 + $0x1c4] sm:$0xf]
  %v2276 = vld [vmem:[%s5 + $0x1c8] sm:$0xf]
  %v2277 = vld [vmem:[%s5 + $0x1cc] sm:$0xf]
  %v2278 = vld [vmem:[%s5 + $0x1d0] sm:$0xf]
  %v2279 = vld [vmem:[%s5 + $0x1d4] sm:$0xf]
  %v2280 = vld [vmem:[%s5 + $0x1d8] sm:$0xf]
  %v2281 = vld [vmem:[%s5 + $0x1dc] sm:$0xf]
  %v2282 = vld [vmem:[%s5 + $0x1e0] sm:$0xf]
  %v2283 = vld [vmem:[%s5 + $0x1e4] sm:$0xf]
  %v2284 = vld [vmem:[%s5 + $0x1e8] sm:$0xf]
  %v2285 = vld [vmem:[%s5 + $0x1ec] sm:$0xf]
  %v2286 = vld [vmem:[%s5 + $0x1f0] sm:$0xf]
  %v2287 = vld [vmem:[%s5 + $0x1f4] sm:$0xf]
  %v2288 = vld [vmem:[%s5 + $0x1f8] sm:$0xf]
  %v2289 = vld [vmem:[%s5 + $0x1fc] sm:$0xf]
  %v2290 = vld [vmem:[%s6] sm:$0x1]
  %v2292 = vlaneseq
  %v2293 = vshrl.u32 %v2292, 7
  %v2294 = vsub.s32 0, %v2293
  %v2295 = vrot.slane %v2290, %v2294
  %v2425 = vunpack.c.l.b16 %v2162
  %v2426 = vunpack.c.l.b16 %v2163
  %v2427 = vunpack.c.l.b16 %v2164
  %v2428 = vunpack.c.l.b16 %v2165
  %v2429 = vunpack.c.l.b16 %v2166
  %v2430 = vunpack.c.l.b16 %v2167
  %v2431 = vunpack.c.l.b16 %v2168
  %v2432 = vunpack.c.l.b16 %v2169
  %v2433 = vunpack.c.l.b16 %v2170
  %v2434 = vunpack.c.l.b16 %v2171
  %v2435 = vunpack.c.l.b16 %v2172
  %v2436 = vunpack.c.l.b16 %v2173
  %v2437 = vunpack.c.l.b16 %v2174
  %v2438 = vunpack.c.l.b16 %v2175
  %v2439 = vunpack.c.l.b16 %v2176
  %v2440 = vunpack.c.l.b16 %v2177
  %v2441 = vunpack.c.l.b16 %v2178
  %v2442 = vunpack.c.l.b16 %v2179
  %v2443 = vunpack.c.l.b16 %v2180
  %v2444 = vunpack.c.l.b16 %v2181
  %v2445 = vunpack.c.l.b16 %v2182
  %v2446 = vunpack.c.l.b16 %v2183
  %v2447 = vunpack.c.l.b16 %v2184
  %v2448 = vunpack.c.l.b16 %v2185
  %v2449 = vunpack.c.l.b16 %v2186
  %v2450 = vunpack.c.l.b16 %v2187
  %v2451 = vunpack.c.l.b16 %v2188
  %v2452 = vunpack.c.l.b16 %v2189
  %v2453 = vunpack.c.l.b16 %v2190
  %v2454 = vunpack.c.l.b16 %v2191
  %v2455 = vunpack.c.l.b16 %v2192
  %v2456 = vunpack.c.l.b16 %v2193
  %v2457 = vunpack.c.l.b16 %v2194
  %v2458 = vunpack.c.l.b16 %v2195
  %v2459 = vunpack.c.l.b16 %v2196
  %v2460 = vunpack.c.l.b16 %v2197
  %v2461 = vunpack.c.l.b16 %v2198
  %v2462 = vunpack.c.l.b16 %v2199
  %v2463 = vunpack.c.l.b16 %v2200
  %v2464 = vunpack.c.l.b16 %v2201
  %v2465 = vunpack.c.l.b16 %v2202
  %v2466 = vunpack.c.l.b16 %v2203
  %v2467 = vunpack.c.l.b16 %v2204
  %v2468 = vunpack.c.l.b16 %v2205
  %v2469 = vunpack.c.l.b16 %v2206
  %v2470 = vunpack.c.l.b16 %v2207
  %v2471 = vunpack.c.l.b16 %v2208
  %v2472 = vunpack.c.l.b16 %v2209
  %v2473 = vunpack.c.l.b16 %v2210
  %v2474 = vunpack.c.l.b16 %v2211
  %v2475 = vunpack.c.l.b16 %v2212
  %v2476 = vunpack.c.l.b16 %v2213
  %v2477 = vunpack.c.l.b16 %v2214
  %v2478 = vunpack.c.l.b16 %v2215
  %v2479 = vunpack.c.l.b16 %v2216
  %v2480 = vunpack.c.l.b16 %v2217
  %v2481 = vunpack.c.l.b16 %v2218
  %v2482 = vunpack.c.l.b16 %v2219
  %v2483 = vunpack.c.l.b16 %v2220
  %v2484 = vunpack.c.l.b16 %v2221
  %v2485 = vunpack.c.l.b16 %v2222
  %v2486 = vunpack.c.l.b16 %v2223
  %v2487 = vunpack.c.l.b16 %v2224
  %v2488 = vunpack.c.l.b16 %v2225
  %v2489 = vunpack.c.l.b16 %v2226
  %v2490 = vunpack.c.l.b16 %v2227
  %v2491 = vunpack.c.l.b16 %v2228
  %v2492 = vunpack.c.l.b16 %v2229
  %v2493 = vunpack.c.l.b16 %v2230
  %v2494 = vunpack.c.l.b16 %v2231
  %v2495 = vunpack.c.l.b16 %v2232
  %v2496 = vunpack.c.l.b16 %v2233
  %v2497 = vunpack.c.l.b16 %v2234
  %v2498 = vunpack.c.l.b16 %v2235
  %v2499 = vunpack.c.l.b16 %v2236
  %v2500 = vunpack.c.l.b16 %v2237
  %v2501 = vunpack.c.l.b16 %v2238
  %v2502 = vunpack.c.l.b16 %v2239
  %v2503 = vunpack.c.l.b16 %v2240
  %v2504 = vunpack.c.l.b16 %v2241
  %v2505 = vunpack.c.l.b16 %v2242
  %v2506 = vunpack.c.l.b16 %v2243
  %v2507 = vunpack.c.l.b16 %v2244
  %v2508 = vunpack.c.l.b16 %v2245
  %v2509 = vunpack.c.l.b16 %v2246
  %v2510 = vunpack.c.l.b16 %v2247
  %v2511 = vunpack.c.l.b16 %v2248
  %v2512 = vunpack.c.l.b16 %v2249
  %v2513 = vunpack.c.l.b16 %v2250
  %v2514 = vunpack.c.l.b16 %v2251
  %v2515 = vunpack.c.l.b16 %v2252
  %v2516 = vunpack.c.l.b16 %v2253
  %v2517 = vunpack.c.l.b16 %v2254
  %v2518 = vunpack.c.l.b16 %v2255
  %v2519 = vunpack.c.l.b16 %v2256
  %v2520 = vunpack.c.l.b16 %v2257
  %v2521 = vunpack.c.l.b16 %v2258
  %v2522 = vunpack.c.l.b16 %v2259
  %v2523 = vunpack.c.l.b16 %v2260
  %v2524 = vunpack.c.l.b16 %v2261
  %v2525 = vunpack.c.l.b16 %v2262
  %v2526 = vunpack.c.l.b16 %v2263
  %v2527 = vunpack.c.l.b16 %v2264
  %v2528 = vunpack.c.l.b16 %v2265
  %v2529 = vunpack.c.l.b16 %v2266
  %v2530 = vunpack.c.l.b16 %v2267
  %v2531 = vunpack.c.l.b16 %v2268
  %v2532 = vunpack.c.l.b16 %v2269
  %v2533 = vunpack.c.l.b16 %v2270
  %v2534 = vunpack.c.l.b16 %v2271
  %v2535 = vunpack.c.l.b16 %v2272
  %v2536 = vunpack.c.l.b16 %v2273
  %v2537 = vunpack.c.l.b16 %v2274
  %v2538 = vunpack.c.l.b16 %v2275
  %v2539 = vunpack.c.l.b16 %v2276
  %v2540 = vunpack.c.l.b16 %v2277
  %v2541 = vunpack.c.l.b16 %v2278
  %v2542 = vunpack.c.l.b16 %v2279
  %v2543 = vunpack.c.l.b16 %v2280
  %v2544 = vunpack.c.l.b16 %v2281
  %v2545 = vunpack.c.l.b16 %v2282
  %v2546 = vunpack.c.l.b16 %v2283
  %v2547 = vunpack.c.l.b16 %v2284
  %v2548 = vunpack.c.l.b16 %v2285
  %v2549 = vunpack.c.l.b16 %v2286
  %v2550 = vunpack.c.l.b16 %v2287
  %v2551 = vunpack.c.l.b16 %v2288
  %v2552 = vunpack.c.l.b16 %v2289
  %v2553 = vpack.c.b16 %v2426, %v2425
  %v2554 = vpack.c.b16 %v2428, %v2427
  %v2555 = vpack.c.b16 %v2430, %v2429
  %v2556 = vpack.c.b16 %v2432, %v2431
  %v2557 = vpack.c.b16 %v2434, %v2433
  %v2558 = vpack.c.b16 %v2436, %v2435
  %v2559 = vpack.c.b16 %v2438, %v2437
  %v2560 = vpack.c.b16 %v2440, %v2439
  %v2561 = vpack.c.b16 %v2442, %v2441
  %v2562 = vpack.c.b16 %v2444, %v2443
  %v2563 = vpack.c.b16 %v2446, %v2445
  %v2564 = vpack.c.b16 %v2448, %v2447
  %v2565 = vpack.c.b16 %v2450, %v2449
  %v2566 = vpack.c.b16 %v2452, %v2451
  %v2567 = vpack.c.b16 %v2454, %v2453
  %v2568 = vpack.c.b16 %v2456, %v2455
  %v2569 = vpack.c.b16 %v2458, %v2457
  %v2570 = vpack.c.b16 %v2460, %v2459
  %v2571 = vpack.c.b16 %v2462, %v2461
  %v2572 = vpack.c.b16 %v2464, %v2463
  %v2573 = vpack.c.b16 %v2466, %v2465
  %v2574 = vpack.c.b16 %v2468, %v2467
  %v2575 = vpack.c.b16 %v2470, %v2469
  %v2576 = vpack.c.b16 %v2472, %v2471
  %v2577 = vpack.c.b16 %v2474, %v2473
  %v2578 = vpack.c.b16 %v2476, %v2475
  %v2579 = vpack.c.b16 %v2478, %v2477
  %v2580 = vpack.c.b16 %v2480, %v2479
  %v2581 = vpack.c.b16 %v2482, %v2481
  %v2582 = vpack.c.b16 %v2484, %v2483
  %v2583 = vpack.c.b16 %v2486, %v2485
  %v2584 = vpack.c.b16 %v2488, %v2487
  %v2585 = vpack.c.b16 %v2490, %v2489
  %v2586 = vpack.c.b16 %v2492, %v2491
  %v2587 = vpack.c.b16 %v2494, %v2493
  %v2588 = vpack.c.b16 %v2496, %v2495
  %v2589 = vpack.c.b16 %v2498, %v2497
  %v2590 = vpack.c.b16 %v2500, %v2499
  %v2591 = vpack.c.b16 %v2502, %v2501
  %v2592 = vpack.c.b16 %v2504, %v2503
  %v2593 = vpack.c.b16 %v2506, %v2505
  %v2594 = vpack.c.b16 %v2508, %v2507
  %v2595 = vpack.c.b16 %v2510, %v2509
  %v2596 = vpack.c.b16 %v2512, %v2511
  %v2597 = vpack.c.b16 %v2514, %v2513
  %v2598 = vpack.c.b16 %v2516, %v2515
  %v2599 = vpack.c.b16 %v2518, %v2517
  %v2600 = vpack.c.b16 %v2520, %v2519
  %v2601 = vpack.c.b16 %v2522, %v2521
  %v2602 = vpack.c.b16 %v2524, %v2523
  %v2603 = vpack.c.b16 %v2526, %v2525
  %v2604 = vpack.c.b16 %v2528, %v2527
  %v2605 = vpack.c.b16 %v2530, %v2529
  %v2606 = vpack.c.b16 %v2532, %v2531
  %v2607 = vpack.c.b16 %v2534, %v2533
  %v2608 = vpack.c.b16 %v2536, %v2535
  %v2609 = vpack.c.b16 %v2538, %v2537
  %v2610 = vpack.c.b16 %v2540, %v2539
  %v2611 = vpack.c.b16 %v2542, %v2541
  %v2612 = vpack.c.b16 %v2544, %v2543
  %v2613 = vpack.c.b16 %v2546, %v2545
  %v2614 = vpack.c.b16 %v2548, %v2547
  %v2615 = vpack.c.b16 %v2550, %v2549
  %v2616 = vpack.c.b16 %v2552, %v2551
  %2681 = vmatprep.subr.bf16.mxu0 0
  %2682 = vmatpush1.bf16.msra.mxu0 %v2553
  %2683 = vmatprep.subr.bf16.mxu0 0
  %2684 = vmatpush1.bf16.msra.mxu0 %v2554
  %2685 = vmatprep.subr.bf16.mxu0 0
  %2686 = vmatpush1.bf16.msra.mxu0 %v2555
  %2687 = vmatprep.subr.bf16.mxu0 0
  %2688 = vmatpush1.bf16.msra.mxu0 %v2556
  %2689 = vmatprep.subr.bf16.mxu0 0
  %2690 = vmatpush1.bf16.msra.mxu0 %v2557
  %2691 = vmatprep.subr.bf16.mxu0 0
  %2692 = vmatpush1.bf16.msra.mxu0 %v2558
  %2693 = vmatprep.subr.bf16.mxu0 0
  %2694 = vmatpush1.bf16.msra.mxu0 %v2559
  %2695 = vmatprep.subr.bf16.mxu0 0
  %2696 = vmatpush1.bf16.msra.mxu0 %v2560
  %2697 = vmatprep.subr.bf16.mxu0 0
  %2698 = vmatpush1.bf16.msra.mxu0 %v2561
  %2699 = vmatprep.subr.bf16.mxu0 0
  %2700 = vmatpush1.bf16.msra.mxu0 %v2562
  %2701 = vmatprep.subr.bf16.mxu0 0
  %2702 = vmatpush1.bf16.msra.mxu0 %v2563
  %2703 = vmatprep.subr.bf16.mxu0 0
  %2704 = vmatpush1.bf16.msra.mxu0 %v2564
  %2705 = vmatprep.subr.bf16.mxu0 0
  %2706 = vmatpush1.bf16.msra.mxu0 %v2565
  %2707 = vmatprep.subr.bf16.mxu0 0
  %2708 = vmatpush1.bf16.msra.mxu0 %v2566
  %2709 = vmatprep.subr.bf16.mxu0 0
  %2710 = vmatpush1.bf16.msra.mxu0 %v2567
  %2711 = vmatprep.subr.bf16.mxu0 0
  %2712 = vmatpush1.bf16.msra.mxu0 %v2568
  %2713 = vmatprep.mubr.bf16.mxu0 %v2155
  %2714 = vmatmul.mubr.bf16.gmra.mrb[0].mxu0 %v2154
  %v2715 = vpop.f32.mrb[0].mxu0
  %v2716 = vadd.f32 %v2295, %v2715
  %v2717 = vpop.f32.mrb[0].mxu0
  %v2718 = vpop.f32.mrb[0].mxu0
  %v2719 = vpop.f32.mrb[0].mxu0
  %2720 = vdwg.mxu0
  %2721 = vmatprep.subr.bf16.mxu0 0
  %2722 = vmatpush1.bf16.msra.mxu0 %v2569
  %2723 = vmatprep.subr.bf16.mxu0 0
  %2724 = vmatpush1.bf16.msra.mxu0 %v2570
  %2725 = vmatprep.subr.bf16.mxu0 0
  %2726 = vmatpush1.bf16.msra.mxu0 %v2571
  %2727 = vmatprep.subr.bf16.mxu0 0
  %2728 = vmatpush1.bf16.msra.mxu0 %v2572
  %2729 = vmatprep.subr.bf16.mxu0 0
  %2730 = vmatpush1.bf16.msra.mxu0 %v2573
  %2731 = vmatprep.subr.bf16.mxu0 0
  %2732 = vmatpush1.bf16.msra.mxu0 %v2574
  %2733 = vmatprep.subr.bf16.mxu0 0
  %2734 = vmatpush1.bf16.msra.mxu0 %v2575
  %2735 = vmatprep.subr.bf16.mxu0 0
  %2736 = vmatpush1.bf16.msra.mxu0 %v2576
  %2737 = vmatprep.subr.bf16.mxu0 0
  %2738 = vmatpush1.bf16.msra.mxu0 %v2577
  %2739 = vmatprep.subr.bf16.mxu0 0
  %2740 = vmatpush1.bf16.msra.mxu0 %v2578
  %2741 = vmatprep.subr.bf16.mxu0 0
  %2742 = vmatpush1.bf16.msra.mxu0 %v2579
  %2743 = vmatprep.subr.bf16.mxu0 0
  %2744 = vmatpush1.bf16.msra.mxu0 %v2580
  %2745 = vmatprep.subr.bf16.mxu0 0
  %2746 = vmatpush1.bf16.msra.mxu0 %v2581
  %2747 = vmatprep.subr.bf16.mxu0 0
  %2748 = vmatpush1.bf16.msra.mxu0 %v2582
  %2749 = vmatprep.subr.bf16.mxu0 0
  %2750 = vmatpush1.bf16.msra.mxu0 %v2583
  %2751 = vmatprep.subr.bf16.mxu0 0
  %2752 = vmatpush1.bf16.msra.mxu0 %v2584
  %2753 = vmatprep.mubr.bf16.mxu0 %v2157
  %2754 = vmatmul.mubr.bf16.gmra.mrb[0].mxu0 %v2156
  %v2755 = vpop.f32.mrb[0].mxu0
  %v2756 = vadd.f32 %v2716, %v2755
  %v2757 = vpop.f32.mrb[0].mxu0
  %v2758 = vpop.f32.mrb[0].mxu0
  %v2759 = vpop.f32.mrb[0].mxu0
  %2760 = vdwg.mxu0
  %2761 = vmatprep.subr.bf16.mxu0 0
  %2762 = vmatpush1.bf16.msra.mxu0 %v2585
  %2763 = vmatprep.subr.bf16.mxu0 0
  %2764 = vmatpush1.bf16.msra.mxu0 %v2586
  %2765 = vmatprep.subr.bf16.mxu0 0
  %2766 = vmatpush1.bf16.msra.mxu0 %v2587
  %2767 = vmatprep.subr.bf16.mxu0 0
  %2768 = vmatpush1.bf16.msra.mxu0 %v2588
  %2769 = vmatprep.subr.bf16.mxu0 0
  %2770 = vmatpush1.bf16.msra.mxu0 %v2589
  %2771 = vmatprep.subr.bf16.mxu0 0
  %2772 = vmatpush1.bf16.msra.mxu0 %v2590
  %2773 = vmatprep.subr.bf16.mxu0 0
  %2774 = vmatpush1.bf16.msra.mxu0 %v2591
  %2775 = vmatprep.subr.bf16.mxu0 0
  %2776 = vmatpush1.bf16.msra.mxu0 %v2592
  %2777 = vmatprep.subr.bf16.mxu0 0
  %2778 = vmatpush1.bf16.msra.mxu0 %v2593
  %2779 = vmatprep.subr.bf16.mxu0 0
  %2780 = vmatpush1.bf16.msra.mxu0 %v2594
  %2781 = vmatprep.subr.bf16.mxu0 0
  %2782 = vmatpush1.bf16.msra.mxu0 %v2595
  %2783 = vmatprep.subr.bf16.mxu0 0
  %2784 = vmatpush1.bf16.msra.mxu0 %v2596
  %2785 = vmatprep.subr.bf16.mxu0 0
  %2786 = vmatpush1.bf16.msra.mxu0 %v2597
  %2787 = vmatprep.subr.bf16.mxu0 0
  %2788 = vmatpush1.bf16.msra.mxu0 %v2598
  %2789 = vmatprep.subr.bf16.mxu0 0
  %2790 = vmatpush1.bf16.msra.mxu0 %v2599
  %2791 = vmatprep.subr.bf16.mxu0 0
  %2792 = vmatpush1.bf16.msra.mxu0 %v2600
  %2793 = vmatprep.mubr.bf16.mxu0 %v2159
  %2794 = vmatmul.mubr.bf16.gmra.mrb[0].mxu0 %v2158
  %v2795 = vpop.f32.mrb[0].mxu0
  %v2796 = vadd.f32 %v2756, %v2795
  %v2797 = vpop.f32.mrb[0].mxu0
  %v2798 = vpop.f32.mrb[0].mxu0
  %v2799 = vpop.f32.mrb[0].mxu0
  %2800 = vdwg.mxu0
  %2801 = vmatprep.subr.bf16.mxu0 0
  %2802 = vmatpush1.bf16.msra.mxu0 %v2601
  %2803 = vmatprep.subr.bf16.mxu0 0
  %2804 = vmatpush1.bf16.msra.mxu0 %v2602
  %2805 = vmatprep.subr.bf16.mxu0 0
  %2806 = vmatpush1.bf16.msra.mxu0 %v2603
  %2807 = vmatprep.subr.bf16.mxu0 0
  %2808 = vmatpush1.bf16.msra.mxu0 %v2604
  %2809 = vmatprep.subr.bf16.mxu0 0
  %2810 = vmatpush1.bf16.msra.mxu0 %v2605
  %2811 = vmatprep.subr.bf16.mxu0 0
  %2812 = vmatpush1.bf16.msra.mxu0 %v2606
  %2813 = vmatprep.subr.bf16.mxu0 0
  %2814 = vmatpush1.bf16.msra.mxu0 %v2607
  %2815 = vmatprep.subr.bf16.mxu0 0
  %2816 = vmatpush1.bf16.msra.mxu0 %v2608
  %2817 = vmatprep.subr.bf16.mxu0 0
  %2818 = vmatpush1.bf16.msra.mxu0 %v2609
  %2819 = vmatprep.subr.bf16.mxu0 0
  %2820 = vmatpush1.bf16.msra.mxu0 %v2610
  %2821 = vmatprep.subr.bf16.mxu0 0
  %2822 = vmatpush1.bf16.msra.mxu0 %v2611
  %2823 = vmatprep.subr.bf16.mxu0 0
  %2824 = vmatpush1.bf16.msra.mxu0 %v2612
  %2825 = vmatprep.subr.bf16.mxu0 0
  %2826 = vmatpush1.bf16.msra.mxu0 %v2613
  %2827 = vmatprep.subr.bf16.mxu0 0
  %2828 = vmatpush1.bf16.msra.mxu0 %v2614
  %2829 = vmatprep.subr.bf16.mxu0 0
  %2830 = vmatpush1.bf16.msra.mxu0 %v2615
  %2831 = vmatprep.subr.bf16.mxu0 0
  %2832 = vmatpush1.bf16.msra.mxu0 %v2616
  %2833 = vmatprep.mubr.bf16.mxu0 %v2161
  %2834 = vmatmul.mubr.bf16.gmra.mrb[0].mxu0 %v2160
  %v2835 = vpop.f32.mrb[0].mxu0
  %v2836 = vadd.f32 %v2796, %v2835
  %v2837 = vpop.f32.mrb[0].mxu0
  %v2838 = vpop.f32.mrb[0].mxu0
  %v2839 = vpop.f32.mrb[0].mxu0
  %2840 = vdwg.mxu0
  %2841 = vst [vmem:[%s7] sm:$0x3] %v2836
  // Predicated region
  $region30: #{covidx_forward.9} parent=0 // pred_check
    _
  $region31: #{covidx_forward.9} parent=0 // pred_check_branch
    %2843 = sbr.rel (0) target = $region33
  $region32: #{covidx_forward.9} parent=0 // pred_region
    _
  $region33: #{covidx_forward.9} parent=0 // pred_fallthru
    _
  // Predicated region
  $region34: #{covidx_forward.9} parent=0 // pred_check
    _
  $region35: #{covidx_forward.9} parent=0 // pred_check_branch
    %2845 = sbr.rel (0) target = $region37
  $region36: #{covidx_forward.9} parent=0 // pred_region
    _
  $region37: #{covidx_forward.9} parent=0 // pred_fallthru
    _

</llo_original>
